<compile_context>
chip_gen: v5e
topology: v5e:2x2
jax: 0.10.0
libtpu: 0.0.40
codegen_flags: <defaults>
</compile_context>

<pallas_src>
import functools

import jax
import jax.numpy as jnp
from jax.experimental import pallas as pl
from jax.experimental.pallas import tpu as pltpu

IMG = 28            # small stand-in for 224
PATCH = 14          # DINOv2 patch size
EMBED = 128         # lane-dense stand-in for 384 (dinov2_vits14)
HEADS = 2
HEAD_DIM = EMBED // HEADS
HEAD_PAD = 128      # head dim zero-padded to a full lane group
DEPTH = 2
MLP_HIDDEN = 4 * EMBED
EPS = 1e-6          # DINOv2 LayerNorm eps

PATCH_K = 3 * PATCH * PATCH                     # 588
PATCH_K_PAD = ((PATCH_K + 127) // 128) * 128    # 640


# ----------------------------- Pallas kernel -------------------------------

def _layernorm(x, g, b):
    """Single-pass LayerNorm statistics: var = E[x^2] - mean^2."""
    mu = jnp.mean(x, axis=-1, keepdims=True)
    var = jnp.mean(x * x, axis=-1, keepdims=True) - mu * mu
    return (x - mu) * jax.lax.rsqrt(var + EPS) * g + b


def _dinov2_kernel(patches_ref, patch_w_ref, tok_bias_ref, mask_ref,
                   blk_vecs_ref, qkv_w_ref, qkv_b_ref, proj_w_ref,
                   fc1_w_ref, fc1_b_ref, fc2_w_ref, norm_ref,
                   out_ref, *, batch, num_patches):
    bf = jnp.bfloat16
    n_patch_rows = batch * num_patches

    # ---- patch embedding produces EVERY token row in one matmul -----------
    # rows [0, B*np): patch tokens (+ patch_b + pos[1:] via tok_bias)
    # rows [B*np, B*np+B): zero input rows -> (cls + pos[0]) via tok_bias
    x = jnp.dot(patches_ref[...], patch_w_ref[...],
                preferred_element_type=jnp.float32) + tok_bias_ref[...]

    mask_bias = mask_ref[...]          # (M, M) block-diagonal additive mask

    # ---- transformer blocks (static unroll, all weights VMEM-resident) ----
    for d in range(DEPTH):
        v = blk_vecs_ref[d]                         # (8, D) packed vectors
        ln1_g, ln1_b, proj_b, ls1 = v[0:1], v[1:2], v[2:3], v[3:4]
        ln2_g, ln2_b, fc2_b, ls2 = v[4:5], v[5:6], v[6:7], v[7:8]

        # --- attention branch: LN + QKV on the full (B*N, D) matrix ---
        h = _layernorm(x, ln1_g, ln1_b)
        qkv = jnp.dot(h.astype(bf), qkv_w_ref[d],
                      preferred_element_type=jnp.float32) + qkv_b_ref[d]

        # block-diagonal attention over all B*N rows at once; head dim is
        # zero-padded to 128 so every slice is an aligned full lane group.
        head_outs = []
        for hh in range(HEADS):
            base = hh * 3 * HEAD_PAD
            q = qkv[:, base:base + HEAD_PAD]        # 1/sqrt(dh) folded into W_q
            k = qkv[:, base + HEAD_PAD:base + 2 * HEAD_PAD]
            vv = qkv[:, base + 2 * HEAD_PAD:base + 3 * HEAD_PAD]
            s = jax.lax.dot_general(q, k, (((1,), (1,)), ((), ())),
                                    preferred_element_type=jnp.float32)
            s = s + mask_bias                        # mask cross-batch pairs
            s = s - jnp.max(s, axis=-1, keepdims=True)
            p = jnp.exp(s)
            p = p * pl.reciprocal(jnp.sum(p, axis=-1, keepdims=True),
                                  approx=True)
            head_outs.append(jnp.dot(p, vv, preferred_element_type=jnp.float32))

        attn = jnp.concatenate(head_outs, axis=-1)   # (M, HEADS*128), aligned
        attn = jnp.dot(attn.astype(bf), proj_w_ref[d],
                       preferred_element_type=jnp.float32) + proj_b
        x = x + ls1 * attn                           # LayerScale residual

        # --- MLP branch ---
        h = _layernorm(x, ln2_g, ln2_b)
        h = jnp.dot(h.astype(bf), fc1_w_ref[d],
                    preferred_element_type=jnp.float32) + fc1_b_ref[d]
        # TODO(synk): DINOv2 uses exact (erf) GELU; tanh approximation used here.
        h = jax.nn.gelu(h, approximate=True)
        h = jnp.dot(h.astype(bf), fc2_w_ref[d],
                    preferred_element_type=jnp.float32) + fc2_b
        x = x + ls2 * h

    # ---- final LayerNorm on the B CLS rows only; one lane-dense store -----
    norm = norm_ref[...]
    cls_rows = x[n_patch_rows:n_patch_rows + batch, :]   # sublane-aligned slice
    out_ref[...] = _layernorm(cls_rows, norm[0:1], norm[1:2])


# ------------------------------- JAX glue ----------------------------------

def extract_patches(x):
    """NCHW image -> (B*num_patches, C*P*P), channel-major inside a patch
    so it matches Conv2d(patch-embed) weight flattening."""
    B, C, H, W = x.shape
    gh, gw = H // PATCH, W // PATCH
    x = x.reshape(B, C, gh, PATCH, gw, PATCH)
    x = x.transpose(0, 2, 4, 1, 3, 5)            # (B, gh, gw, C, P, P)
    return x.reshape(B * gh * gw, C * PATCH * PATCH)


def _full_spec(shape):
    nd = len(shape)

    def idx(i):
        return (0,) * nd

    return pl.BlockSpec(shape, idx)


def dinov2_forward(x, pk):
    """x: (B, 3, H, W) float32  ->  (B, EMBED) CLS token after final LN."""
    B = x.shape[0]
    num_patches = (x.shape[2] // PATCH) * (x.shape[3] // PATCH)
    n_tok = num_patches + 1
    M = B * n_tok

    # ---- host-side layout plumbing (not compute hoisting) ----
    # Patches: bf16, K padded 588->640, plus B zero rows that become CLS slots.
    patches = extract_patches(x).astype(jnp.bfloat16)        # (B*np, 588)
    patches_pad = jnp.zeros((M, PATCH_K_PAD), jnp.bfloat16)
    patches_pad = patches_pad.at[:B * num_patches, :PATCH_K].set(patches)

    # Per-row additive bias: patch rows get patch_b + pos[1:], CLS rows get
    # cls + pos[0] (their matmul contribution is zero).
    pos = pk["pos"]
    tok_bias = jnp.concatenate(
        [jnp.tile(pk["patch_b"] + pos[1:], (B, 1)),
         jnp.tile(pk["cls"] + pos[0:1], (B, 1))], axis=0)     # (M, D)

    # Block-diagonal attention mask over the reordered token layout.
    tok_ids = jnp.concatenate(
        [jnp.repeat(jnp.arange(B), num_patches), jnp.arange(B)])
    mask_bias = jnp.where(tok_ids[:, None] == tok_ids[None, :],
                          0.0, -1e30).astype(jnp.float32)     # (M, M)

    args = (patches_pad, pk["patch_w"], tok_bias, mask_bias,
            pk["blk_vecs"], pk["qkv_w"], pk["qkv_b"], pk["proj_w"],
            pk["fc1_w"], pk["fc1_b"], pk["fc2_w"], pk["norm_gb"])

    kernel = functools.partial(_dinov2_kernel, batch=B,
                               num_patches=num_patches)
    # Single fused launch; at this toy size one grid step per chip is right.
    # (On v7x add a 'parallel' batch/token-tile axis once per-core work is
    #  non-trivial; at real DINOv2 size add a DEPTH axis that streams weights.)
    return pl.pallas_call(
        kernel,
        grid=(1,),
        out_shape=jax.ShapeDtypeStruct((B, EMBED), jnp.float32),
        in_specs=[_full_spec(a.shape) for a in args],
        out_specs=_full_spec((B, EMBED)),
        compiler_params=pltpu.CompilerParams(
            dimension_semantics=("arbitrary",)),
    )(*args)


def init_params(key):
    num_patches = (IMG // PATCH) * (IMG // PATCH)
    n_tokens = num_patches + 1
    keys = iter(jax.random.split(key, 4 + 4 * DEPTH))

    def nrm(shape, scale=0.02):
        return (scale * jax.random.normal(next(keys), shape)).astype(jnp.float32)

    params = {
        "patch_w": nrm((PATCH_K, EMBED)),
        "patch_b": jnp.zeros((1, EMBED), jnp.float32),
        "cls": nrm((1, EMBED)),
        "pos": nrm((n_tokens, EMBED)),
        "norm_g": jnp.ones((1, EMBED), jnp.float32),
        "norm_b": jnp.zeros((1, EMBED), jnp.float32),
        "blocks": [],
    }
    for _ in range(DEPTH):
        params["blocks"].append({
            "ln1_g": jnp.ones((1, EMBED), jnp.float32),
            "ln1_b": jnp.zeros((1, EMBED), jnp.float32),
            "qkv_w": nrm((EMBED, 3 * EMBED)),
            "qkv_b": jnp.zeros((1, 3 * EMBED), jnp.float32),
            "proj_w": nrm((EMBED, EMBED)),
            "proj_b": jnp.zeros((1, EMBED), jnp.float32),
            "ls1": jnp.full((1, EMBED), 1e-5, jnp.float32),   # LayerScale init
            "ln2_g": jnp.ones((1, EMBED), jnp.float32),
            "ln2_b": jnp.zeros((1, EMBED), jnp.float32),
            "fc1_w": nrm((EMBED, MLP_HIDDEN)),
            "fc1_b": jnp.zeros((1, MLP_HIDDEN), jnp.float32),
            "fc2_w": nrm((MLP_HIDDEN, EMBED)),
            "fc2_b": jnp.zeros((1, EMBED), jnp.float32),
            "ls2": jnp.full((1, EMBED), 1e-5, jnp.float32),
        })
    return params


def pack_params(params):
    """Host-side packing: stack per-block weights along DEPTH, cast matmul
    weights to bf16, fold the attention scale into W_q/b_q, zero-pad the head
    dim to 128 in QKV/proj so in-kernel slices are 128-lane aligned, pad the
    patch-embed K to a multiple of 128, and bundle small (1, D) vectors."""
    scale = 1.0 / (HEAD_DIM ** 0.5)
    blocks = params["blocks"]

    patch_w = jnp.zeros((PATCH_K_PAD, EMBED), jnp.float32)
    patch_w = patch_w.at[:PATCH_K, :].set(params["patch_w"])

    qkv_w_pad = jnp.zeros((DEPTH, EMBED, HEADS * 3 * HEAD_PAD), jnp.float32)
    qkv_b_pad = jnp.zeros((DEPTH, 1, HEADS * 3 * HEAD_PAD), jnp.float32)
    proj_w_pad = jnp.zeros((DEPTH, HEADS * HEAD_PAD, EMBED), jnp.float32)
    for d, blk in enumerate(blocks):
        for h in range(HEADS):
            base = h * 3 * HEAD_PAD
            c = h * HEAD_DIM
            # Q (1/sqrt(dh) folded in)
            qkv_w_pad = qkv_w_pad.at[d, :, base:base + HEAD_DIM].set(
                scale * blk["qkv_w"][:, c:c + HEAD_DIM])
            qkv_b_pad = qkv_b_pad.at[d, :, base:base + HEAD_DIM].set(
                scale * blk["qkv_b"][:, c:c + HEAD_DIM])
            # K
            qkv_w_pad = qkv_w_pad.at[d, :, base + HEAD_PAD:base + HEAD_PAD + HEAD_DIM].set(
                blk["qkv_w"][:, EMBED + c:EMBED + c + HEAD_DIM])
            qkv_b_pad = qkv_b_pad.at[d, :, base + HEAD_PAD:base + HEAD_PAD + HEAD_DIM].set(
                blk["qkv_b"][:, EMBED + c:EMBED + c + HEAD_DIM])
            # V
            qkv_w_pad = qkv_w_pad.at[d, :, base + 2 * HEAD_PAD:base + 2 * HEAD_PAD + HEAD_DIM].set(
                blk["qkv_w"][:, 2 * EMBED + c:2 * EMBED + c + HEAD_DIM])
            qkv_b_pad = qkv_b_pad.at[d, :, base + 2 * HEAD_PAD:base + 2 * HEAD_PAD + HEAD_DIM].set(
                blk["qkv_b"][:, 2 * EMBED + c:2 * EMBED + c + HEAD_DIM])
            # proj rows for this head (padded rows stay zero)
            proj_w_pad = proj_w_pad.at[d, h * HEAD_PAD:h * HEAD_PAD + HEAD_DIM, :].set(
                blk["proj_w"][c:c + HEAD_DIM, :])

    blk_vecs = jnp.stack([
        jnp.concatenate([blk["ln1_g"], blk["ln1_b"], blk["proj_b"], blk["ls1"],
                         blk["ln2_g"], blk["ln2_b"], blk["fc2_b"], blk["ls2"]],
                        axis=0)
        for blk in blocks], axis=0)                 # (DEPTH, 8, D)

    def stack(k):
        return jnp.stack([blk[k] for blk in blocks], axis=0)

    return {
        "patch_w": patch_w.astype(jnp.bfloat16),
        "patch_b": params["patch_b"],
        "cls": params["cls"],
        "pos": params["pos"],
        "blk_vecs": blk_vecs,
        "qkv_w": qkv_w_pad.astype(jnp.bfloat16),
        "qkv_b": qkv_b_pad,
        "proj_w": proj_w_pad.astype(jnp.bfloat16),
        "fc1_w": stack("fc1_w").astype(jnp.bfloat16),
        "fc1_b": stack("fc1_b"),
        "fc2_w": stack("fc2_w").astype(jnp.bfloat16),
        "norm_gb": jnp.concatenate([params["norm_g"], params["norm_b"]], axis=0),
    }


if __name__ == "__main__":
    key = jax.random.PRNGKey(0)
    kx, kp = jax.random.split(key)
    x = jax.random.normal(kx, (2, 3, IMG, IMG), jnp.float32)   # NCHW like torch
    params = init_params(kp)
    packed = pack_params(params)

    out = jax.jit(dinov2_forward)(x, packed)
    out = jax.block_until_ready(out)

    assert out.shape == (2, EMBED), out.shape
    assert bool(jnp.all(jnp.isfinite(out)))
    print("KERNEL_OK")
</pallas_src>

<mosaic_0001>
module attributes {stable_mosaic.version = 11 : i64} {
  func.func @_dinov2_kernel(%arg0: i32, %arg1: memref<10x640xbf16, #tpu.memory_space<vmem>>, %arg2: memref<640x128xbf16, #tpu.memory_space<vmem>>, %arg3: memref<10x128xf32, #tpu.memory_space<vmem>>, %arg4: memref<10x10xf32, #tpu.memory_space<vmem>>, %arg5: memref<2x8x128xf32, #tpu.memory_space<vmem>>, %arg6: memref<2x128x768xbf16, #tpu.memory_space<vmem>>, %arg7: memref<2x1x768xf32, #tpu.memory_space<vmem>>, %arg8: memref<2x256x128xbf16, #tpu.memory_space<vmem>>, %arg9: memref<2x128x512xbf16, #tpu.memory_space<vmem>>, %arg10: memref<2x1x512xf32, #tpu.memory_space<vmem>>, %arg11: memref<2x512x128xbf16, #tpu.memory_space<vmem>>, %arg12: memref<2x128xf32, #tpu.memory_space<vmem>>, %arg13: memref<2x128xf32, #tpu.memory_space<vmem>>) attributes {dimension_semantics = [#tpu.dimension_semantics<arbitrary>], iteration_bounds = array<i64: 1>, scalar_prefetch = 0 : i64, scratch_operands = 0 : i64, tpu.core_type = #tpu.core_type<tc>, window_params = [{pipeline_mode = #tpu.pipeline_mode<synchronous>, transform_indices = @transform_0, window_bounds = array<i64: 10, 640>}, {pipeline_mode = #tpu.pipeline_mode<synchronous>, transform_indices = @transform_1, window_bounds = array<i64: 640, 128>}, {pipeline_mode = #tpu.pipeline_mode<synchronous>, transform_indices = @transform_2, window_bounds = array<i64: 10, 128>}, {pipeline_mode = #tpu.pipeline_mode<synchronous>, transform_indices = @transform_3, window_bounds = array<i64: 10, 10>}, {pipeline_mode = #tpu.pipeline_mode<synchronous>, transform_indices = @transform_4, window_bounds = array<i64: 2, 8, 128>}, {pipeline_mode = #tpu.pipeline_mode<synchronous>, transform_indices = @transform_5, window_bounds = array<i64: 2, 128, 768>}, {pipeline_mode = #tpu.pipeline_mode<synchronous>, transform_indices = @transform_6, window_bounds = array<i64: 2, 1, 768>}, {pipeline_mode = #tpu.pipeline_mode<synchronous>, transform_indices = @transform_7, window_bounds = array<i64: 2, 256, 128>}, {pipeline_mode = #tpu.pipeline_mode<synchronous>, transform_indices = @transform_8, window_bounds = array<i64: 2, 128, 512>}, {pipeline_mode = #tpu.pipeline_mode<synchronous>, transform_indices = @transform_9, window_bounds = array<i64: 2, 1, 512>}, {pipeline_mode = #tpu.pipeline_mode<synchronous>, transform_indices = @transform_10, window_bounds = array<i64: 2, 512, 128>}, {pipeline_mode = #tpu.pipeline_mode<synchronous>, transform_indices = @transform_11, window_bounds = array<i64: 2, 128>}, {pipeline_mode = #tpu.pipeline_mode<synchronous>, transform_indices = @transform_12, window_bounds = array<i64: 2, 128>}]} {
    %c0 = arith.constant 0 : index
    %c0_0 = arith.constant 0 : index
    %0 = vector.load %arg1[%c0, %c0_0] : memref<10x640xbf16, #tpu.memory_space<vmem>>, vector<10x640xbf16>
    %c0_1 = arith.constant 0 : index
    %c0_2 = arith.constant 0 : index
    %1 = vector.load %arg2[%c0_1, %c0_2] : memref<640x128xbf16, #tpu.memory_space<vmem>>, vector<640x128xbf16>
    %cst = arith.constant dense<0.000000e+00> : vector<10x128xf32>
    %2 = tpu.matmul %0, %1, %cst {dimension_numbers = #tpu.dot_dimension_numbers<[1], [0], [0], [1], [0, 0, 1, 1], [], []>} : vector<10x640xbf16>, vector<640x128xbf16>, vector<10x128xf32> -> vector<10x128xf32>
    %c0_3 = arith.constant 0 : index
    %c0_4 = arith.constant 0 : index
    %3 = vector.load %arg3[%c0_3, %c0_4] : memref<10x128xf32, #tpu.memory_space<vmem>>, vector<10x128xf32>
    %4 = arith.addf %2, %3 : vector<10x128xf32>
    %c0_5 = arith.constant 0 : index
    %c0_6 = arith.constant 0 : index
    %5 = vector.load %arg4[%c0_5, %c0_6] : memref<10x10xf32, #tpu.memory_space<vmem>>, vector<10x10xf32>
    %c0_7 = arith.constant 0 : index
    %c0_8 = arith.constant 0 : index
    %c0_9 = arith.constant 0 : index
    %6 = vector.load %arg5[%c0_7, %c0_8, %c0_9] : memref<2x8x128xf32, #tpu.memory_space<vmem>>, vector<1x8x128xf32>
    %7 = vector.shape_cast %6 : vector<1x8x128xf32> to vector<8x128xf32>
    %8 = vector.extract_strided_slice %7 {offsets = [0, 0], sizes = [1, 128], strides = [1, 1]} : vector<8x128xf32> to vector<1x128xf32>
    %9 = vector.extract_strided_slice %7 {offsets = [1, 0], sizes = [1, 128], strides = [1, 1]} : vector<8x128xf32> to vector<1x128xf32>
    %10 = vector.extract_strided_slice %7 {offsets = [2, 0], sizes = [1, 128], strides = [1, 1]} : vector<8x128xf32> to vector<1x128xf32>
    %11 = vector.extract_strided_slice %7 {offsets = [3, 0], sizes = [1, 128], strides = [1, 1]} : vector<8x128xf32> to vector<1x128xf32>
    %12 = vector.extract_strided_slice %7 {offsets = [4, 0], sizes = [1, 128], strides = [1, 1]} : vector<8x128xf32> to vector<1x128xf32>
    %13 = vector.extract_strided_slice %7 {offsets = [5, 0], sizes = [1, 128], strides = [1, 1]} : vector<8x128xf32> to vector<1x128xf32>
    %14 = vector.extract_strided_slice %7 {offsets = [6, 0], sizes = [1, 128], strides = [1, 1]} : vector<8x128xf32> to vector<1x128xf32>
    %15 = vector.extract_strided_slice %7 {offsets = [7, 0], sizes = [1, 128], strides = [1, 1]} : vector<8x128xf32> to vector<1x128xf32>
    %cst_10 = arith.constant dense<0.000000e+00> : vector<10xf32>
    %16 = vector.multi_reduction <add>, %4, %cst_10 [1] : vector<10x128xf32> to vector<10xf32>
    %17 = vector.shape_cast %16 : vector<10xf32> to vector<10x1xf32>
    %cst_11 = arith.constant 1.280000e+02 : f32
    %18 = vector.broadcast %cst_11 : f32 to vector<10x1xf32>
    %19 = arith.divf %17, %18 : vector<10x1xf32>
    %20 = arith.mulf %4, %4 : vector<10x128xf32>
    %cst_12 = arith.constant dense<0.000000e+00> : vector<10xf32>
    %21 = vector.multi_reduction <add>, %20, %cst_12 [1] : vector<10x128xf32> to vector<10xf32>
    %22 = vector.shape_cast %21 : vector<10xf32> to vector<10x1xf32>
    %cst_13 = arith.constant 1.280000e+02 : f32
    %23 = vector.broadcast %cst_13 : f32 to vector<10x1xf32>
    %24 = arith.divf %22, %23 : vector<10x1xf32>
    %25 = arith.mulf %19, %19 : vector<10x1xf32>
    %26 = arith.subf %24, %25 : vector<10x1xf32>
    %27 = vector.broadcast %19 : vector<10x1xf32> to vector<10x128xf32>
    %28 = arith.subf %4, %27 : vector<10x128xf32>
    %cst_14 = arith.constant 9.99999997E-7 : f32
    %29 = vector.broadcast %cst_14 : f32 to vector<10x1xf32>
    %30 = arith.addf %26, %29 : vector<10x1xf32>
    %31 = math.rsqrt %30 : vector<10x1xf32>
    %32 = vector.broadcast %31 : vector<10x1xf32> to vector<10x128xf32>
    %33 = arith.mulf %28, %32 : vector<10x128xf32>
    %34 = vector.broadcast %8 : vector<1x128xf32> to vector<10x128xf32>
    %35 = arith.mulf %33, %34 : vector<10x128xf32>
    %36 = vector.broadcast %9 : vector<1x128xf32> to vector<10x128xf32>
    %37 = arith.addf %35, %36 : vector<10x128xf32>
    %38 = arith.truncf %37 : vector<10x128xf32> to vector<10x128xbf16>
    %c0_15 = arith.constant 0 : index
    %c0_16 = arith.constant 0 : index
    %c0_17 = arith.constant 0 : index
    %39 = vector.load %arg6[%c0_15, %c0_16, %c0_17] : memref<2x128x768xbf16, #tpu.memory_space<vmem>>, vector<1x128x768xbf16>
    %40 = vector.shape_cast %39 : vector<1x128x768xbf16> to vector<128x768xbf16>
    %cst_18 = arith.constant dense<0.000000e+00> : vector<10x768xf32>
    %41 = tpu.matmul %38, %40, %cst_18 {dimension_numbers = #tpu.dot_dimension_numbers<[1], [0], [0], [1], [0, 0, 1, 1], [], []>} : vector<10x128xbf16>, vector<128x768xbf16>, vector<10x768xf32> -> vector<10x768xf32>
    %c0_19 = arith.constant 0 : index
    %c0_20 = arith.constant 0 : index
    %c0_21 = arith.constant 0 : index
    %42 = vector.load %arg7[%c0_19, %c0_20, %c0_21] : memref<2x1x768xf32, #tpu.memory_space<vmem>>, vector<1x1x768xf32>
    %43 = vector.shape_cast %42 : vector<1x1x768xf32> to vector<1x768xf32>
    %44 = vector.broadcast %43 : vector<1x768xf32> to vector<10x768xf32>
    %45 = arith.addf %41, %44 : vector<10x768xf32>
    %46 = vector.extract_strided_slice %45 {offsets = [0, 0], sizes = [10, 128], strides = [1, 1]} : vector<10x768xf32> to vector<10x128xf32>
    %47 = vector.extract_strided_slice %45 {offsets = [0, 128], sizes = [10, 128], strides = [1, 1]} : vector<10x768xf32> to vector<10x128xf32>
    %48 = vector.extract_strided_slice %45 {offsets = [0, 256], sizes = [10, 128], strides = [1, 1]} : vector<10x768xf32> to vector<10x128xf32>
    %cst_22 = arith.constant dense<0.000000e+00> : vector<10x10xf32>
    %49 = tpu.matmul %46, %47, %cst_22 {dimension_numbers = #tpu.dot_dimension_numbers<[1], [1], [0], [0], [0, 0, 1, 0], [], []>} : vector<10x128xf32>, vector<10x128xf32>, vector<10x10xf32> -> vector<10x10xf32>
    %50 = arith.addf %49, %5 : vector<10x10xf32>
    %cst_23 = arith.constant dense<0xFF800000> : vector<10xf32>
    %51 = vector.multi_reduction <maximumf>, %50, %cst_23 [1] : vector<10x10xf32> to vector<10xf32>
    %52 = vector.shape_cast %51 : vector<10xf32> to vector<10x1xf32>
    %53 = vector.broadcast %52 : vector<10x1xf32> to vector<10x10xf32>
    %54 = arith.subf %50, %53 : vector<10x10xf32>
    %55 = math.exp %54 : vector<10x10xf32>
    %cst_24 = arith.constant dense<0.000000e+00> : vector<10xf32>
    %56 = vector.multi_reduction <add>, %55, %cst_24 [1] : vector<10x10xf32> to vector<10xf32>
    %57 = vector.shape_cast %56 : vector<10xf32> to vector<10x1xf32>
    %58 = tpu.reciprocal %57 {approx = true} : vector<10x1xf32> -> vector<10x1xf32>
    %59 = vector.broadcast %58 : vector<10x1xf32> to vector<10x10xf32>
    %60 = arith.mulf %55, %59 : vector<10x10xf32>
    %cst_25 = arith.constant dense<0.000000e+00> : vector<10x128xf32>
    %61 = tpu.matmul %60, %48, %cst_25 {dimension_numbers = #tpu.dot_dimension_numbers<[1], [0], [0], [1], [0, 0, 1, 1], [], []>} : vector<10x10xf32>, vector<10x128xf32>, vector<10x128xf32> -> vector<10x128xf32>
    %62 = vector.extract_strided_slice %45 {offsets = [0, 384], sizes = [10, 128], strides = [1, 1]} : vector<10x768xf32> to vector<10x128xf32>
    %63 = vector.extract_strided_slice %45 {offsets = [0, 512], sizes = [10, 128], strides = [1, 1]} : vector<10x768xf32> to vector<10x128xf32>
    %64 = vector.extract_strided_slice %45 {offsets = [0, 640], sizes = [10, 128], strides = [1, 1]} : vector<10x768xf32> to vector<10x128xf32>
    %cst_26 = arith.constant dense<0.000000e+00> : vector<10x10xf32>
    %65 = tpu.matmul %62, %63, %cst_26 {dimension_numbers = #tpu.dot_dimension_numbers<[1], [1], [0], [0], [0, 0, 1, 0], [], []>} : vector<10x128xf32>, vector<10x128xf32>, vector<10x10xf32> -> vector<10x10xf32>
    %66 = arith.addf %65, %5 : vector<10x10xf32>
    %cst_27 = arith.constant dense<0xFF800000> : vector<10xf32>
    %67 = vector.multi_reduction <maximumf>, %66, %cst_27 [1] : vector<10x10xf32> to vector<10xf32>
    %68 = vector.shape_cast %67 : vector<10xf32> to vector<10x1xf32>
    %69 = vector.broadcast %68 : vector<10x1xf32> to vector<10x10xf32>
    %70 = arith.subf %66, %69 : vector<10x10xf32>
    %71 = math.exp %70 : vector<10x10xf32>
    %cst_28 = arith.constant dense<0.000000e+00> : vector<10xf32>
    %72 = vector.multi_reduction <add>, %71, %cst_28 [1] : vector<10x10xf32> to vector<10xf32>
    %73 = vector.shape_cast %72 : vector<10xf32> to vector<10x1xf32>
    %74 = tpu.reciprocal %73 {approx = true} : vector<10x1xf32> -> vector<10x1xf32>
    %75 = vector.broadcast %74 : vector<10x1xf32> to vector<10x10xf32>
    %76 = arith.mulf %71, %75 : vector<10x10xf32>
    %cst_29 = arith.constant dense<0.000000e+00> : vector<10x128xf32>
    %77 = tpu.matmul %76, %64, %cst_29 {dimension_numbers = #tpu.dot_dimension_numbers<[1], [0], [0], [1], [0, 0, 1, 1], [], []>} : vector<10x10xf32>, vector<10x128xf32>, vector<10x128xf32> -> vector<10x128xf32>
    %78 = tpu.concatenate %61, %77 in 1 : vector<10x128xf32>, vector<10x128xf32> -> vector<10x256xf32>
    %79 = arith.truncf %78 : vector<10x256xf32> to vector<10x256xbf16>
    %c0_30 = arith.constant 0 : index
    %c0_31 = arith.constant 0 : index
    %c0_32 = arith.constant 0 : index
    %80 = vector.load %arg8[%c0_30, %c0_31, %c0_32] : memref<2x256x128xbf16, #tpu.memory_space<vmem>>, vector<1x256x128xbf16>
    %81 = vector.shape_cast %80 : vector<1x256x128xbf16> to vector<256x128xbf16>
    %cst_33 = arith.constant dense<0.000000e+00> : vector<10x128xf32>
    %82 = tpu.matmul %79, %81, %cst_33 {dimension_numbers = #tpu.dot_dimension_numbers<[1], [0], [0], [1], [0, 0, 1, 1], [], []>} : vector<10x256xbf16>, vector<256x128xbf16>, vector<10x128xf32> -> vector<10x128xf32>
    %83 = vector.broadcast %10 : vector<1x128xf32> to vector<10x128xf32>
    %84 = arith.addf %82, %83 : vector<10x128xf32>
    %85 = vector.broadcast %11 : vector<1x128xf32> to vector<10x128xf32>
    %86 = arith.mulf %85, %84 : vector<10x128xf32>
    %87 = arith.addf %4, %86 : vector<10x128xf32>
    %cst_34 = arith.constant dense<0.000000e+00> : vector<10xf32>
    %88 = vector.multi_reduction <add>, %87, %cst_34 [1] : vector<10x128xf32> to vector<10xf32>
    %89 = vector.shape_cast %88 : vector<10xf32> to vector<10x1xf32>
    %cst_35 = arith.constant 1.280000e+02 : f32
    %90 = vector.broadcast %cst_35 : f32 to vector<10x1xf32>
    %91 = arith.divf %89, %90 : vector<10x1xf32>
    %92 = arith.mulf %87, %87 : vector<10x128xf32>
    %cst_36 = arith.constant dense<0.000000e+00> : vector<10xf32>
    %93 = vector.multi_reduction <add>, %92, %cst_36 [1] : vector<10x128xf32> to vector<10xf32>
    %94 = vector.shape_cast %93 : vector<10xf32> to vector<10x1xf32>
    %cst_37 = arith.constant 1.280000e+02 : f32
    %95 = vector.broadcast %cst_37 : f32 to vector<10x1xf32>
    %96 = arith.divf %94, %95 : vector<10x1xf32>
    %97 = arith.mulf %91, %91 : vector<10x1xf32>
    %98 = arith.subf %96, %97 : vector<10x1xf32>
    %99 = vector.broadcast %91 : vector<10x1xf32> to vector<10x128xf32>
    %100 = arith.subf %87, %99 : vector<10x128xf32>
    %cst_38 = arith.constant 9.99999997E-7 : f32
    %101 = vector.broadcast %cst_38 : f32 to vector<10x1xf32>
    %102 = arith.addf %98, %101 : vector<10x1xf32>
    %103 = math.rsqrt %102 : vector<10x1xf32>
    %104 = vector.broadcast %103 : vector<10x1xf32> to vector<10x128xf32>
    %105 = arith.mulf %100, %104 : vector<10x128xf32>
    %106 = vector.broadcast %12 : vector<1x128xf32> to vector<10x128xf32>
    %107 = arith.mulf %105, %106 : vector<10x128xf32>
    %108 = vector.broadcast %13 : vector<1x128xf32> to vector<10x128xf32>
    %109 = arith.addf %107, %108 : vector<10x128xf32>
    %110 = arith.truncf %109 : vector<10x128xf32> to vector<10x128xbf16>
    %c0_39 = arith.constant 0 : index
    %c0_40 = arith.constant 0 : index
    %c0_41 = arith.constant 0 : index
    %111 = vector.load %arg9[%c0_39, %c0_40, %c0_41] : memref<2x128x512xbf16, #tpu.memory_space<vmem>>, vector<1x128x512xbf16>
    %112 = vector.shape_cast %111 : vector<1x128x512xbf16> to vector<128x512xbf16>
    %cst_42 = arith.constant dense<0.000000e+00> : vector<10x512xf32>
    %113 = tpu.matmul %110, %112, %cst_42 {dimension_numbers = #tpu.dot_dimension_numbers<[1], [0], [0], [1], [0, 0, 1, 1], [], []>} : vector<10x128xbf16>, vector<128x512xbf16>, vector<10x512xf32> -> vector<10x512xf32>
    %c0_43 = arith.constant 0 : index
    %c0_44 = arith.constant 0 : index
    %c0_45 = arith.constant 0 : index
    %114 = vector.load %arg10[%c0_43, %c0_44, %c0_45] : memref<2x1x512xf32, #tpu.memory_space<vmem>>, vector<1x1x512xf32>
    %115 = vector.shape_cast %114 : vector<1x1x512xf32> to vector<1x512xf32>
    %116 = vector.broadcast %115 : vector<1x512xf32> to vector<10x512xf32>
    %117 = arith.addf %113, %116 : vector<10x512xf32>
    %118 = arith.mulf %117, %117 : vector<10x512xf32>
    %119 = arith.mulf %117, %118 : vector<10x512xf32>
    %cst_46 = arith.constant 4.471500e-02 : f32
    %120 = vector.broadcast %cst_46 : f32 to vector<10x512xf32>
    %121 = arith.mulf %120, %119 : vector<10x512xf32>
    %122 = arith.addf %117, %121 : vector<10x512xf32>
    %cst_47 = arith.constant 0.797884583 : f32
    %123 = vector.broadcast %cst_47 : f32 to vector<10x512xf32>
    %124 = arith.mulf %123, %122 : vector<10x512xf32>
    %125 = math.tanh %124 : vector<10x512xf32>
    %cst_48 = arith.constant 1.000000e+00 : f32
    %126 = vector.broadcast %cst_48 : f32 to vector<10x512xf32>
    %127 = arith.addf %126, %125 : vector<10x512xf32>
    %cst_49 = arith.constant 5.000000e-01 : f32
    %128 = vector.broadcast %cst_49 : f32 to vector<10x512xf32>
    %129 = arith.mulf %128, %127 : vector<10x512xf32>
    %130 = arith.mulf %117, %129 : vector<10x512xf32>
    %131 = arith.truncf %130 : vector<10x512xf32> to vector<10x512xbf16>
    %c0_50 = arith.constant 0 : index
    %c0_51 = arith.constant 0 : index
    %c0_52 = arith.constant 0 : index
    %132 = vector.load %arg11[%c0_50, %c0_51, %c0_52] : memref<2x512x128xbf16, #tpu.memory_space<vmem>>, vector<1x512x128xbf16>
    %133 = vector.shape_cast %132 : vector<1x512x128xbf16> to vector<512x128xbf16>
    %cst_53 = arith.constant dense<0.000000e+00> : vector<10x128xf32>
    %134 = tpu.matmul %131, %133, %cst_53 {dimension_numbers = #tpu.dot_dimension_numbers<[1], [0], [0], [1], [0, 0, 1, 1], [], []>} : vector<10x512xbf16>, vector<512x128xbf16>, vector<10x128xf32> -> vector<10x128xf32>
    %135 = vector.broadcast %14 : vector<1x128xf32> to vector<10x128xf32>
    %136 = arith.addf %134, %135 : vector<10x128xf32>
    %137 = vector.broadcast %15 : vector<1x128xf32> to vector<10x128xf32>
    %138 = arith.mulf %137, %136 : vector<10x128xf32>
    %139 = arith.addf %87, %138 : vector<10x128xf32>
    %c1 = arith.constant 1 : index
    %c0_54 = arith.constant 0 : index
    %c0_55 = arith.constant 0 : index
    %140 = vector.load %arg5[%c1, %c0_54, %c0_55] : memref<2x8x128xf32, #tpu.memory_space<vmem>>, vector<1x8x128xf32>
    %141 = vector.shape_cast %140 : vector<1x8x128xf32> to vector<8x128xf32>
    %142 = vector.extract_strided_slice %141 {offsets = [0, 0], sizes = [1, 128], strides = [1, 1]} : vector<8x128xf32> to vector<1x128xf32>
    %143 = vector.extract_strided_slice %141 {offsets = [1, 0], sizes = [1, 128], strides = [1, 1]} : vector<8x128xf32> to vector<1x128xf32>
    %144 = vector.extract_strided_slice %141 {offsets = [2, 0], sizes = [1, 128], strides = [1, 1]} : vector<8x128xf32> to vector<1x128xf32>
    %145 = vector.extract_strided_slice %141 {offsets = [3, 0], sizes = [1, 128], strides = [1, 1]} : vector<8x128xf32> to vector<1x128xf32>
    %146 = vector.extract_strided_slice %141 {offsets = [4, 0], sizes = [1, 128], strides = [1, 1]} : vector<8x128xf32> to vector<1x128xf32>
    %147 = vector.extract_strided_slice %141 {offsets = [5, 0], sizes = [1, 128], strides = [1, 1]} : vector<8x128xf32> to vector<1x128xf32>
    %148 = vector.extract_strided_slice %141 {offsets = [6, 0], sizes = [1, 128], strides = [1, 1]} : vector<8x128xf32> to vector<1x128xf32>
    %149 = vector.extract_strided_slice %141 {offsets = [7, 0], sizes = [1, 128], strides = [1, 1]} : vector<8x128xf32> to vector<1x128xf32>
    %cst_56 = arith.constant dense<0.000000e+00> : vector<10xf32>
    %150 = vector.multi_reduction <add>, %139, %cst_56 [1] : vector<10x128xf32> to vector<10xf32>
    %151 = vector.shape_cast %150 : vector<10xf32> to vector<10x1xf32>
    %cst_57 = arith.constant 1.280000e+02 : f32
    %152 = vector.broadcast %cst_57 : f32 to vector<10x1xf32>
    %153 = arith.divf %151, %152 : vector<10x1xf32>
    %154 = arith.mulf %139, %139 : vector<10x128xf32>
    %cst_58 = arith.constant dense<0.000000e+00> : vector<10xf32>
    %155 = vector.multi_reduction <add>, %154, %cst_58 [1] : vector<10x128xf32> to vector<10xf32>
    %156 = vector.shape_cast %155 : vector<10xf32> to vector<10x1xf32>
    %cst_59 = arith.constant 1.280000e+02 : f32
    %157 = vector.broadcast %cst_59 : f32 to vector<10x1xf32>
    %158 = arith.divf %156, %157 : vector<10x1xf32>
    %159 = arith.mulf %153, %153 : vector<10x1xf32>
    %160 = arith.subf %158, %159 : vector<10x1xf32>
    %161 = vector.broadcast %153 : vector<10x1xf32> to vector<10x128xf32>
    %162 = arith.subf %139, %161 : vector<10x128xf32>
    %cst_60 = arith.constant 9.99999997E-7 : f32
    %163 = vector.broadcast %cst_60 : f32 to vector<10x1xf32>
    %164 = arith.addf %160, %163 : vector<10x1xf32>
    %165 = math.rsqrt %164 : vector<10x1xf32>
    %166 = vector.broadcast %165 : vector<10x1xf32> to vector<10x128xf32>
    %167 = arith.mulf %162, %166 : vector<10x128xf32>
    %168 = vector.broadcast %142 : vector<1x128xf32> to vector<10x128xf32>
    %169 = arith.mulf %167, %168 : vector<10x128xf32>
    %170 = vector.broadcast %143 : vector<1x128xf32> to vector<10x128xf32>
    %171 = arith.addf %169, %170 : vector<10x128xf32>
    %172 = arith.truncf %171 : vector<10x128xf32> to vector<10x128xbf16>
    %c1_61 = arith.constant 1 : index
    %c0_62 = arith.constant 0 : index
    %c0_63 = arith.constant 0 : index
    %173 = vector.load %arg6[%c1_61, %c0_62, %c0_63] : memref<2x128x768xbf16, #tpu.memory_space<vmem>>, vector<1x128x768xbf16>
    %174 = vector.shape_cast %173 : vector<1x128x768xbf16> to vector<128x768xbf16>
    %cst_64 = arith.constant dense<0.000000e+00> : vector<10x768xf32>
    %175 = tpu.matmul %172, %174, %cst_64 {dimension_numbers = #tpu.dot_dimension_numbers<[1], [0], [0], [1], [0, 0, 1, 1], [], []>} : vector<10x128xbf16>, vector<128x768xbf16>, vector<10x768xf32> -> vector<10x768xf32>
    %c1_65 = arith.constant 1 : index
    %c0_66 = arith.constant 0 : index
    %c0_67 = arith.constant 0 : index
    %176 = vector.load %arg7[%c1_65, %c0_66, %c0_67] : memref<2x1x768xf32, #tpu.memory_space<vmem>>, vector<1x1x768xf32>
    %177 = vector.shape_cast %176 : vector<1x1x768xf32> to vector<1x768xf32>
    %178 = vector.broadcast %177 : vector<1x768xf32> to vector<10x768xf32>
    %179 = arith.addf %175, %178 : vector<10x768xf32>
    %180 = vector.extract_strided_slice %179 {offsets = [0, 0], sizes = [10, 128], strides = [1, 1]} : vector<10x768xf32> to vector<10x128xf32>
    %181 = vector.extract_strided_slice %179 {offsets = [0, 128], sizes = [10, 128], strides = [1, 1]} : vector<10x768xf32> to vector<10x128xf32>
    %182 = vector.extract_strided_slice %179 {offsets = [0, 256], sizes = [10, 128], strides = [1, 1]} : vector<10x768xf32> to vector<10x128xf32>
    %cst_68 = arith.constant dense<0.000000e+00> : vector<10x10xf32>
    %183 = tpu.matmul %180, %181, %cst_68 {dimension_numbers = #tpu.dot_dimension_numbers<[1], [1], [0], [0], [0, 0, 1, 0], [], []>} : vector<10x128xf32>, vector<10x128xf32>, vector<10x10xf32> -> vector<10x10xf32>
    %184 = arith.addf %183, %5 : vector<10x10xf32>
    %cst_69 = arith.constant dense<0xFF800000> : vector<10xf32>
    %185 = vector.multi_reduction <maximumf>, %184, %cst_69 [1] : vector<10x10xf32> to vector<10xf32>
    %186 = vector.shape_cast %185 : vector<10xf32> to vector<10x1xf32>
    %187 = vector.broadcast %186 : vector<10x1xf32> to vector<10x10xf32>
    %188 = arith.subf %184, %187 : vector<10x10xf32>
    %189 = math.exp %188 : vector<10x10xf32>
    %cst_70 = arith.constant dense<0.000000e+00> : vector<10xf32>
    %190 = vector.multi_reduction <add>, %189, %cst_70 [1] : vector<10x10xf32> to vector<10xf32>
    %191 = vector.shape_cast %190 : vector<10xf32> to vector<10x1xf32>
    %192 = tpu.reciprocal %191 {approx = true} : vector<10x1xf32> -> vector<10x1xf32>
    %193 = vector.broadcast %192 : vector<10x1xf32> to vector<10x10xf32>
    %194 = arith.mulf %189, %193 : vector<10x10xf32>
    %cst_71 = arith.constant dense<0.000000e+00> : vector<10x128xf32>
    %195 = tpu.matmul %194, %182, %cst_71 {dimension_numbers = #tpu.dot_dimension_numbers<[1], [0], [0], [1], [0, 0, 1, 1], [], []>} : vector<10x10xf32>, vector<10x128xf32>, vector<10x128xf32> -> vector<10x128xf32>
    %196 = vector.extract_strided_slice %179 {offsets = [0, 384], sizes = [10, 128], strides = [1, 1]} : vector<10x768xf32> to vector<10x128xf32>
    %197 = vector.extract_strided_slice %179 {offsets = [0, 512], sizes = [10, 128], strides = [1, 1]} : vector<10x768xf32> to vector<10x128xf32>
    %198 = vector.extract_strided_slice %179 {offsets = [0, 640], sizes = [10, 128], strides = [1, 1]} : vector<10x768xf32> to vector<10x128xf32>
    %cst_72 = arith.constant dense<0.000000e+00> : vector<10x10xf32>
    %199 = tpu.matmul %196, %197, %cst_72 {dimension_numbers = #tpu.dot_dimension_numbers<[1], [1], [0], [0], [0, 0, 1, 0], [], []>} : vector<10x128xf32>, vector<10x128xf32>, vector<10x10xf32> -> vector<10x10xf32>
    %200 = arith.addf %199, %5 : vector<10x10xf32>
    %cst_73 = arith.constant dense<0xFF800000> : vector<10xf32>
    %201 = vector.multi_reduction <maximumf>, %200, %cst_73 [1] : vector<10x10xf32> to vector<10xf32>
    %202 = vector.shape_cast %201 : vector<10xf32> to vector<10x1xf32>
    %203 = vector.broadcast %202 : vector<10x1xf32> to vector<10x10xf32>
    %204 = arith.subf %200, %203 : vector<10x10xf32>
    %205 = math.exp %204 : vector<10x10xf32>
    %cst_74 = arith.constant dense<0.000000e+00> : vector<10xf32>
    %206 = vector.multi_reduction <add>, %205, %cst_74 [1] : vector<10x10xf32> to vector<10xf32>
    %207 = vector.shape_cast %206 : vector<10xf32> to vector<10x1xf32>
    %208 = tpu.reciprocal %207 {approx = true} : vector<10x1xf32> -> vector<10x1xf32>
    %209 = vector.broadcast %208 : vector<10x1xf32> to vector<10x10xf32>
    %210 = arith.mulf %205, %209 : vector<10x10xf32>
    %cst_75 = arith.constant dense<0.000000e+00> : vector<10x128xf32>
    %211 = tpu.matmul %210, %198, %cst_75 {dimension_numbers = #tpu.dot_dimension_numbers<[1], [0], [0], [1], [0, 0, 1, 1], [], []>} : vector<10x10xf32>, vector<10x128xf32>, vector<10x128xf32> -> vector<10x128xf32>
    %212 = tpu.concatenate %195, %211 in 1 : vector<10x128xf32>, vector<10x128xf32> -> vector<10x256xf32>
    %213 = arith.truncf %212 : vector<10x256xf32> to vector<10x256xbf16>
    %c1_76 = arith.constant 1 : index
    %c0_77 = arith.constant 0 : index
    %c0_78 = arith.constant 0 : index
    %214 = vector.load %arg8[%c1_76, %c0_77, %c0_78] : memref<2x256x128xbf16, #tpu.memory_space<vmem>>, vector<1x256x128xbf16>
    %215 = vector.shape_cast %214 : vector<1x256x128xbf16> to vector<256x128xbf16>
    %cst_79 = arith.constant dense<0.000000e+00> : vector<10x128xf32>
    %216 = tpu.matmul %213, %215, %cst_79 {dimension_numbers = #tpu.dot_dimension_numbers<[1], [0], [0], [1], [0, 0, 1, 1], [], []>} : vector<10x256xbf16>, vector<256x128xbf16>, vector<10x128xf32> -> vector<10x128xf32>
    %217 = vector.broadcast %144 : vector<1x128xf32> to vector<10x128xf32>
    %218 = arith.addf %216, %217 : vector<10x128xf32>
    %219 = vector.broadcast %145 : vector<1x128xf32> to vector<10x128xf32>
    %220 = arith.mulf %219, %218 : vector<10x128xf32>
    %221 = arith.addf %139, %220 : vector<10x128xf32>
    %cst_80 = arith.constant dense<0.000000e+00> : vector<10xf32>
    %222 = vector.multi_reduction <add>, %221, %cst_80 [1] : vector<10x128xf32> to vector<10xf32>
    %223 = vector.shape_cast %222 : vector<10xf32> to vector<10x1xf32>
    %cst_81 = arith.constant 1.280000e+02 : f32
    %224 = vector.broadcast %cst_81 : f32 to vector<10x1xf32>
    %225 = arith.divf %223, %224 : vector<10x1xf32>
    %226 = arith.mulf %221, %221 : vector<10x128xf32>
    %cst_82 = arith.constant dense<0.000000e+00> : vector<10xf32>
    %227 = vector.multi_reduction <add>, %226, %cst_82 [1] : vector<10x128xf32> to vector<10xf32>
    %228 = vector.shape_cast %227 : vector<10xf32> to vector<10x1xf32>
    %cst_83 = arith.constant 1.280000e+02 : f32
    %229 = vector.broadcast %cst_83 : f32 to vector<10x1xf32>
    %230 = arith.divf %228, %229 : vector<10x1xf32>
    %231 = arith.mulf %225, %225 : vector<10x1xf32>
    %232 = arith.subf %230, %231 : vector<10x1xf32>
    %233 = vector.broadcast %225 : vector<10x1xf32> to vector<10x128xf32>
    %234 = arith.subf %221, %233 : vector<10x128xf32>
    %cst_84 = arith.constant 9.99999997E-7 : f32
    %235 = vector.broadcast %cst_84 : f32 to vector<10x1xf32>
    %236 = arith.addf %232, %235 : vector<10x1xf32>
    %237 = math.rsqrt %236 : vector<10x1xf32>
    %238 = vector.broadcast %237 : vector<10x1xf32> to vector<10x128xf32>
    %239 = arith.mulf %234, %238 : vector<10x128xf32>
    %240 = vector.broadcast %146 : vector<1x128xf32> to vector<10x128xf32>
    %241 = arith.mulf %239, %240 : vector<10x128xf32>
    %242 = vector.broadcast %147 : vector<1x128xf32> to vector<10x128xf32>
    %243 = arith.addf %241, %242 : vector<10x128xf32>
    %244 = arith.truncf %243 : vector<10x128xf32> to vector<10x128xbf16>
    %c1_85 = arith.constant 1 : index
    %c0_86 = arith.constant 0 : index
    %c0_87 = arith.constant 0 : index
    %245 = vector.load %arg9[%c1_85, %c0_86, %c0_87] : memref<2x128x512xbf16, #tpu.memory_space<vmem>>, vector<1x128x512xbf16>
    %246 = vector.shape_cast %245 : vector<1x128x512xbf16> to vector<128x512xbf16>
    %cst_88 = arith.constant dense<0.000000e+00> : vector<10x512xf32>
    %247 = tpu.matmul %244, %246, %cst_88 {dimension_numbers = #tpu.dot_dimension_numbers<[1], [0], [0], [1], [0, 0, 1, 1], [], []>} : vector<10x128xbf16>, vector<128x512xbf16>, vector<10x512xf32> -> vector<10x512xf32>
    %c1_89 = arith.constant 1 : index
    %c0_90 = arith.constant 0 : index
    %c0_91 = arith.constant 0 : index
    %248 = vector.load %arg10[%c1_89, %c0_90, %c0_91] : memref<2x1x512xf32, #tpu.memory_space<vmem>>, vector<1x1x512xf32>
    %249 = vector.shape_cast %248 : vector<1x1x512xf32> to vector<1x512xf32>
    %250 = vector.broadcast %249 : vector<1x512xf32> to vector<10x512xf32>
    %251 = arith.addf %247, %250 : vector<10x512xf32>
    %252 = arith.mulf %251, %251 : vector<10x512xf32>
    %253 = arith.mulf %251, %252 : vector<10x512xf32>
    %cst_92 = arith.constant 4.471500e-02 : f32
    %254 = vector.broadcast %cst_92 : f32 to vector<10x512xf32>
    %255 = arith.mulf %254, %253 : vector<10x512xf32>
    %256 = arith.addf %251, %255 : vector<10x512xf32>
    %cst_93 = arith.constant 0.797884583 : f32
    %257 = vector.broadcast %cst_93 : f32 to vector<10x512xf32>
    %258 = arith.mulf %257, %256 : vector<10x512xf32>
    %259 = math.tanh %258 : vector<10x512xf32>
    %cst_94 = arith.constant 1.000000e+00 : f32
    %260 = vector.broadcast %cst_94 : f32 to vector<10x512xf32>
    %261 = arith.addf %260, %259 : vector<10x512xf32>
    %cst_95 = arith.constant 5.000000e-01 : f32
    %262 = vector.broadcast %cst_95 : f32 to vector<10x512xf32>
    %263 = arith.mulf %262, %261 : vector<10x512xf32>
    %264 = arith.mulf %251, %263 : vector<10x512xf32>
    %265 = arith.truncf %264 : vector<10x512xf32> to vector<10x512xbf16>
    %c1_96 = arith.constant 1 : index
    %c0_97 = arith.constant 0 : index
    %c0_98 = arith.constant 0 : index
    %266 = vector.load %arg11[%c1_96, %c0_97, %c0_98] : memref<2x512x128xbf16, #tpu.memory_space<vmem>>, vector<1x512x128xbf16>
    %267 = vector.shape_cast %266 : vector<1x512x128xbf16> to vector<512x128xbf16>
    %cst_99 = arith.constant dense<0.000000e+00> : vector<10x128xf32>
    %268 = tpu.matmul %265, %267, %cst_99 {dimension_numbers = #tpu.dot_dimension_numbers<[1], [0], [0], [1], [0, 0, 1, 1], [], []>} : vector<10x512xbf16>, vector<512x128xbf16>, vector<10x128xf32> -> vector<10x128xf32>
    %269 = vector.broadcast %148 : vector<1x128xf32> to vector<10x128xf32>
    %270 = arith.addf %268, %269 : vector<10x128xf32>
    %271 = vector.broadcast %149 : vector<1x128xf32> to vector<10x128xf32>
    %272 = arith.mulf %271, %270 : vector<10x128xf32>
    %273 = arith.addf %221, %272 : vector<10x128xf32>
    %c0_100 = arith.constant 0 : index
    %c0_101 = arith.constant 0 : index
    %274 = vector.load %arg12[%c0_100, %c0_101] : memref<2x128xf32, #tpu.memory_space<vmem>>, vector<2x128xf32>
    %275 = vector.extract_strided_slice %273 {offsets = [8, 0], sizes = [2, 128], strides = [1, 1]} : vector<10x128xf32> to vector<2x128xf32>
    %276 = vector.extract_strided_slice %274 {offsets = [0, 0], sizes = [1, 128], strides = [1, 1]} : vector<2x128xf32> to vector<1x128xf32>
    %277 = vector.extract_strided_slice %274 {offsets = [1, 0], sizes = [1, 128], strides = [1, 1]} : vector<2x128xf32> to vector<1x128xf32>
    %cst_102 = arith.constant dense<0.000000e+00> : vector<2xf32>
    %278 = vector.multi_reduction <add>, %275, %cst_102 [1] : vector<2x128xf32> to vector<2xf32>
    %279 = vector.shape_cast %278 : vector<2xf32> to vector<2x1xf32>
    %cst_103 = arith.constant 1.280000e+02 : f32
    %280 = vector.broadcast %cst_103 : f32 to vector<2x1xf32>
    %281 = arith.divf %279, %280 : vector<2x1xf32>
    %282 = arith.mulf %275, %275 : vector<2x128xf32>
    %cst_104 = arith.constant dense<0.000000e+00> : vector<2xf32>
    %283 = vector.multi_reduction <add>, %282, %cst_104 [1] : vector<2x128xf32> to vector<2xf32>
    %284 = vector.shape_cast %283 : vector<2xf32> to vector<2x1xf32>
    %cst_105 = arith.constant 1.280000e+02 : f32
    %285 = vector.broadcast %cst_105 : f32 to vector<2x1xf32>
    %286 = arith.divf %284, %285 : vector<2x1xf32>
    %287 = arith.mulf %281, %281 : vector<2x1xf32>
    %288 = arith.subf %286, %287 : vector<2x1xf32>
    %289 = vector.broadcast %281 : vector<2x1xf32> to vector<2x128xf32>
    %290 = arith.subf %275, %289 : vector<2x128xf32>
    %cst_106 = arith.constant 9.99999997E-7 : f32
    %291 = vector.broadcast %cst_106 : f32 to vector<2x1xf32>
    %292 = arith.addf %288, %291 : vector<2x1xf32>
    %293 = math.rsqrt %292 : vector<2x1xf32>
    %294 = vector.broadcast %293 : vector<2x1xf32> to vector<2x128xf32>
    %295 = arith.mulf %290, %294 : vector<2x128xf32>
    %296 = vector.broadcast %276 : vector<1x128xf32> to vector<2x128xf32>
    %297 = arith.mulf %295, %296 : vector<2x128xf32>
    %298 = vector.broadcast %277 : vector<1x128xf32> to vector<2x128xf32>
    %299 = arith.addf %297, %298 : vector<2x128xf32>
    %c0_107 = arith.constant 0 : index
    %c0_108 = arith.constant 0 : index
    %300 = vector.load %arg13[%c0_107, %c0_108] : memref<2x128xf32, #tpu.memory_space<vmem>>, vector<2x128xf32>
    tpu.vector_store %arg13[%c0_107, %c0_108], %299 {strides = array<i32>} : memref<2x128xf32, #tpu.memory_space<vmem>>, vector<2x128xf32>,
    return
  }
  func.func @transform_0(%arg0: i32) -> (i32, i32) {
    %c0_i32 = arith.constant 0 : i32
    %c0_i32_0 = arith.constant 0 : i32
    %c0_i32_1 = arith.constant 0 : i32
    return %c0_i32, %c0_i32_0 : i32, i32
  }
  func.func @transform_1(%arg0: i32) -> (i32, i32) {
    %c0_i32 = arith.constant 0 : i32
    %c0_i32_0 = arith.constant 0 : i32
    %c0_i32_1 = arith.constant 0 : i32
    return %c0_i32, %c0_i32_0 : i32, i32
  }
  func.func @transform_2(%arg0: i32) -> (i32, i32) {
    %c0_i32 = arith.constant 0 : i32
    %c0_i32_0 = arith.constant 0 : i32
    %c0_i32_1 = arith.constant 0 : i32
    return %c0_i32, %c0_i32_0 : i32, i32
  }
  func.func @transform_3(%arg0: i32) -> (i32, i32) {
    %c0_i32 = arith.constant 0 : i32
    %c0_i32_0 = arith.constant 0 : i32
    %c0_i32_1 = arith.constant 0 : i32
    return %c0_i32, %c0_i32_0 : i32, i32
  }
  func.func @transform_4(%arg0: i32) -> (i32, i32, i32) {
    %c0_i32 = arith.constant 0 : i32
    %c0_i32_0 = arith.constant 0 : i32
    %c0_i32_1 = arith.constant 0 : i32
    %c0_i32_2 = arith.constant 0 : i32
    return %c0_i32, %c0_i32_0, %c0_i32_1 : i32, i32, i32
  }
  func.func @transform_5(%arg0: i32) -> (i32, i32, i32) {
    %c0_i32 = arith.constant 0 : i32
    %c0_i32_0 = arith.constant 0 : i32
    %c0_i32_1 = arith.constant 0 : i32
    %c0_i32_2 = arith.constant 0 : i32
    return %c0_i32, %c0_i32_0, %c0_i32_1 : i32, i32, i32
  }
  func.func @transform_6(%arg0: i32) -> (i32, i32, i32) {
    %c0_i32 = arith.constant 0 : i32
    %c0_i32_0 = arith.constant 0 : i32
    %c0_i32_1 = arith.constant 0 : i32
    %c0_i32_2 = arith.constant 0 : i32
    return %c0_i32, %c0_i32_0, %c0_i32_1 : i32, i32, i32
  }
  func.func @transform_7(%arg0: i32) -> (i32, i32, i32) {
    %c0_i32 = arith.constant 0 : i32
    %c0_i32_0 = arith.constant 0 : i32
    %c0_i32_1 = arith.constant 0 : i32
    %c0_i32_2 = arith.constant 0 : i32
    return %c0_i32, %c0_i32_0, %c0_i32_1 : i32, i32, i32
  }
  func.func @transform_8(%arg0: i32) -> (i32, i32, i32) {
    %c0_i32 = arith.constant 0 : i32
    %c0_i32_0 = arith.constant 0 : i32
    %c0_i32_1 = arith.constant 0 : i32
    %c0_i32_2 = arith.constant 0 : i32
    return %c0_i32, %c0_i32_0, %c0_i32_1 : i32, i32, i32
  }
  func.func @transform_9(%arg0: i32) -> (i32, i32, i32) {
    %c0_i32 = arith.constant 0 : i32
    %c0_i32_0 = arith.constant 0 : i32
    %c0_i32_1 = arith.constant 0 : i32
    %c0_i32_2 = arith.constant 0 : i32
    return %c0_i32, %c0_i32_0, %c0_i32_1 : i32, i32, i32
  }
  func.func @transform_10(%arg0: i32) -> (i32, i32, i32) {
    %c0_i32 = arith.constant 0 : i32
    %c0_i32_0 = arith.constant 0 : i32
    %c0_i32_1 = arith.constant 0 : i32
    %c0_i32_2 = arith.constant 0 : i32
    return %c0_i32, %c0_i32_0, %c0_i32_1 : i32, i32, i32
  }
  func.func @transform_11(%arg0: i32) -> (i32, i32) {
    %c0_i32 = arith.constant 0 : i32
    %c0_i32_0 = arith.constant 0 : i32
    %c0_i32_1 = arith.constant 0 : i32
    return %c0_i32, %c0_i32_0 : i32, i32
  }
  func.func @transform_12(%arg0: i32) -> (i32, i32) {
    %c0_i32 = arith.constant 0 : i32
    %c0_i32_0 = arith.constant 0 : i32
    %c0_i32_1 = arith.constant 0 : i32
    return %c0_i32, %c0_i32_0 : i32, i32
  }
}

</mosaic_0001>

<llo_original>
// kernel: dinov2_forward.1
$region0: #{dinov2_forward.1}
  #allocation0 [shape = 'u32[]', space=smem, size = 0x4, offset = 0x4, fixed_abs, tag = 'smem constant byte address 0x4 - core index']
  #allocation1 [shape = 'u32[72,128]{1,0:T(1,128)}', space=vmem, size = 0x9000, scoped, tag = 'internal scratch']
  %s0 = inlined_call_operand.vmem [shape: bf16[10,640], index: 0, kind: input, shape index: {}]
  %s1 = inlined_call_operand.vmem [shape: bf16[640,128], index: 1, kind: input, shape index: {}]
  %s2 = inlined_call_operand.vmem [shape: f32[10,128], index: 2, kind: input, shape index: {}]
  %s3 = inlined_call_operand.vmem [shape: f32[10,10], index: 3, kind: input, shape index: {}]
  %s4 = inlined_call_operand.vmem [shape: f32[2,8,128], index: 4, kind: input, shape index: {}]
  %s5 = inlined_call_operand.vmem [shape: bf16[2,128,768], index: 5, kind: input, shape index: {}]
  %s6 = inlined_call_operand.vmem [shape: f32[2,1,768], index: 6, kind: input, shape index: {}]
  %s7 = inlined_call_operand.hbm [shape: bf16[2,256,128], index: 7, kind: input, shape index: {}]
  %s8 = inlined_call_operand.hbm [shape: bf16[2,128,512], index: 8, kind: input, shape index: {}]
  %s9 = inlined_call_operand.vmem [shape: f32[2,1,512], index: 9, kind: input, shape index: {}]
  %s10 = inlined_call_operand.hbm [shape: bf16[2,512,128], index: 10, kind: input, shape index: {}]
  %s11 = inlined_call_operand.vmem [shape: f32[2,128], index: 11, kind: input, shape index: {}]
  %s12 = inlined_call_operand.hbm [shape: f32[2,128], index: 12, kind: output, shape index: {}]
  %s13 = sld [smem:[#allocation0]]
  $region70: #{dinov2_forward.1} parent=0
    _
  %s15 = ssub.s32 1, %s13
  %s16 = scalar_select 0, %s15, %s13
  $region1: #{dinov2_forward.1} parent=0
    #allocation2 [shape = 'u8[131072]{0}', space=vmem, size = 0x20000, scoped, tag = 'input window, operand 7, single buffered']
    #allocation3 [shape = 's32[1]{0}', space=sflag, size = 0x4, scoped, tag = 'scoped memory for dinov2_forward.1']
    #allocation4 [shape = 's32[1]{0}', space=sflag, size = 0x4, scoped, tag = 'scoped memory for dinov2_forward.1']
    #allocation5 [shape = 'u8[262144]{0}', space=vmem, size = 0x40000, scoped, tag = 'input window, operand 8, single buffered']
    #allocation6 [shape = 's32[1]{0}', space=sflag, size = 0x4, scoped, tag = 'scoped memory for dinov2_forward.1']
    #allocation7 [shape = 'u8[262144]{0}', space=vmem, size = 0x40000, scoped, tag = 'input window, operand 10, single buffered']
    #allocation8 [shape = 'u8[1024]{0}', space=vmem, size = 0x400, scoped, tag = 'output window, operand 0, single buffered']
    %17 = vsyncpa [#allocation3], 0
    %18 = vsyncpa [#allocation6], 0
    %19 = vsyncpa [#allocation4], 0
    // Predicated region
    $region2: #{dinov2_forward.1} parent=1 // pred_check
      _
    $region3: #{dinov2_forward.1} parent=1 // pred_check_branch
      %21 = sbr.rel (0) target = $region5
    $region4: #{dinov2_forward.1} parent=1 // pred_region
      _
    $region5: #{dinov2_forward.1} parent=1 // pred_fallthru
      _
    // Predicated region
    $region6: #{dinov2_forward.1} parent=1 // pred_check
      _
    $region7: #{dinov2_forward.1} parent=1 // pred_check_branch
      %23 = sbr.rel (0) target = $region9
    $region8: #{dinov2_forward.1} parent=1 // pred_region
      _
    $region9: #{dinov2_forward.1} parent=1 // pred_fallthru
      _
    // Predicated region
    $region10: #{dinov2_forward.1} parent=1 // pred_check
      _
    $region11: #{dinov2_forward.1} parent=1 // pred_check_branch
      %25 = sbr.rel (0) target = $region13
    $region12: #{dinov2_forward.1} parent=1 // pred_region
      _
    $region13: #{dinov2_forward.1} parent=1 // pred_fallthru
      _
    // Predicated region
    $region14: #{dinov2_forward.1} parent=1 // pred_check
      _
    $region15: #{dinov2_forward.1} parent=1 // pred_check_branch
      %27 = sbr.rel (0) target = $region17
    $region16: #{dinov2_forward.1} parent=1 // pred_region
      _
    $region17: #{dinov2_forward.1} parent=1 // pred_fallthru
      _
    // Predicated region
    $region18: #{dinov2_forward.1} parent=1 // pred_check
      _
    $region19: #{dinov2_forward.1} parent=1 // pred_check_branch
      %29 = sbr.rel (0) target = $region21
    $region20: #{dinov2_forward.1} parent=1 // pred_region
      _
    $region21: #{dinov2_forward.1} parent=1 // pred_fallthru
      _
    // Predicated region
    $region22: #{dinov2_forward.1} parent=1 // pred_check
      _
    $region23: #{dinov2_forward.1} parent=1 // pred_check_branch
      %31 = sbr.rel (0) target = $region25
    $region24: #{dinov2_forward.1} parent=1 // pred_region
      _
    $region25: #{dinov2_forward.1} parent=1 // pred_fallthru
      _
    // Predicated region
    $region26: #{dinov2_forward.1} parent=1 // pred_check
      _
    $region27: #{dinov2_forward.1} parent=1 // pred_check_branch
      %33 = sbr.rel (0) target = $region29
    $region28: #{dinov2_forward.1} parent=1 // pred_region
      _
    $region29: #{dinov2_forward.1} parent=1 // pred_fallthru
      _
    // Predicated region
    $region30: #{dinov2_forward.1} parent=1 // pred_check
      _
    $region31: #{dinov2_forward.1} parent=1 // pred_check_branch
      %35 = sbr.rel (0) target = $region33
    $region32: #{dinov2_forward.1} parent=1 // pred_region
      %37 = vsyncadd [#allocation3], 0
      %s38 = sshll.u32 %s7, 4
      %s39 = int_to_ptr.hbm [resolvable:$true] %s38
      %s40 = sshll.u32 [#allocation2], 4
      %s41 = int_to_ptr.vmem [resolvable:$true] %s40
      %46 = dma.hbm_to_vmem [thread:$0]  %s39, 4096, %s41, [#allocation3], 64, 64, 4
    $region33: #{dinov2_forward.1} parent=1 // pred_fallthru
      _
    // Predicated region
    $region34: #{dinov2_forward.1} parent=1 // pred_check
      _
    $region35: #{dinov2_forward.1} parent=1 // pred_check_branch
      %48 = sbr.rel (0) target = $region37
    $region36: #{dinov2_forward.1} parent=1 // pred_region
      %50 = vsyncadd [#allocation6], 0
      %s51 = sshll.u32 %s8, 4
      %s52 = int_to_ptr.hbm [resolvable:$true] %s51
      %s53 = sshll.u32 [#allocation5], 4
      %s54 = int_to_ptr.vmem [resolvable:$true] %s53
      %59 = dma.hbm_to_vmem [thread:$0]  %s52, 8192, %s54, [#allocation6], 256, 256, 16
    $region37: #{dinov2_forward.1} parent=1 // pred_fallthru
      _
    // Predicated region
    $region38: #{dinov2_forward.1} parent=1 // pred_check
      _
    $region39: #{dinov2_forward.1} parent=1 // pred_check_branch
      %61 = sbr.rel (0) target = $region41
    $region40: #{dinov2_forward.1} parent=1 // pred_region
      _
    $region41: #{dinov2_forward.1} parent=1 // pred_fallthru
      _
    // Predicated region
    $region42: #{dinov2_forward.1} parent=1 // pred_check
      _
    $region43: #{dinov2_forward.1} parent=1 // pred_check_branch
      %63 = sbr.rel (0) target = $region45
    $region44: #{dinov2_forward.1} parent=1 // pred_region
      %65 = vsyncadd [#allocation6], 0
      %s66 = sshll.u32 %s10, 4
      %s67 = int_to_ptr.hbm [resolvable:$true] %s66
      %s68 = sshll.u32 [#allocation7], 4
      %s69 = int_to_ptr.vmem [resolvable:$true] %s68
      %74 = dma.hbm_to_vmem [thread:$0]  %s67, 8192, %s69, [#allocation6], 64, 64, 4
    $region45: #{dinov2_forward.1} parent=1 // pred_fallthru
      _
    // Predicated region
    $region46: #{dinov2_forward.1} parent=1 // pred_check
      _
    $region47: #{dinov2_forward.1} parent=1 // pred_check_branch
      %76 = sbr.rel (0) target = $region49
    $region48: #{dinov2_forward.1} parent=1 // pred_region
      _
    $region49: #{dinov2_forward.1} parent=1 // pred_fallthru
      _
    // Predicated region
    $region50: #{dinov2_forward.1} parent=1 // pred_check
      _
    $region51: #{dinov2_forward.1} parent=1 // pred_check_branch
      %78 = sbr.rel (0) target = $region53
    $region52: #{dinov2_forward.1} parent=1 // pred_region
      %80 = dma.done [#allocation3], 4096
    $region53: #{dinov2_forward.1} parent=1 // pred_fallthru
      _
    // Predicated region
    $region54: #{dinov2_forward.1} parent=1 // pred_check
      _
    $region55: #{dinov2_forward.1} parent=1 // pred_check_branch
      %82 = sbr.rel (0) target = $region57
    $region56: #{dinov2_forward.1} parent=1 // pred_region
      %84 = dma.done [#allocation6], 8192
    $region57: #{dinov2_forward.1} parent=1 // pred_fallthru
      _
    // Predicated region
    $region58: #{dinov2_forward.1} parent=1 // pred_check
      _
    $region59: #{dinov2_forward.1} parent=1 // pred_check_branch
      %86 = sbr.rel (0) target = $region61
    $region60: #{dinov2_forward.1} parent=1 // pred_region
      %88 = dma.done [#allocation6], 8192
    $region61: #{dinov2_forward.1} parent=1 // pred_fallthru
      _
    %v89 = vld [vmem:[%s0] sm:$0xff]
    %v90 = vld [vmem:[%s0 + $0x8] sm:$0xff]
    %v91 = vld [vmem:[%s0 + $0x10] sm:$0xf]
    %v92 = vld [vmem:[%s0 + $0x14] sm:$0x11]
    %v93 = vld [vmem:[%s0 + $0x1c] sm:$0x11]
    %v94 = vld [vmem:[%s0 + $0x24] sm:$0x1]
    %v95 = vld [vmem:[%s1] sm:$0xf]
    %v96 = vld [vmem:[%s1 + $0x4] sm:$0xf]
    %v97 = vld [vmem:[%s1 + $0x8] sm:$0xf]
    %v98 = vld [vmem:[%s1 + $0xc] sm:$0xf]
    %v99 = vld [vmem:[%s1 + $0x10] sm:$0xf]
    %v100 = vld [vmem:[%s1 + $0x14] sm:$0xf]
    %v101 = vld [vmem:[%s1 + $0x18] sm:$0xf]
    %v102 = vld [vmem:[%s1 + $0x1c] sm:$0xf]
    %v103 = vld [vmem:[%s1 + $0x20] sm:$0xf]
    %v104 = vld [vmem:[%s1 + $0x24] sm:$0xf]
    %v105 = vld [vmem:[%s1 + $0x28] sm:$0xf]
    %v106 = vld [vmem:[%s1 + $0x2c] sm:$0xf]
    %v107 = vld [vmem:[%s1 + $0x30] sm:$0xf]
    %v108 = vld [vmem:[%s1 + $0x34] sm:$0xf]
    %v109 = vld [vmem:[%s1 + $0x38] sm:$0xf]
    %v110 = vld [vmem:[%s1 + $0x3c] sm:$0xf]
    %v111 = vld [vmem:[%s1 + $0x40] sm:$0xf]
    %v112 = vld [vmem:[%s1 + $0x44] sm:$0xf]
    %v113 = vld [vmem:[%s1 + $0x48] sm:$0xf]
    %v114 = vld [vmem:[%s1 + $0x4c] sm:$0xf]
    %v115 = vld [vmem:[%s1 + $0x50] sm:$0xf]
    %v116 = vld [vmem:[%s1 + $0x54] sm:$0xf]
    %v117 = vld [vmem:[%s1 + $0x58] sm:$0xf]
    %v118 = vld [vmem:[%s1 + $0x5c] sm:$0xf]
    %v119 = vld [vmem:[%s1 + $0x60] sm:$0xf]
    %v120 = vld [vmem:[%s1 + $0x64] sm:$0xf]
    %v121 = vld [vmem:[%s1 + $0x68] sm:$0xf]
    %v122 = vld [vmem:[%s1 + $0x6c] sm:$0xf]
    %v123 = vld [vmem:[%s1 + $0x70] sm:$0xf]
    %v124 = vld [vmem:[%s1 + $0x74] sm:$0xf]
    %v125 = vld [vmem:[%s1 + $0x78] sm:$0xf]
    %v126 = vld [vmem:[%s1 + $0x7c] sm:$0xf]
    %v127 = vld [vmem:[%s1 + $0x80] sm:$0xf]
    %v128 = vld [vmem:[%s1 + $0x84] sm:$0xf]
    %v129 = vld [vmem:[%s1 + $0x88] sm:$0xf]
    %v130 = vld [vmem:[%s1 + $0x8c] sm:$0xf]
    %v131 = vld [vmem:[%s1 + $0x90] sm:$0xf]
    %v132 = vld [vmem:[%s1 + $0x94] sm:$0xf]
    %v133 = vld [vmem:[%s1 + $0x98] sm:$0xf]
    %v134 = vld [vmem:[%s1 + $0x9c] sm:$0xf]
    %v135 = vld [vmem:[%s1 + $0xa0] sm:$0xf]
    %v136 = vld [vmem:[%s1 + $0xa4] sm:$0xf]
    %v137 = vld [vmem:[%s1 + $0xa8] sm:$0xf]
    %v138 = vld [vmem:[%s1 + $0xac] sm:$0xf]
    %v139 = vld [vmem:[%s1 + $0xb0] sm:$0xf]
    %v140 = vld [vmem:[%s1 + $0xb4] sm:$0xf]
    %v141 = vld [vmem:[%s1 + $0xb8] sm:$0xf]
    %v142 = vld [vmem:[%s1 + $0xbc] sm:$0xf]
    %v143 = vld [vmem:[%s1 + $0xc0] sm:$0xf]
    %v144 = vld [vmem:[%s1 + $0xc4] sm:$0xf]
    %v145 = vld [vmem:[%s1 + $0xc8] sm:$0xf]
    %v146 = vld [vmem:[%s1 + $0xcc] sm:$0xf]
    %v147 = vld [vmem:[%s1 + $0xd0] sm:$0xf]
    %v148 = vld [vmem:[%s1 + $0xd4] sm:$0xf]
    %v149 = vld [vmem:[%s1 + $0xd8] sm:$0xf]
    %v150 = vld [vmem:[%s1 + $0xdc] sm:$0xf]
    %v151 = vld [vmem:[%s1 + $0xe0] sm:$0xf]
    %v152 = vld [vmem:[%s1 + $0xe4] sm:$0xf]
    %v153 = vld [vmem:[%s1 + $0xe8] sm:$0xf]
    %v154 = vld [vmem:[%s1 + $0xec] sm:$0xf]
    %v155 = vld [vmem:[%s1 + $0xf0] sm:$0xf]
    %v156 = vld [vmem:[%s1 + $0xf4] sm:$0xf]
    %v157 = vld [vmem:[%s1 + $0xf8] sm:$0xf]
    %v158 = vld [vmem:[%s1 + $0xfc] sm:$0xf]
    %v159 = vld [vmem:[%s1 + $0x100] sm:$0xf]
    %v160 = vld [vmem:[%s1 + $0x104] sm:$0xf]
    %v161 = vld [vmem:[%s1 + $0x108] sm:$0xf]
    %v162 = vld [vmem:[%s1 + $0x10c] sm:$0xf]
    %v163 = vld [vmem:[%s1 + $0x110] sm:$0xf]
    %v164 = vld [vmem:[%s1 + $0x114] sm:$0xf]
    %v165 = vld [vmem:[%s1 + $0x118] sm:$0xf]
    %v166 = vld [vmem:[%s1 + $0x11c] sm:$0xf]
    %v167 = vld [vmem:[%s1 + $0x120] sm:$0xf]
    %v168 = vld [vmem:[%s1 + $0x124] sm:$0xf]
    %v169 = vld [vmem:[%s1 + $0x128] sm:$0xf]
    %v170 = vld [vmem:[%s1 + $0x12c] sm:$0xf]
    %v171 = vld [vmem:[%s1 + $0x130] sm:$0xf]
    %v172 = vld [vmem:[%s1 + $0x134] sm:$0xf]
    %v173 = vld [vmem:[%s1 + $0x138] sm:$0xf]
    %v174 = vld [vmem:[%s1 + $0x13c] sm:$0xf]
    %v175 = vld [vmem:[%s2] sm:$0xff]
    %v176 = vld [vmem:[%s2 + $0x8] sm:$0x3]
    %v183 = vunpack.c.l.b16 %v89
    %v184 = vunpack.c.h.b16 %v89
    %v185 = vunpack.c.l.b16 %v90
    %v186 = vunpack.c.h.b16 %v90
    %v187 = vunpack.c.l.b16 %v91
    %v188 = vunpack.c.l.b16 %v92
    %v189 = vunpack.c.h.b16 %v92
    %v190 = vunpack.c.l.b16 %v93
    %v191 = vunpack.c.h.b16 %v93
    %v192 = vunpack.c.l.b16 %v94
    %v193 = vpack.c.b16 %v188, %v183
    %v194 = vpack.c.b16 %v189, %v184
    %v195 = vpack.c.b16 %v190, %v185
    %v196 = vpack.c.b16 %v191, %v186
    %v197 = vpack.c.b16 %v192, %v187
    %v283 = vunpack.c.l.b16 %v95
    %v284 = vunpack.c.l.b16 %v96
    %v285 = vunpack.c.l.b16 %v97
    %v286 = vunpack.c.l.b16 %v98
    %v287 = vunpack.c.l.b16 %v99
    %v288 = vunpack.c.l.b16 %v100
    %v289 = vunpack.c.l.b16 %v101
    %v290 = vunpack.c.l.b16 %v102
    %v291 = vunpack.c.l.b16 %v103
    %v292 = vunpack.c.l.b16 %v104
    %v293 = vunpack.c.l.b16 %v105
    %v294 = vunpack.c.l.b16 %v106
    %v295 = vunpack.c.l.b16 %v107
    %v296 = vunpack.c.l.b16 %v108
    %v297 = vunpack.c.l.b16 %v109
    %v298 = vunpack.c.l.b16 %v110
    %v299 = vunpack.c.l.b16 %v111
    %v300 = vunpack.c.l.b16 %v112
    %v301 = vunpack.c.l.b16 %v113
    %v302 = vunpack.c.l.b16 %v114
    %v303 = vunpack.c.l.b16 %v115
    %v304 = vunpack.c.l.b16 %v116
    %v305 = vunpack.c.l.b16 %v117
    %v306 = vunpack.c.l.b16 %v118
    %v307 = vunpack.c.l.b16 %v119
    %v308 = vunpack.c.l.b16 %v120
    %v309 = vunpack.c.l.b16 %v121
    %v310 = vunpack.c.l.b16 %v122
    %v311 = vunpack.c.l.b16 %v123
    %v312 = vunpack.c.l.b16 %v124
    %v313 = vunpack.c.l.b16 %v125
    %v314 = vunpack.c.l.b16 %v126
    %v315 = vunpack.c.l.b16 %v127
    %v316 = vunpack.c.l.b16 %v128
    %v317 = vunpack.c.l.b16 %v129
    %v318 = vunpack.c.l.b16 %v130
    %v319 = vunpack.c.l.b16 %v131
    %v320 = vunpack.c.l.b16 %v132
    %v321 = vunpack.c.l.b16 %v133
    %v322 = vunpack.c.l.b16 %v134
    %v323 = vunpack.c.l.b16 %v135
    %v324 = vunpack.c.l.b16 %v136
    %v325 = vunpack.c.l.b16 %v137
    %v326 = vunpack.c.l.b16 %v138
    %v327 = vunpack.c.l.b16 %v139
    %v328 = vunpack.c.l.b16 %v140
    %v329 = vunpack.c.l.b16 %v141
    %v330 = vunpack.c.l.b16 %v142
    %v331 = vunpack.c.l.b16 %v143
    %v332 = vunpack.c.l.b16 %v144
    %v333 = vunpack.c.l.b16 %v145
    %v334 = vunpack.c.l.b16 %v146
    %v335 = vunpack.c.l.b16 %v147
    %v336 = vunpack.c.l.b16 %v148
    %v337 = vunpack.c.l.b16 %v149
    %v338 = vunpack.c.l.b16 %v150
    %v339 = vunpack.c.l.b16 %v151
    %v340 = vunpack.c.l.b16 %v152
    %v341 = vunpack.c.l.b16 %v153
    %v342 = vunpack.c.l.b16 %v154
    %v343 = vunpack.c.l.b16 %v155
    %v344 = vunpack.c.l.b16 %v156
    %v345 = vunpack.c.l.b16 %v157
    %v346 = vunpack.c.l.b16 %v158
    %v347 = vunpack.c.l.b16 %v159
    %v348 = vunpack.c.l.b16 %v160
    %v349 = vunpack.c.l.b16 %v161
    %v350 = vunpack.c.l.b16 %v162
    %v351 = vunpack.c.l.b16 %v163
    %v352 = vunpack.c.l.b16 %v164
    %v353 = vunpack.c.l.b16 %v165
    %v354 = vunpack.c.l.b16 %v166
    %v355 = vunpack.c.l.b16 %v167
    %v356 = vunpack.c.l.b16 %v168
    %v357 = vunpack.c.l.b16 %v169
    %v358 = vunpack.c.l.b16 %v170
    %v359 = vunpack.c.l.b16 %v171
    %v360 = vunpack.c.l.b16 %v172
    %v361 = vunpack.c.l.b16 %v173
    %v362 = vunpack.c.l.b16 %v174
    %v363 = vpack.c.b16 %v284, %v283
    %v364 = vpack.c.b16 %v286, %v285
    %v365 = vpack.c.b16 %v288, %v287
    %v366 = vpack.c.b16 %v290, %v289
    %v367 = vpack.c.b16 %v292, %v291
    %v368 = vpack.c.b16 %v294, %v293
    %v369 = vpack.c.b16 %v296, %v295
    %v370 = vpack.c.b16 %v298, %v297
    %v371 = vpack.c.b16 %v300, %v299
    %v372 = vpack.c.b16 %v302, %v301
    %v373 = vpack.c.b16 %v304, %v303
    %v374 = vpack.c.b16 %v306, %v305
    %v375 = vpack.c.b16 %v308, %v307
    %v376 = vpack.c.b16 %v310, %v309
    %v377 = vpack.c.b16 %v312, %v311
    %v378 = vpack.c.b16 %v314, %v313
    %v379 = vpack.c.b16 %v316, %v315
    %v380 = vpack.c.b16 %v318, %v317
    %v381 = vpack.c.b16 %v320, %v319
    %v382 = vpack.c.b16 %v322, %v321
    %v383 = vpack.c.b16 %v324, %v323
    %v384 = vpack.c.b16 %v326, %v325
    %v385 = vpack.c.b16 %v328, %v327
    %v386 = vpack.c.b16 %v330, %v329
    %v387 = vpack.c.b16 %v332, %v331
    %v388 = vpack.c.b16 %v334, %v333
    %v389 = vpack.c.b16 %v336, %v335
    %v390 = vpack.c.b16 %v338, %v337
    %v391 = vpack.c.b16 %v340, %v339
    %v392 = vpack.c.b16 %v342, %v341
    %v393 = vpack.c.b16 %v344, %v343
    %v394 = vpack.c.b16 %v346, %v345
    %v395 = vpack.c.b16 %v348, %v347
    %v396 = vpack.c.b16 %v350, %v349
    %v397 = vpack.c.b16 %v352, %v351
    %v398 = vpack.c.b16 %v354, %v353
    %v399 = vpack.c.b16 %v356, %v355
    %v400 = vpack.c.b16 %v358, %v357
    %v401 = vpack.c.b16 %v360, %v359
    %v402 = vpack.c.b16 %v362, %v361
    %443 = vmatpush.bf16.msra.mxu0 %v370
    %444 = vmatpush.bf16.msra.mxu0 %v369
    %445 = vmatpush.bf16.msra.mxu0 %v368
    %446 = vmatpush.bf16.msra.mxu0 %v367
    %447 = vmatpush.bf16.msra.mxu0 %v366
    %448 = vmatpush.bf16.msra.mxu0 %v365
    %449 = vmatpush.bf16.msra.mxu0 %v364
    %450 = vmatpush.bf16.msra.mxu0 %v363
    %451 = vmatmul.bf16.gmra.mxu0 %v193
    %v452 = vpop.f32.mrf.mxu0
    %v453 = vadd.f32 %v175, %v452
    %v454 = vpop.f32.mrf.mxu0
    %v455 = vadd.f32 %v176, %v454
    %456 = vdwg.mxu0
    %457 = vmatpush.bf16.msra.mxu0 %v378
    %458 = vmatpush.bf16.msra.mxu0 %v377
    %459 = vmatpush.bf16.msra.mxu0 %v376
    %460 = vmatpush.bf16.msra.mxu0 %v375
    %461 = vmatpush.bf16.msra.mxu0 %v374
    %462 = vmatpush.bf16.msra.mxu0 %v373
    %463 = vmatpush.bf16.msra.mxu0 %v372
    %464 = vmatpush.bf16.msra.mxu0 %v371
    %465 = vmatmul.bf16.gmra.mxu0 %v194
    %v466 = vpop.f32.mrf.mxu0
    %v467 = vadd.f32 %v453, %v466
    %v468 = vpop.f32.mrf.mxu0
    %v469 = vadd.f32 %v455, %v468
    %470 = vdwg.mxu0
    %471 = vmatpush.bf16.msra.mxu0 %v386
    %472 = vmatpush.bf16.msra.mxu0 %v385
    %473 = vmatpush.bf16.msra.mxu0 %v384
    %474 = vmatpush.bf16.msra.mxu0 %v383
    %475 = vmatpush.bf16.msra.mxu0 %v382
    %476 = vmatpush.bf16.msra.mxu0 %v381
    %477 = vmatpush.bf16.msra.mxu0 %v380
    %478 = vmatpush.bf16.msra.mxu0 %v379
    %479 = vmatmul.bf16.gmra.mxu0 %v195
    %v480 = vpop.f32.mrf.mxu0
    %v481 = vadd.f32 %v467, %v480
    %v482 = vpop.f32.mrf.mxu0
    %v483 = vadd.f32 %v469, %v482
    %484 = vdwg.mxu0
    %485 = vmatpush.bf16.msra.mxu0 %v394
    %486 = vmatpush.bf16.msra.mxu0 %v393
    %487 = vmatpush.bf16.msra.mxu0 %v392
    %488 = vmatpush.bf16.msra.mxu0 %v391
    %489 = vmatpush.bf16.msra.mxu0 %v390
    %490 = vmatpush.bf16.msra.mxu0 %v389
    %491 = vmatpush.bf16.msra.mxu0 %v388
    %492 = vmatpush.bf16.msra.mxu0 %v387
    %493 = vmatmul.bf16.gmra.mxu0 %v196
    %v494 = vpop.f32.mrf.mxu0
    %v495 = vadd.f32 %v481, %v494
    %v496 = vpop.f32.mrf.mxu0
    %v497 = vadd.f32 %v483, %v496
    %498 = vdwg.mxu0
    %499 = vmatpush.bf16.msra.mxu0 %v402
    %500 = vmatpush.bf16.msra.mxu0 %v401
    %501 = vmatpush.bf16.msra.mxu0 %v400
    %502 = vmatpush.bf16.msra.mxu0 %v399
    %503 = vmatpush.bf16.msra.mxu0 %v398
    %504 = vmatpush.bf16.msra.mxu0 %v397
    %505 = vmatpush.bf16.msra.mxu0 %v396
    %506 = vmatpush.bf16.msra.mxu0 %v395
    %507 = vmatmul.bf16.gmra.mxu0 %v197
    %v508 = vpop.f32.mrf.mxu0
    %v509 = vadd.f32 %v495, %v508
    %v510 = vpop.f32.mrf.mxu0
    %v511 = vadd.f32 %v497, %v510
    %512 = vdwg.mxu0
    %v513 = vld [vmem:[%s3] sm:$0xff]
    %v514 = vld [vmem:[%s3 + $0x8] sm:$0x3]
    %v515 = vld [vmem:[%s4] sm:$0xff]
    %516 = vadd.xlane.f32.xlu0 %v509
    %v517 = vpop.xlane.xlu0 %516
    %vm518 = vcmask 1041408
    %v519 = vsel %vm518, %v511, 0.0
    %520 = vadd.xlane.f32.xlu0 %v519
    %v521 = vpop.xlane.xlu0 %520
    %v522 = vrcp.pop 128.0
    %v523 = vmul.f32 128.0, %v522
    %v524 = vsub.f32 1.0, %v523
    %v525 = vmul.f32 %v522, %v524
    %v526 = vadd.f32 %v522, %v525
    %vm527 = vweird.f32 %v522
    %v528 = vsel %vm527, %v522, %v526
    %v529 = vmul.f32 %v517, %v528
    %v530 = vmul.f32 %v521, %v528
    %v531 = vmul.f32 %v509, %v509
    %v532 = vmul.f32 %v511, %v511
    %533 = vadd.xlane.f32.xlu0 %v531
    %v534 = vpop.xlane.xlu0 %533
    %v535 = vsel %vm518, %v532, 0.0
    %536 = vadd.xlane.f32.xlu0 %v535
    %v537 = vpop.xlane.xlu0 %536
    %v538 = vmul.f32 %v534, %v528
    %v539 = vmul.f32 %v537, %v528
    %v540 = vmul.f32 %v529, %v529
    %v541 = vmul.f32 %v530, %v530
    %v542 = vsub.f32 %v538, %v540
    %v543 = vsub.f32 %v539, %v541
    %v544 = vsub.f32 %v509, %v529
    %v545 = vsub.f32 %v511, %v530
    %v546 = vadd.f32 %v542, 1e-06
    %v547 = vadd.f32 %v543, 1e-06
    %v548 = vrsqrt.pop %v546
    %v549 = vmul.f32 %v548, %v546
    %v550 = vmul.f32 %v549, %v548
    %v551 = vmul.f32 0.5, %v550
    %v552 = vsub.f32 1.5, %v551
    %v553 = vmul.f32 %v548, %v552
    %vm554 = vweird.f32 %v546
    %vm555 = vweird.f32 %v548
    %vm556 = vmor %vm554, %vm555
    %v557 = vsel %vm556, %v548, %v553
    %v558 = vrsqrt.pop %v547
    %v559 = vmul.f32 %v558, %v547
    %v560 = vmul.f32 %v559, %v558
    %v561 = vmul.f32 0.5, %v560
    %v562 = vsub.f32 1.5, %v561
    %v563 = vmul.f32 %v558, %v562
    %vm564 = vweird.f32 %v547
    %vm565 = vweird.f32 %v558
    %vm566 = vmor %vm564, %vm565
    %v567 = vsel %vm566, %v558, %v563
    %v568 = vmul.f32 %v544, %v557
    %v569 = vmul.f32 %v545, %v567
    %v570 = vperm.slane %v515, 0
    %v571 = vmul.f32 %v568, %v570
    %v572 = vmul.f32 %v569, %v570
    %v573 = vperm.slane %v515, 1
    %v574 = vadd.f32 %v571, %v573
    %v575 = vadd.f32 %v572, %v573
    %v576 = vpack.c.bf16 %v575, %v574
    %v577 = vld [vmem:[%s5] sm:$0xff]
    %v578 = vld [vmem:[%s5 + $0x8] sm:$0xff]
    %v579 = vld [vmem:[%s5 + $0x10] sm:$0xff]
    %v580 = vld [vmem:[%s5 + $0x18] sm:$0xff]
    %v581 = vld [vmem:[%s5 + $0x20] sm:$0xff]
    %v582 = vld [vmem:[%s5 + $0x28] sm:$0xff]
    %v583 = vld [vmem:[%s5 + $0x30] sm:$0xff]
    %v584 = vld [vmem:[%s5 + $0x38] sm:$0xff]
    %v585 = vld [vmem:[%s5 + $0x40] sm:$0xff]
    %v586 = vld [vmem:[%s5 + $0x48] sm:$0xff]
    %v587 = vld [vmem:[%s5 + $0x50] sm:$0xff]
    %v588 = vld [vmem:[%s5 + $0x58] sm:$0xff]
    %v589 = vld [vmem:[%s5 + $0x60] sm:$0xff]
    %v590 = vld [vmem:[%s5 + $0x68] sm:$0xff]
    %v591 = vld [vmem:[%s5 + $0x70] sm:$0xff]
    %v592 = vld [vmem:[%s5 + $0x78] sm:$0xff]
    %v593 = vld [vmem:[%s5 + $0x80] sm:$0xff]
    %v594 = vld [vmem:[%s5 + $0x88] sm:$0xff]
    %v595 = vld [vmem:[%s5 + $0x90] sm:$0xff]
    %v596 = vld [vmem:[%s5 + $0x98] sm:$0xff]
    %v597 = vld [vmem:[%s5 + $0xa0] sm:$0xff]
    %v598 = vld [vmem:[%s5 + $0xa8] sm:$0xff]
    %v599 = vld [vmem:[%s5 + $0xb0] sm:$0xff]
    %v600 = vld [vmem:[%s5 + $0xb8] sm:$0xff]
    %v601 = vld [vmem:[%s5 + $0xc0] sm:$0xff]
    %v602 = vld [vmem:[%s5 + $0xc8] sm:$0xff]
    %v603 = vld [vmem:[%s5 + $0xd0] sm:$0xff]
    %v604 = vld [vmem:[%s5 + $0xd8] sm:$0xff]
    %v605 = vld [vmem:[%s5 + $0xe0] sm:$0xff]
    %v606 = vld [vmem:[%s5 + $0xe8] sm:$0xff]
    %v607 = vld [vmem:[%s5 + $0xf0] sm:$0xff]
    %v608 = vld [vmem:[%s5 + $0xf8] sm:$0xff]
    %v609 = vld [vmem:[%s5 + $0x100] sm:$0xff]
    %v610 = vld [vmem:[%s5 + $0x108] sm:$0xff]
    %v611 = vld [vmem:[%s5 + $0x110] sm:$0xff]
    %v612 = vld [vmem:[%s5 + $0x118] sm:$0xff]
    %v613 = vld [vmem:[%s5 + $0x120] sm:$0xff]
    %v614 = vld [vmem:[%s5 + $0x128] sm:$0xff]
    %v615 = vld [vmem:[%s5 + $0x130] sm:$0xff]
    %v616 = vld [vmem:[%s5 + $0x138] sm:$0xff]
    %v617 = vld [vmem:[%s5 + $0x140] sm:$0xff]
    %v618 = vld [vmem:[%s5 + $0x148] sm:$0xff]
    %v619 = vld [vmem:[%s5 + $0x150] sm:$0xff]
    %v620 = vld [vmem:[%s5 + $0x158] sm:$0xff]
    %v621 = vld [vmem:[%s5 + $0x160] sm:$0xff]
    %v622 = vld [vmem:[%s5 + $0x168] sm:$0xff]
    %v623 = vld [vmem:[%s5 + $0x170] sm:$0xff]
    %v624 = vld [vmem:[%s5 + $0x178] sm:$0xff]
    %v625 = vld [vmem:[%s6] sm:$0x3f]
    %v627 = vperm.slane %v625, 0
    %v628 = vperm.slane %v625, 1
    %v629 = vperm.slane %v625, 2
    %v630 = vperm.slane %v625, 3
    %v631 = vperm.slane %v625, 4
    %v632 = vperm.slane %v625, 5
    %v687 = vunpack.c.l.b16 %v577
    %v688 = vunpack.c.h.b16 %v577
    %v689 = vunpack.c.l.b16 %v578
    %v690 = vunpack.c.h.b16 %v578
    %v691 = vunpack.c.l.b16 %v579
    %v692 = vunpack.c.h.b16 %v579
    %v693 = vunpack.c.l.b16 %v580
    %v694 = vunpack.c.h.b16 %v580
    %v695 = vunpack.c.l.b16 %v581
    %v696 = vunpack.c.h.b16 %v581
    %v697 = vunpack.c.l.b16 %v582
    %v698 = vunpack.c.h.b16 %v582
    %v699 = vunpack.c.l.b16 %v583
    %v700 = vunpack.c.h.b16 %v583
    %v701 = vunpack.c.l.b16 %v584
    %v702 = vunpack.c.h.b16 %v584
    %v703 = vunpack.c.l.b16 %v585
    %v704 = vunpack.c.h.b16 %v585
    %v705 = vunpack.c.l.b16 %v586
    %v706 = vunpack.c.h.b16 %v586
    %v707 = vunpack.c.l.b16 %v587
    %v708 = vunpack.c.h.b16 %v587
    %v709 = vunpack.c.l.b16 %v588
    %v710 = vunpack.c.h.b16 %v588
    %v711 = vunpack.c.l.b16 %v589
    %v712 = vunpack.c.h.b16 %v589
    %v713 = vunpack.c.l.b16 %v590
    %v714 = vunpack.c.h.b16 %v590
    %v715 = vunpack.c.l.b16 %v591
    %v716 = vunpack.c.h.b16 %v591
    %v717 = vunpack.c.l.b16 %v592
    %v718 = vunpack.c.h.b16 %v592
    %v719 = vunpack.c.l.b16 %v593
    %v720 = vunpack.c.h.b16 %v593
    %v721 = vunpack.c.l.b16 %v594
    %v722 = vunpack.c.h.b16 %v594
    %v723 = vunpack.c.l.b16 %v595
    %v724 = vunpack.c.h.b16 %v595
    %v725 = vunpack.c.l.b16 %v596
    %v726 = vunpack.c.h.b16 %v596
    %v727 = vunpack.c.l.b16 %v597
    %v728 = vunpack.c.h.b16 %v597
    %v729 = vunpack.c.l.b16 %v598
    %v730 = vunpack.c.h.b16 %v598
    %v731 = vunpack.c.l.b16 %v599
    %v732 = vunpack.c.h.b16 %v599
    %v733 = vunpack.c.l.b16 %v600
    %v734 = vunpack.c.h.b16 %v600
    %v735 = vunpack.c.l.b16 %v601
    %v736 = vunpack.c.h.b16 %v601
    %v737 = vunpack.c.l.b16 %v602
    %v738 = vunpack.c.h.b16 %v602
    %v739 = vunpack.c.l.b16 %v603
    %v740 = vunpack.c.h.b16 %v603
    %v741 = vunpack.c.l.b16 %v604
    %v742 = vunpack.c.h.b16 %v604
    %v743 = vunpack.c.l.b16 %v605
    %v744 = vunpack.c.h.b16 %v605
    %v745 = vunpack.c.l.b16 %v606
    %v746 = vunpack.c.h.b16 %v606
    %v747 = vunpack.c.l.b16 %v607
    %v748 = vunpack.c.h.b16 %v607
    %v749 = vunpack.c.l.b16 %v608
    %v750 = vunpack.c.h.b16 %v608
    %v751 = vunpack.c.l.b16 %v609
    %v752 = vunpack.c.h.b16 %v609
    %v753 = vunpack.c.l.b16 %v610
    %v754 = vunpack.c.h.b16 %v610
    %v755 = vunpack.c.l.b16 %v611
    %v756 = vunpack.c.h.b16 %v611
    %v757 = vunpack.c.l.b16 %v612
    %v758 = vunpack.c.h.b16 %v612
    %v759 = vunpack.c.l.b16 %v613
    %v760 = vunpack.c.h.b16 %v613
    %v761 = vunpack.c.l.b16 %v614
    %v762 = vunpack.c.h.b16 %v614
    %v763 = vunpack.c.l.b16 %v615
    %v764 = vunpack.c.h.b16 %v615
    %v765 = vunpack.c.l.b16 %v616
    %v766 = vunpack.c.h.b16 %v616
    %v767 = vunpack.c.l.b16 %v617
    %v768 = vunpack.c.h.b16 %v617
    %v769 = vunpack.c.l.b16 %v618
    %v770 = vunpack.c.h.b16 %v618
    %v771 = vunpack.c.l.b16 %v619
    %v772 = vunpack.c.h.b16 %v619
    %v773 = vunpack.c.l.b16 %v620
    %v774 = vunpack.c.h.b16 %v620
    %v775 = vunpack.c.l.b16 %v621
    %v776 = vunpack.c.h.b16 %v621
    %v777 = vunpack.c.l.b16 %v622
    %v778 = vunpack.c.h.b16 %v622
    %v779 = vunpack.c.l.b16 %v623
    %v780 = vunpack.c.h.b16 %v623
    %v781 = vunpack.c.l.b16 %v624
    %v782 = vunpack.c.h.b16 %v624
    %v783 = vpack.c.b16 %v693, %v687
    %v784 = vpack.c.b16 %v694, %v688
    %v785 = vpack.c.b16 %v695, %v689
    %v786 = vpack.c.b16 %v696, %v690
    %v787 = vpack.c.b16 %v697, %v691
    %v788 = vpack.c.b16 %v698, %v692
    %v789 = vpack.c.b16 %v705, %v699
    %v790 = vpack.c.b16 %v706, %v700
    %v791 = vpack.c.b16 %v707, %v701
    %v792 = vpack.c.b16 %v708, %v702
    %v793 = vpack.c.b16 %v709, %v703
    %v794 = vpack.c.b16 %v710, %v704
    %v795 = vpack.c.b16 %v717, %v711
    %v796 = vpack.c.b16 %v718, %v712
    %v797 = vpack.c.b16 %v719, %v713
    %v798 = vpack.c.b16 %v720, %v714
    %v799 = vpack.c.b16 %v721, %v715
    %v800 = vpack.c.b16 %v722, %v716
    %v801 = vpack.c.b16 %v729, %v723
    %v802 = vpack.c.b16 %v730, %v724
    %v803 = vpack.c.b16 %v731, %v725
    %v804 = vpack.c.b16 %v732, %v726
    %v805 = vpack.c.b16 %v733, %v727
    %v806 = vpack.c.b16 %v734, %v728
    %v807 = vpack.c.b16 %v741, %v735
    %v808 = vpack.c.b16 %v742, %v736
    %v809 = vpack.c.b16 %v743, %v737
    %v810 = vpack.c.b16 %v744, %v738
    %v811 = vpack.c.b16 %v745, %v739
    %v812 = vpack.c.b16 %v746, %v740
    %v813 = vpack.c.b16 %v753, %v747
    %v814 = vpack.c.b16 %v754, %v748
    %v815 = vpack.c.b16 %v755, %v749
    %v816 = vpack.c.b16 %v756, %v750
    %v817 = vpack.c.b16 %v757, %v751
    %v818 = vpack.c.b16 %v758, %v752
    %v819 = vpack.c.b16 %v765, %v759
    %v820 = vpack.c.b16 %v766, %v760
    %v821 = vpack.c.b16 %v767, %v761
    %v822 = vpack.c.b16 %v768, %v762
    %v823 = vpack.c.b16 %v769, %v763
    %v824 = vpack.c.b16 %v770, %v764
    %v825 = vpack.c.b16 %v777, %v771
    %v826 = vpack.c.b16 %v778, %v772
    %v827 = vpack.c.b16 %v779, %v773
    %v828 = vpack.c.b16 %v780, %v774
    %v829 = vpack.c.b16 %v781, %v775
    %v830 = vpack.c.b16 %v782, %v776
    %879 = vmatpush.bf16.msra.mxu0 %v825
    %880 = vmatpush.bf16.msra.mxu0 %v819
    %881 = vmatpush.bf16.msra.mxu0 %v813
    %882 = vmatpush.bf16.msra.mxu0 %v807
    %883 = vmatpush.bf16.msra.mxu0 %v801
    %884 = vmatpush.bf16.msra.mxu0 %v795
    %885 = vmatpush.bf16.msra.mxu0 %v789
    %886 = vmatpush.bf16.msra.mxu0 %v783
    %887 = vmatmul.bf16.gmra.mxu0 %v576
    %v888 = vpop.f32.mrf.mxu0
    %v889 = vadd.f32 %v627, %v888
    %v890 = vpop.f32.mrf.mxu0
    %v891 = vadd.f32 %v627, %v890
    %892 = vdwg.mxu0
    %893 = vmatpush.bf16.msra.mxu0 %v826
    %894 = vmatpush.bf16.msra.mxu0 %v820
    %895 = vmatpush.bf16.msra.mxu0 %v814
    %896 = vmatpush.bf16.msra.mxu0 %v808
    %897 = vmatpush.bf16.msra.mxu0 %v802
    %898 = vmatpush.bf16.msra.mxu0 %v796
    %899 = vmatpush.bf16.msra.mxu0 %v790
    %900 = vmatpush.bf16.msra.mxu0 %v784
    %901 = vmatmul.bf16.gmra.mxu0 %v576
    %v902 = vpop.f32.mrf.mxu0
    %v903 = vadd.f32 %v628, %v902
    %v904 = vpop.f32.mrf.mxu0
    %v905 = vadd.f32 %v628, %v904
    %906 = vdwg.mxu0
    %907 = vmatpush.bf16.msra.mxu0 %v827
    %908 = vmatpush.bf16.msra.mxu0 %v821
    %909 = vmatpush.bf16.msra.mxu0 %v815
    %910 = vmatpush.bf16.msra.mxu0 %v809
    %911 = vmatpush.bf16.msra.mxu0 %v803
    %912 = vmatpush.bf16.msra.mxu0 %v797
    %913 = vmatpush.bf16.msra.mxu0 %v791
    %914 = vmatpush.bf16.msra.mxu0 %v785
    %915 = vmatmul.bf16.gmra.mxu0 %v576
    %v916 = vpop.f32.mrf.mxu0
    %v917 = vadd.f32 %v629, %v916
    %v918 = vpop.f32.mrf.mxu0
    %v919 = vadd.f32 %v629, %v918
    %920 = vdwg.mxu0
    %921 = vmatpush.bf16.msra.mxu0 %v828
    %922 = vmatpush.bf16.msra.mxu0 %v822
    %923 = vmatpush.bf16.msra.mxu0 %v816
    %924 = vmatpush.bf16.msra.mxu0 %v810
    %925 = vmatpush.bf16.msra.mxu0 %v804
    %926 = vmatpush.bf16.msra.mxu0 %v798
    %927 = vmatpush.bf16.msra.mxu0 %v792
    %928 = vmatpush.bf16.msra.mxu0 %v786
    %929 = vmatmul.bf16.gmra.mxu0 %v576
    %v930 = vpop.f32.mrf.mxu0
    %v931 = vadd.f32 %v630, %v930
    %v932 = vpop.f32.mrf.mxu0
    %v933 = vadd.f32 %v630, %v932
    %934 = vdwg.mxu0
    %935 = vmatpush.bf16.msra.mxu0 %v829
    %936 = vmatpush.bf16.msra.mxu0 %v823
    %937 = vmatpush.bf16.msra.mxu0 %v817
    %938 = vmatpush.bf16.msra.mxu0 %v811
    %939 = vmatpush.bf16.msra.mxu0 %v805
    %940 = vmatpush.bf16.msra.mxu0 %v799
    %941 = vmatpush.bf16.msra.mxu0 %v793
    %942 = vmatpush.bf16.msra.mxu0 %v787
    %943 = vmatmul.bf16.gmra.mxu0 %v576
    %v944 = vpop.f32.mrf.mxu0
    %v945 = vadd.f32 %v631, %v944
    %v946 = vpop.f32.mrf.mxu0
    %v947 = vadd.f32 %v631, %v946
    %948 = vdwg.mxu0
    %949 = vmatpush.bf16.msra.mxu0 %v830
    %950 = vmatpush.bf16.msra.mxu0 %v824
    %951 = vmatpush.bf16.msra.mxu0 %v818
    %952 = vmatpush.bf16.msra.mxu0 %v812
    %953 = vmatpush.bf16.msra.mxu0 %v806
    %954 = vmatpush.bf16.msra.mxu0 %v800
    %955 = vmatpush.bf16.msra.mxu0 %v794
    %956 = vmatpush.bf16.msra.mxu0 %v788
    %957 = vmatmul.bf16.gmra.mxu0 %v576
    %v958 = vpop.f32.mrf.mxu0
    %v959 = vadd.f32 %v632, %v958
    %v960 = vpop.f32.mrf.mxu0
    %v961 = vadd.f32 %v632, %v960
    %962 = vdwg.mxu0
    %963 = vmatpush.xpose.msra.mxu0 0.0
    %964 = vmatpush.xpose.msra.mxu0 0.0
    %965 = vmatpush.xpose.msra.mxu0 0.0
    %966 = vmatpush.xpose.msra.mxu0 0.0
    %967 = vmatpush.xpose.msra.mxu0 0.0
    %968 = vmatpush.xpose.msra.mxu0 0.0
    %969 = vmatpush.xpose.msra.mxu0 0.0
    %970 = vmatpush.xpose.msra.mxu0 0.0
    %971 = vmatpush.xpose.msra.mxu0 0.0
    %972 = vmatpush.xpose.msra.mxu0 0.0
    %973 = vmatpush.xpose.msra.mxu0 0.0
    %974 = vmatpush.xpose.msra.mxu0 0.0
    %975 = vmatpush.xpose.msra.mxu0 0.0
    %976 = vmatpush.xpose.msra.mxu0 0.0
    %977 = vmatpush.xpose.msra.mxu0 %v905
    %978 = vmatpush.xpose.msra.mxu0 %v903
    %979 = vmatmul.f32.gmra.mxu0 %v889
    %v980 = vpop.f32.mrf.mxu0
    %v981 = vadd.f32 %v513, %v980
    %982 = vmatmul.f32.gmra.mxu0 %v891
    %v983 = vpop.f32.mrf.mxu0
    %v984 = vadd.f32 %v514, %v983
    %985 = vdwg.mxu0
    %vm986 = vcmask 80896
    %v987 = vsel %vm986, %v981, -inf
    %988 = vmax.xlane.f32.xlu0 %v987
    %v989 = vpop.xlane.xlu0 %988
    %vm990 = vcmask 74752
    %v991 = vsel %vm990, %v984, -inf
    %992 = vmax.xlane.f32.xlu0 %v991
    %v993 = vpop.xlane.xlu0 %992
    %v994 = vsub.f32 %v981, %v989
    %v995 = vsub.f32 %v984, %v993
    %v996 = vmul.f32 %v994, 1.442695
    %v997 = vpow.pop %v996
    %v998 = vmul.f32 %v995, 1.442695
    %v999 = vpow.pop %v998
    %v1000 = vsel %vm986, %v997, 0.0
    %1001 = vadd.xlane.f32.xlu0 %v1000
    %v1002 = vpop.xlane.xlu0 %1001
    %v1003 = vsel %vm990, %v999, 0.0
    %1004 = vadd.xlane.f32.xlu0 %v1003
    %v1005 = vpop.xlane.xlu0 %1004
    %v1006 = vrcp.pop %v1002
    %v1007 = vrcp.pop %v1005
    %v1008 = vmul.f32 %v997, %v1006
    %v1009 = vmul.f32 %v999, %v1007
    %v1011 = vsel %vm986, %v1008, 0
    %v1014 = vsel %vm986, %v1009, 0
    %v1017 = vsel %vm518, %v919, 0
    %1019 = vmatpush.msra.mxu0 0.0
    %1020 = vmatpush.msra.mxu0 0.0
    %1021 = vmatpush.msra.mxu0 0.0
    %1022 = vmatpush.msra.mxu0 0.0
    %1023 = vmatpush.msra.mxu0 0.0
    %1024 = vmatpush.msra.mxu0 0.0
    %1025 = vmatpush.msra.mxu0 0.0
    %1026 = vmatpush.msra.mxu0 0.0
    %1027 = vmatpush.msra.mxu0 0.0
    %1028 = vmatpush.msra.mxu0 0.0
    %1029 = vmatpush.msra.mxu0 0.0
    %1030 = vmatpush.msra.mxu0 0.0
    %1031 = vmatpush.msra.mxu0 0.0
    %1032 = vmatpush.msra.mxu0 0.0
    %1033 = vmatpush.msra.mxu0 %v1017
    %1034 = vmatpush.msra.mxu0 %v917
    %1035 = vmatmul.f32.gmra.mxu0 %v1011
    %v1036 = vpop.f32.mrf.mxu0
    %v1037 = vadd.f32 0.0, %v1036
    %1038 = vmatmul.f32.gmra.mxu0 %v1014
    %v1039 = vpop.f32.mrf.mxu0
    %v1040 = vadd.f32 0.0, %v1039
    %1041 = vdwg.mxu0
    %1042 = vmatpush.xpose.msra.mxu0 0.0
    %1043 = vmatpush.xpose.msra.mxu0 0.0
    %1044 = vmatpush.xpose.msra.mxu0 0.0
    %1045 = vmatpush.xpose.msra.mxu0 0.0
    %1046 = vmatpush.xpose.msra.mxu0 0.0
    %1047 = vmatpush.xpose.msra.mxu0 0.0
    %1048 = vmatpush.xpose.msra.mxu0 0.0
    %1049 = vmatpush.xpose.msra.mxu0 0.0
    %1050 = vmatpush.xpose.msra.mxu0 0.0
    %1051 = vmatpush.xpose.msra.mxu0 0.0
    %1052 = vmatpush.xpose.msra.mxu0 0.0
    %1053 = vmatpush.xpose.msra.mxu0 0.0
    %1054 = vmatpush.xpose.msra.mxu0 0.0
    %1055 = vmatpush.xpose.msra.mxu0 0.0
    %1056 = vmatpush.xpose.msra.mxu0 %v947
    %1057 = vmatpush.xpose.msra.mxu0 %v945
    %1058 = vmatmul.f32.gmra.mxu0 %v931
    %v1059 = vpop.f32.mrf.mxu0
    %v1060 = vadd.f32 %v513, %v1059
    %1061 = vmatmul.f32.gmra.mxu0 %v933
    %v1062 = vpop.f32.mrf.mxu0
    %v1063 = vadd.f32 %v514, %v1062
    %1064 = vdwg.mxu0
    %v1065 = vsel %vm986, %v1060, -inf
    %1066 = vmax.xlane.f32.xlu0 %v1065
    %v1067 = vpop.xlane.xlu0 %1066
    %v1068 = vsel %vm990, %v1063, -inf
    %1069 = vmax.xlane.f32.xlu0 %v1068
    %v1070 = vpop.xlane.xlu0 %1069
    %v1071 = vsub.f32 %v1060, %v1067
    %v1072 = vsub.f32 %v1063, %v1070
    %v1073 = vmul.f32 %v1071, 1.442695
    %v1074 = vpow.pop %v1073
    %v1075 = vmul.f32 %v1072, 1.442695
    %v1076 = vpow.pop %v1075
    %v1077 = vsel %vm986, %v1074, 0.0
    %1078 = vadd.xlane.f32.xlu0 %v1077
    %v1079 = vpop.xlane.xlu0 %1078
    %v1080 = vsel %vm990, %v1076, 0.0
    %1081 = vadd.xlane.f32.xlu0 %v1080
    %v1082 = vpop.xlane.xlu0 %1081
    %v1083 = vrcp.pop %v1079
    %v1084 = vrcp.pop %v1082
    %v1085 = vmul.f32 %v1074, %v1083
    %v1086 = vmul.f32 %v1076, %v1084
    %v1088 = vsel %vm986, %v1085, 0
    %v1091 = vsel %vm986, %v1086, 0
    %v1094 = vsel %vm518, %v961, 0
    %1096 = vmatpush.msra.mxu0 0.0
    %1097 = vmatpush.msra.mxu0 0.0
    %1098 = vmatpush.msra.mxu0 0.0
    %1099 = vmatpush.msra.mxu0 0.0
    %1100 = vmatpush.msra.mxu0 0.0
    %1101 = vmatpush.msra.mxu0 0.0
    %1102 = vmatpush.msra.mxu0 0.0
    %1103 = vmatpush.msra.mxu0 0.0
    %1104 = vmatpush.msra.mxu0 0.0
    %1105 = vmatpush.msra.mxu0 0.0
    %1106 = vmatpush.msra.mxu0 0.0
    %1107 = vmatpush.msra.mxu0 0.0
    %1108 = vmatpush.msra.mxu0 0.0
    %1109 = vmatpush.msra.mxu0 0.0
    %1110 = vmatpush.msra.mxu0 %v1094
    %1111 = vmatpush.msra.mxu0 %v959
    %1112 = vmatmul.f32.gmra.mxu0 %v1088
    %v1113 = vpop.f32.mrf.mxu0
    %v1114 = vadd.f32 0.0, %v1113
    %1115 = vmatmul.f32.gmra.mxu0 %v1091
    %v1116 = vpop.f32.mrf.mxu0
    %v1117 = vadd.f32 0.0, %v1116
    %1118 = vdwg.mxu0
    %v1119 = vpack.c.bf16 %v1040, %v1037
    %v1120 = vpack.c.bf16 %v1117, %v1114
    %v1121 = vld [vmem:[#allocation2] sm:$0xf]
    %v1122 = vld [vmem:[#allocation2 + $0x4] sm:$0xf]
    %v1123 = vld [vmem:[#allocation2 + $0x8] sm:$0xf]
    %v1124 = vld [vmem:[#allocation2 + $0xc] sm:$0xf]
    %v1125 = vld [vmem:[#allocation2 + $0x10] sm:$0xf]
    %v1126 = vld [vmem:[#allocation2 + $0x14] sm:$0xf]
    %v1127 = vld [vmem:[#allocation2 + $0x18] sm:$0xf]
    %v1128 = vld [vmem:[#allocation2 + $0x1c] sm:$0xf]
    %v1129 = vld [vmem:[#allocation2 + $0x20] sm:$0xf]
    %v1130 = vld [vmem:[#allocation2 + $0x24] sm:$0xf]
    %v1131 = vld [vmem:[#allocation2 + $0x28] sm:$0xf]
    %v1132 = vld [vmem:[#allocation2 + $0x2c] sm:$0xf]
    %v1133 = vld [vmem:[#allocation2 + $0x30] sm:$0xf]
    %v1134 = vld [vmem:[#allocation2 + $0x34] sm:$0xf]
    %v1135 = vld [vmem:[#allocation2 + $0x38] sm:$0xf]
    %v1136 = vld [vmem:[#allocation2 + $0x3c] sm:$0xf]
    %v1137 = vld [vmem:[#allocation2 + $0x40] sm:$0xf]
    %v1138 = vld [vmem:[#allocation2 + $0x44] sm:$0xf]
    %v1139 = vld [vmem:[#allocation2 + $0x48] sm:$0xf]
    %v1140 = vld [vmem:[#allocation2 + $0x4c] sm:$0xf]
    %v1141 = vld [vmem:[#allocation2 + $0x50] sm:$0xf]
    %v1142 = vld [vmem:[#allocation2 + $0x54] sm:$0xf]
    %v1143 = vld [vmem:[#allocation2 + $0x58] sm:$0xf]
    %v1144 = vld [vmem:[#allocation2 + $0x5c] sm:$0xf]
    %v1145 = vld [vmem:[#allocation2 + $0x60] sm:$0xf]
    %v1146 = vld [vmem:[#allocation2 + $0x64] sm:$0xf]
    %v1147 = vld [vmem:[#allocation2 + $0x68] sm:$0xf]
    %v1148 = vld [vmem:[#allocation2 + $0x6c] sm:$0xf]
    %v1149 = vld [vmem:[#allocation2 + $0x70] sm:$0xf]
    %v1150 = vld [vmem:[#allocation2 + $0x74] sm:$0xf]
    %v1151 = vld [vmem:[#allocation2 + $0x78] sm:$0xf]
    %v1152 = vld [vmem:[#allocation2 + $0x7c] sm:$0xf]
    %v1153 = vperm.slane %v515, 2
    %v1186 = vunpack.c.l.b16 %v1121
    %v1187 = vunpack.c.l.b16 %v1122
    %v1188 = vunpack.c.l.b16 %v1123
    %v1189 = vunpack.c.l.b16 %v1124
    %v1190 = vunpack.c.l.b16 %v1125
    %v1191 = vunpack.c.l.b16 %v1126
    %v1192 = vunpack.c.l.b16 %v1127
    %v1193 = vunpack.c.l.b16 %v1128
    %v1194 = vunpack.c.l.b16 %v1129
    %v1195 = vunpack.c.l.b16 %v1130
    %v1196 = vunpack.c.l.b16 %v1131
    %v1197 = vunpack.c.l.b16 %v1132
    %v1198 = vunpack.c.l.b16 %v1133
    %v1199 = vunpack.c.l.b16 %v1134
    %v1200 = vunpack.c.l.b16 %v1135
    %v1201 = vunpack.c.l.b16 %v1136
    %v1202 = vunpack.c.l.b16 %v1137
    %v1203 = vunpack.c.l.b16 %v1138
    %v1204 = vunpack.c.l.b16 %v1139
    %v1205 = vunpack.c.l.b16 %v1140
    %v1206 = vunpack.c.l.b16 %v1141
    %v1207 = vunpack.c.l.b16 %v1142
    %v1208 = vunpack.c.l.b16 %v1143
    %v1209 = vunpack.c.l.b16 %v1144
    %v1210 = vunpack.c.l.b16 %v1145
    %v1211 = vunpack.c.l.b16 %v1146
    %v1212 = vunpack.c.l.b16 %v1147
    %v1213 = vunpack.c.l.b16 %v1148
    %v1214 = vunpack.c.l.b16 %v1149
    %v1215 = vunpack.c.l.b16 %v1150
    %v1216 = vunpack.c.l.b16 %v1151
    %v1217 = vunpack.c.l.b16 %v1152
    %v1218 = vpack.c.b16 %v1187, %v1186
    %v1219 = vpack.c.b16 %v1189, %v1188
    %v1220 = vpack.c.b16 %v1191, %v1190
    %v1221 = vpack.c.b16 %v1193, %v1192
    %v1222 = vpack.c.b16 %v1195, %v1194
    %v1223 = vpack.c.b16 %v1197, %v1196
    %v1224 = vpack.c.b16 %v1199, %v1198
    %v1225 = vpack.c.b16 %v1201, %v1200
    %v1226 = vpack.c.b16 %v1203, %v1202
    %v1227 = vpack.c.b16 %v1205, %v1204
    %v1228 = vpack.c.b16 %v1207, %v1206
    %v1229 = vpack.c.b16 %v1209, %v1208
    %v1230 = vpack.c.b16 %v1211, %v1210
    %v1231 = vpack.c.b16 %v1213, %v1212
    %v1232 = vpack.c.b16 %v1215, %v1214
    %v1233 = vpack.c.b16 %v1217, %v1216
    %1250 = vmatpush.bf16.msra.mxu0 %v1225
    %1251 = vmatpush.bf16.msra.mxu0 %v1224
    %1252 = vmatpush.bf16.msra.mxu0 %v1223
    %1253 = vmatpush.bf16.msra.mxu0 %v1222
    %1254 = vmatpush.bf16.msra.mxu0 %v1221
    %1255 = vmatpush.bf16.msra.mxu0 %v1220
    %1256 = vmatpush.bf16.msra.mxu0 %v1219
    %1257 = vmatpush.bf16.msra.mxu0 %v1218
    %1258 = vmatmul.bf16.gmra.mxu0 %v1119
    %v1259 = vpop.f32.mrf.mxu0
    %v1260 = vadd.f32 %v1153, %v1259
    %v1261 = vpop.f32.mrf.mxu0
    %v1262 = vadd.f32 %v1153, %v1261
    %1263 = vdwg.mxu0
    %1264 = vmatpush.bf16.msra.mxu0 %v1233
    %1265 = vmatpush.bf16.msra.mxu0 %v1232
    %1266 = vmatpush.bf16.msra.mxu0 %v1231
    %1267 = vmatpush.bf16.msra.mxu0 %v1230
    %1268 = vmatpush.bf16.msra.mxu0 %v1229
    %1269 = vmatpush.bf16.msra.mxu0 %v1228
    %1270 = vmatpush.bf16.msra.mxu0 %v1227
    %1271 = vmatpush.bf16.msra.mxu0 %v1226
    %1272 = vmatmul.bf16.gmra.mxu0 %v1120
    %v1273 = vpop.f32.mrf.mxu0
    %v1274 = vadd.f32 %v1260, %v1273
    %v1275 = vpop.f32.mrf.mxu0
    %v1276 = vadd.f32 %v1262, %v1275
    %1277 = vdwg.mxu0
    %v1278 = vperm.slane %v515, 3
    %v1279 = vmul.f32 %v1278, %v1274
    %v1280 = vmul.f32 %v1278, %v1276
    %v1281 = vadd.f32 %v509, %v1279
    %v1282 = vadd.f32 %v511, %v1280
    %1283 = vadd.xlane.f32.xlu0 %v1281
    %v1284 = vpop.xlane.xlu0 %1283
    %v1285 = vsel %vm518, %v1282, 0.0
    %1286 = vadd.xlane.f32.xlu0 %v1285
    %v1287 = vpop.xlane.xlu0 %1286
    %v1288 = vmul.f32 %v1284, %v528
    %v1289 = vmul.f32 %v1287, %v528
    %v1290 = vmul.f32 %v1281, %v1281
    %v1291 = vmul.f32 %v1282, %v1282
    %1292 = vadd.xlane.f32.xlu0 %v1290
    %v1293 = vpop.xlane.xlu0 %1292
    %v1294 = vsel %vm518, %v1291, 0.0
    %1295 = vadd.xlane.f32.xlu0 %v1294
    %v1296 = vpop.xlane.xlu0 %1295
    %v1297 = vmul.f32 %v1293, %v528
    %v1298 = vmul.f32 %v1296, %v528
    %v1299 = vmul.f32 %v1288, %v1288
    %v1300 = vmul.f32 %v1289, %v1289
    %v1301 = vsub.f32 %v1297, %v1299
    %v1302 = vsub.f32 %v1298, %v1300
    %v1303 = vsub.f32 %v1281, %v1288
    %v1304 = vsub.f32 %v1282, %v1289
    %v1305 = vadd.f32 %v1301, 1e-06
    %v1306 = vadd.f32 %v1302, 1e-06
    %v1307 = vrsqrt.pop %v1305
    %v1308 = vmul.f32 %v1307, %v1305
    %v1309 = vmul.f32 %v1308, %v1307
    %v1310 = vmul.f32 0.5, %v1309
    %v1311 = vsub.f32 1.5, %v1310
    %v1312 = vmul.f32 %v1307, %v1311
    %vm1313 = vweird.f32 %v1305
    %vm1314 = vweird.f32 %v1307
    %vm1315 = vmor %vm1313, %vm1314
    %v1316 = vsel %vm1315, %v1307, %v1312
    %v1317 = vrsqrt.pop %v1306
    %v1318 = vmul.f32 %v1317, %v1306
    %v1319 = vmul.f32 %v1318, %v1317
    %v1320 = vmul.f32 0.5, %v1319
    %v1321 = vsub.f32 1.5, %v1320
    %v1322 = vmul.f32 %v1317, %v1321
    %vm1323 = vweird.f32 %v1306
    %vm1324 = vweird.f32 %v1317
    %vm1325 = vmor %vm1323, %vm1324
    %v1326 = vsel %vm1325, %v1317, %v1322
    %v1327 = vmul.f32 %v1303, %v1316
    %v1328 = vmul.f32 %v1304, %v1326
    %v1329 = vperm.slane %v515, 4
    %v1330 = vmul.f32 %v1327, %v1329
    %v1331 = vmul.f32 %v1328, %v1329
    %v1332 = vperm.slane %v515, 5
    %v1333 = vadd.f32 %v1330, %v1332
    %v1334 = vadd.f32 %v1331, %v1332
    %v1335 = vpack.c.bf16 %v1334, %v1333
    %v1336 = vld [vmem:[#allocation5] sm:$0xff]
    %v1337 = vld [vmem:[#allocation5 + $0x8] sm:$0xff]
    %v1338 = vld [vmem:[#allocation5 + $0x10] sm:$0xff]
    %v1339 = vld [vmem:[#allocation5 + $0x18] sm:$0xff]
    %v1340 = vld [vmem:[#allocation5 + $0x20] sm:$0xff]
    %v1341 = vld [vmem:[#allocation5 + $0x28] sm:$0xff]
    %v1342 = vld [vmem:[#allocation5 + $0x30] sm:$0xff]
    %v1343 = vld [vmem:[#allocation5 + $0x38] sm:$0xff]
    %v1344 = vld [vmem:[#allocation5 + $0x40] sm:$0xff]
    %v1345 = vld [vmem:[#allocation5 + $0x48] sm:$0xff]
    %v1346 = vld [vmem:[#allocation5 + $0x50] sm:$0xff]
    %v1347 = vld [vmem:[#allocation5 + $0x58] sm:$0xff]
    %v1348 = vld [vmem:[#allocation5 + $0x60] sm:$0xff]
    %v1349 = vld [vmem:[#allocation5 + $0x68] sm:$0xff]
    %v1350 = vld [vmem:[#allocation5 + $0x70] sm:$0xff]
    %v1351 = vld [vmem:[#allocation5 + $0x78] sm:$0xff]
    %v1352 = vld [vmem:[#allocation5 + $0x80] sm:$0xff]
    %v1353 = vld [vmem:[#allocation5 + $0x88] sm:$0xff]
    %v1354 = vld [vmem:[#allocation5 + $0x90] sm:$0xff]
    %v1355 = vld [vmem:[#allocation5 + $0x98] sm:$0xff]
    %v1356 = vld [vmem:[#allocation5 + $0xa0] sm:$0xff]
    %v1357 = vld [vmem:[#allocation5 + $0xa8] sm:$0xff]
    %v1358 = vld [vmem:[#allocation5 + $0xb0] sm:$0xff]
    %v1359 = vld [vmem:[#allocation5 + $0xb8] sm:$0xff]
    %v1360 = vld [vmem:[#allocation5 + $0xc0] sm:$0xff]
    %v1361 = vld [vmem:[#allocation5 + $0xc8] sm:$0xff]
    %v1362 = vld [vmem:[#allocation5 + $0xd0] sm:$0xff]
    %v1363 = vld [vmem:[#allocation5 + $0xd8] sm:$0xff]
    %v1364 = vld [vmem:[#allocation5 + $0xe0] sm:$0xff]
    %v1365 = vld [vmem:[#allocation5 + $0xe8] sm:$0xff]
    %v1366 = vld [vmem:[#allocation5 + $0xf0] sm:$0xff]
    %v1367 = vld [vmem:[#allocation5 + $0xf8] sm:$0xff]
    %v1368 = vld [vmem:[%s9] sm:$0xf]
    %v1370 = vperm.slane %v1368, 0
    %v1371 = vperm.slane %v1368, 1
    %v1372 = vperm.slane %v1368, 2
    %v1373 = vperm.slane %v1368, 3
    %v1410 = vunpack.c.l.b16 %v1336
    %v1411 = vunpack.c.h.b16 %v1336
    %v1412 = vunpack.c.l.b16 %v1337
    %v1413 = vunpack.c.h.b16 %v1337
    %v1414 = vunpack.c.l.b16 %v1338
    %v1415 = vunpack.c.h.b16 %v1338
    %v1416 = vunpack.c.l.b16 %v1339
    %v1417 = vunpack.c.h.b16 %v1339
    %v1418 = vunpack.c.l.b16 %v1340
    %v1419 = vunpack.c.h.b16 %v1340
    %v1420 = vunpack.c.l.b16 %v1341
    %v1421 = vunpack.c.h.b16 %v1341
    %v1422 = vunpack.c.l.b16 %v1342
    %v1423 = vunpack.c.h.b16 %v1342
    %v1424 = vunpack.c.l.b16 %v1343
    %v1425 = vunpack.c.h.b16 %v1343
    %v1426 = vunpack.c.l.b16 %v1344
    %v1427 = vunpack.c.h.b16 %v1344
    %v1428 = vunpack.c.l.b16 %v1345
    %v1429 = vunpack.c.h.b16 %v1345
    %v1430 = vunpack.c.l.b16 %v1346
    %v1431 = vunpack.c.h.b16 %v1346
    %v1432 = vunpack.c.l.b16 %v1347
    %v1433 = vunpack.c.h.b16 %v1347
    %v1434 = vunpack.c.l.b16 %v1348
    %v1435 = vunpack.c.h.b16 %v1348
    %v1436 = vunpack.c.l.b16 %v1349
    %v1437 = vunpack.c.h.b16 %v1349
    %v1438 = vunpack.c.l.b16 %v1350
    %v1439 = vunpack.c.h.b16 %v1350
    %v1440 = vunpack.c.l.b16 %v1351
    %v1441 = vunpack.c.h.b16 %v1351
    %v1442 = vunpack.c.l.b16 %v1352
    %v1443 = vunpack.c.h.b16 %v1352
    %v1444 = vunpack.c.l.b16 %v1353
    %v1445 = vunpack.c.h.b16 %v1353
    %v1446 = vunpack.c.l.b16 %v1354
    %v1447 = vunpack.c.h.b16 %v1354
    %v1448 = vunpack.c.l.b16 %v1355
    %v1449 = vunpack.c.h.b16 %v1355
    %v1450 = vunpack.c.l.b16 %v1356
    %v1451 = vunpack.c.h.b16 %v1356
    %v1452 = vunpack.c.l.b16 %v1357
    %v1453 = vunpack.c.h.b16 %v1357
    %v1454 = vunpack.c.l.b16 %v1358
    %v1455 = vunpack.c.h.b16 %v1358
    %v1456 = vunpack.c.l.b16 %v1359
    %v1457 = vunpack.c.h.b16 %v1359
    %v1458 = vunpack.c.l.b16 %v1360
    %v1459 = vunpack.c.h.b16 %v1360
    %v1460 = vunpack.c.l.b16 %v1361
    %v1461 = vunpack.c.h.b16 %v1361
    %v1462 = vunpack.c.l.b16 %v1362
    %v1463 = vunpack.c.h.b16 %v1362
    %v1464 = vunpack.c.l.b16 %v1363
    %v1465 = vunpack.c.h.b16 %v1363
    %v1466 = vunpack.c.l.b16 %v1364
    %v1467 = vunpack.c.h.b16 %v1364
    %v1468 = vunpack.c.l.b16 %v1365
    %v1469 = vunpack.c.h.b16 %v1365
    %v1470 = vunpack.c.l.b16 %v1366
    %v1471 = vunpack.c.h.b16 %v1366
    %v1472 = vunpack.c.l.b16 %v1367
    %v1473 = vunpack.c.h.b16 %v1367
    %v1474 = vpack.c.b16 %v1414, %v1410
    %v1475 = vpack.c.b16 %v1415, %v1411
    %v1476 = vpack.c.b16 %v1416, %v1412
    %v1477 = vpack.c.b16 %v1417, %v1413
    %v1478 = vpack.c.b16 %v1422, %v1418
    %v1479 = vpack.c.b16 %v1423, %v1419
    %v1480 = vpack.c.b16 %v1424, %v1420
    %v1481 = vpack.c.b16 %v1425, %v1421
    %v1482 = vpack.c.b16 %v1430, %v1426
    %v1483 = vpack.c.b16 %v1431, %v1427
    %v1484 = vpack.c.b16 %v1432, %v1428
    %v1485 = vpack.c.b16 %v1433, %v1429
    %v1486 = vpack.c.b16 %v1438, %v1434
    %v1487 = vpack.c.b16 %v1439, %v1435
    %v1488 = vpack.c.b16 %v1440, %v1436
    %v1489 = vpack.c.b16 %v1441, %v1437
    %v1490 = vpack.c.b16 %v1446, %v1442
    %v1491 = vpack.c.b16 %v1447, %v1443
    %v1492 = vpack.c.b16 %v1448, %v1444
    %v1493 = vpack.c.b16 %v1449, %v1445
    %v1494 = vpack.c.b16 %v1454, %v1450
    %v1495 = vpack.c.b16 %v1455, %v1451
    %v1496 = vpack.c.b16 %v1456, %v1452
    %v1497 = vpack.c.b16 %v1457, %v1453
    %v1498 = vpack.c.b16 %v1462, %v1458
    %v1499 = vpack.c.b16 %v1463, %v1459
    %v1500 = vpack.c.b16 %v1464, %v1460
    %v1501 = vpack.c.b16 %v1465, %v1461
    %v1502 = vpack.c.b16 %v1470, %v1466
    %v1503 = vpack.c.b16 %v1471, %v1467
    %v1504 = vpack.c.b16 %v1472, %v1468
    %v1505 = vpack.c.b16 %v1473, %v1469
    %1538 = vmatpush.bf16.msra.mxu0 %v1502
    %1539 = vmatpush.bf16.msra.mxu0 %v1498
    %1540 = vmatpush.bf16.msra.mxu0 %v1494
    %1541 = vmatpush.bf16.msra.mxu0 %v1490
    %1542 = vmatpush.bf16.msra.mxu0 %v1486
    %1543 = vmatpush.bf16.msra.mxu0 %v1482
    %1544 = vmatpush.bf16.msra.mxu0 %v1478
    %1545 = vmatpush.bf16.msra.mxu0 %v1474
    %1546 = vmatmul.bf16.gmra.mxu0 %v1335
    %v1547 = vpop.f32.mrf.mxu0
    %v1548 = vadd.f32 %v1370, %v1547
    %v1549 = vpop.f32.mrf.mxu0
    %v1550 = vadd.f32 %v1370, %v1549
    %1551 = vdwg.mxu0
    %1552 = vmatpush.bf16.msra.mxu0 %v1503
    %1553 = vmatpush.bf16.msra.mxu0 %v1499
    %1554 = vmatpush.bf16.msra.mxu0 %v1495
    %1555 = vmatpush.bf16.msra.mxu0 %v1491
    %1556 = vmatpush.bf16.msra.mxu0 %v1487
    %1557 = vmatpush.bf16.msra.mxu0 %v1483
    %1558 = vmatpush.bf16.msra.mxu0 %v1479
    %1559 = vmatpush.bf16.msra.mxu0 %v1475
    %1560 = vmatmul.bf16.gmra.mxu0 %v1335
    %v1561 = vpop.f32.mrf.mxu0
    %v1562 = vadd.f32 %v1371, %v1561
    %v1563 = vpop.f32.mrf.mxu0
    %v1564 = vadd.f32 %v1371, %v1563
    %1565 = vdwg.mxu0
    %1566 = vmatpush.bf16.msra.mxu0 %v1504
    %1567 = vmatpush.bf16.msra.mxu0 %v1500
    %1568 = vmatpush.bf16.msra.mxu0 %v1496
    %1569 = vmatpush.bf16.msra.mxu0 %v1492
    %1570 = vmatpush.bf16.msra.mxu0 %v1488
    %1571 = vmatpush.bf16.msra.mxu0 %v1484
    %1572 = vmatpush.bf16.msra.mxu0 %v1480
    %1573 = vmatpush.bf16.msra.mxu0 %v1476
    %1574 = vmatmul.bf16.gmra.mxu0 %v1335
    %v1575 = vpop.f32.mrf.mxu0
    %v1576 = vadd.f32 %v1372, %v1575
    %v1577 = vpop.f32.mrf.mxu0
    %v1578 = vadd.f32 %v1372, %v1577
    %1579 = vdwg.mxu0
    %1580 = vmatpush.bf16.msra.mxu0 %v1505
    %1581 = vmatpush.bf16.msra.mxu0 %v1501
    %1582 = vmatpush.bf16.msra.mxu0 %v1497
    %1583 = vmatpush.bf16.msra.mxu0 %v1493
    %1584 = vmatpush.bf16.msra.mxu0 %v1489
    %1585 = vmatpush.bf16.msra.mxu0 %v1485
    %1586 = vmatpush.bf16.msra.mxu0 %v1481
    %1587 = vmatpush.bf16.msra.mxu0 %v1477
    %1588 = vmatmul.bf16.gmra.mxu0 %v1335
    %v1589 = vpop.f32.mrf.mxu0
    %v1590 = vadd.f32 %v1373, %v1589
    %v1591 = vpop.f32.mrf.mxu0
    %v1592 = vadd.f32 %v1373, %v1591
    %1593 = vdwg.mxu0
    %v1594 = vmul.f32 %v1548, %v1548
    %v1595 = vmul.f32 %v1562, %v1562
    %v1596 = vmul.f32 %v1576, %v1576
    %v1597 = vmul.f32 %v1590, %v1590
    %v1598 = vmul.f32 %v1550, %v1550
    %v1599 = vmul.f32 %v1564, %v1564
    %v1600 = vmul.f32 %v1578, %v1578
    %v1601 = vmul.f32 %v1592, %v1592
    %v1602 = vmul.f32 %v1548, %v1594
    %v1603 = vmul.f32 %v1562, %v1595
    %v1604 = vmul.f32 %v1576, %v1596
    %v1605 = vmul.f32 %v1590, %v1597
    %v1606 = vmul.f32 %v1550, %v1598
    %v1607 = vmul.f32 %v1564, %v1599
    %v1608 = vmul.f32 %v1578, %v1600
    %v1609 = vmul.f32 %v1592, %v1601
    %v1610 = vmul.f32 %v1602, 0.044715
    %v1611 = vmul.f32 %v1603, 0.044715
    %v1612 = vmul.f32 %v1604, 0.044715
    %v1613 = vmul.f32 %v1605, 0.044715
    %v1614 = vmul.f32 %v1606, 0.044715
    %v1615 = vmul.f32 %v1607, 0.044715
    %v1616 = vmul.f32 %v1608, 0.044715
    %v1617 = vmul.f32 %v1609, 0.044715
    %v1618 = vadd.f32 %v1548, %v1610
    %v1619 = vadd.f32 %v1562, %v1611
    %v1620 = vadd.f32 %v1576, %v1612
    %v1621 = vadd.f32 %v1590, %v1613
    %v1622 = vadd.f32 %v1550, %v1614
    %v1623 = vadd.f32 %v1564, %v1615
    %v1624 = vadd.f32 %v1578, %v1616
    %v1625 = vadd.f32 %v1592, %v1617
    %v1626 = vmul.f32 %v1618, 0.7978846
    %v1627 = vmul.f32 %v1619, 0.7978846
    %v1628 = vmul.f32 %v1620, 0.7978846
    %v1629 = vmul.f32 %v1621, 0.7978846
    %v1630 = vmul.f32 %v1622, 0.7978846
    %v1631 = vmul.f32 %v1623, 0.7978846
    %v1632 = vmul.f32 %v1624, 0.7978846
    %v1633 = vmul.f32 %v1625, 0.7978846
    %v1634 = vtanh.pop %v1626
    %v1635 = vtanh.pop %v1627
    %v1636 = vtanh.pop %v1628
    %v1637 = vtanh.pop %v1629
    %v1638 = vtanh.pop %v1630
    %v1639 = vtanh.pop %v1631
    %v1640 = vtanh.pop %v1632
    %v1641 = vtanh.pop %v1633
    %v1642 = vadd.f32 %v1634, 1.0
    %v1643 = vadd.f32 %v1635, 1.0
    %v1644 = vadd.f32 %v1636, 1.0
    %v1645 = vadd.f32 %v1637, 1.0
    %v1646 = vadd.f32 %v1638, 1.0
    %v1647 = vadd.f32 %v1639, 1.0
    %v1648 = vadd.f32 %v1640, 1.0
    %v1649 = vadd.f32 %v1641, 1.0
    %v1650 = vmul.f32 %v1642, 0.5
    %v1651 = vmul.f32 %v1643, 0.5
    %v1652 = vmul.f32 %v1644, 0.5
    %v1653 = vmul.f32 %v1645, 0.5
    %v1654 = vmul.f32 %v1646, 0.5
    %v1655 = vmul.f32 %v1647, 0.5
    %v1656 = vmul.f32 %v1648, 0.5
    %v1657 = vmul.f32 %v1649, 0.5
    %v1658 = vmul.f32 %v1548, %v1650
    %v1659 = vmul.f32 %v1562, %v1651
    %v1660 = vmul.f32 %v1576, %v1652
    %v1661 = vmul.f32 %v1590, %v1653
    %v1662 = vmul.f32 %v1550, %v1654
    %v1663 = vmul.f32 %v1564, %v1655
    %v1664 = vmul.f32 %v1578, %v1656
    %v1665 = vmul.f32 %v1592, %v1657
    %v1666 = vpack.c.bf16 %v1662, %v1658
    %v1667 = vpack.c.bf16 %v1663, %v1659
    %v1668 = vpack.c.bf16 %v1664, %v1660
    %v1669 = vpack.c.bf16 %v1665, %v1661
    %v1670 = vld [vmem:[#allocation7] sm:$0xf]
    %v1671 = vld [vmem:[#allocation7 + $0x4] sm:$0xf]
    %v1672 = vld [vmem:[#allocation7 + $0x8] sm:$0xf]
    %v1673 = vld [vmem:[#allocation7 + $0xc] sm:$0xf]
    %v1674 = vld [vmem:[#allocation7 + $0x10] sm:$0xf]
    %v1675 = vld [vmem:[#allocation7 + $0x14] sm:$0xf]
    %v1676 = vld [vmem:[#allocation7 + $0x18] sm:$0xf]
    %v1677 = vld [vmem:[#allocation7 + $0x1c] sm:$0xf]
    %v1678 = vld [vmem:[#allocation7 + $0x20] sm:$0xf]
    %v1679 = vld [vmem:[#allocation7 + $0x24] sm:$0xf]
    %v1680 = vld [vmem:[#allocation7 + $0x28] sm:$0xf]
    %v1681 = vld [vmem:[#allocation7 + $0x2c] sm:$0xf]
    %v1682 = vld [vmem:[#allocation7 + $0x30] sm:$0xf]
    %v1683 = vld [vmem:[#allocation7 + $0x34] sm:$0xf]
    %v1684 = vld [vmem:[#allocation7 + $0x38] sm:$0xf]
    %v1685 = vld [vmem:[#allocation7 + $0x3c] sm:$0xf]
    %v1686 = vld [vmem:[#allocation7 + $0x40] sm:$0xf]
    %v1687 = vld [vmem:[#allocation7 + $0x44] sm:$0xf]
    %v1688 = vld [vmem:[#allocation7 + $0x48] sm:$0xf]
    %v1689 = vld [vmem:[#allocation7 + $0x4c] sm:$0xf]
    %v1690 = vld [vmem:[#allocation7 + $0x50] sm:$0xf]
    %v1691 = vld [vmem:[#allocation7 + $0x54] sm:$0xf]
    %v1692 = vld [vmem:[#allocation7 + $0x58] sm:$0xf]
    %v1693 = vld [vmem:[#allocation7 + $0x5c] sm:$0xf]
    %v1694 = vld [vmem:[#allocation7 + $0x60] sm:$0xf]
    %v1695 = vld [vmem:[#allocation7 + $0x64] sm:$0xf]
    %v1696 = vld [vmem:[#allocation7 + $0x68] sm:$0xf]
    %v1697 = vld [vmem:[#allocation7 + $0x6c] sm:$0xf]
    %v1698 = vld [vmem:[#allocation7 + $0x70] sm:$0xf]
    %v1699 = vld [vmem:[#allocation7 + $0x74] sm:$0xf]
    %v1700 = vld [vmem:[#allocation7 + $0x78] sm:$0xf]
    %v1701 = vld [vmem:[#allocation7 + $0x7c] sm:$0xf]
    %v1702 = vld [vmem:[#allocation7 + $0x80] sm:$0xf]
    %v1703 = vld [vmem:[#allocation7 + $0x84] sm:$0xf]
    %v1704 = vld [vmem:[#allocation7 + $0x88] sm:$0xf]
    %v1705 = vld [vmem:[#allocation7 + $0x8c] sm:$0xf]
    %v1706 = vld [vmem:[#allocation7 + $0x90] sm:$0xf]
    %v1707 = vld [vmem:[#allocation7 + $0x94] sm:$0xf]
    %v1708 = vld [vmem:[#allocation7 + $0x98] sm:$0xf]
    %v1709 = vld [vmem:[#allocation7 + $0x9c] sm:$0xf]
    %v1710 = vld [vmem:[#allocation7 + $0xa0] sm:$0xf]
    %v1711 = vld [vmem:[#allocation7 + $0xa4] sm:$0xf]
    %v1712 = vld [vmem:[#allocation7 + $0xa8] sm:$0xf]
    %v1713 = vld [vmem:[#allocation7 + $0xac] sm:$0xf]
    %v1714 = vld [vmem:[#allocation7 + $0xb0] sm:$0xf]
    %v1715 = vld [vmem:[#allocation7 + $0xb4] sm:$0xf]
    %v1716 = vld [vmem:[#allocation7 + $0xb8] sm:$0xf]
    %v1717 = vld [vmem:[#allocation7 + $0xbc] sm:$0xf]
    %v1718 = vld [vmem:[#allocation7 + $0xc0] sm:$0xf]
    %v1719 = vld [vmem:[#allocation7 + $0xc4] sm:$0xf]
    %v1720 = vld [vmem:[#allocation7 + $0xc8] sm:$0xf]
    %v1721 = vld [vmem:[#allocation7 + $0xcc] sm:$0xf]
    %v1722 = vld [vmem:[#allocation7 + $0xd0] sm:$0xf]
    %v1723 = vld [vmem:[#allocation7 + $0xd4] sm:$0xf]
    %v1724 = vld [vmem:[#allocation7 + $0xd8] sm:$0xf]
    %v1725 = vld [vmem:[#allocation7 + $0xdc] sm:$0xf]
    %v1726 = vld [vmem:[#allocation7 + $0xe0] sm:$0xf]
    %v1727 = vld [vmem:[#allocation7 + $0xe4] sm:$0xf]
    %v1728 = vld [vmem:[#allocation7 + $0xe8] sm:$0xf]
    %v1729 = vld [vmem:[#allocation7 + $0xec] sm:$0xf]
    %v1730 = vld [vmem:[#allocation7 + $0xf0] sm:$0xf]
    %v1731 = vld [vmem:[#allocation7 + $0xf4] sm:$0xf]
    %v1732 = vld [vmem:[#allocation7 + $0xf8] sm:$0xf]
    %v1733 = vld [vmem:[#allocation7 + $0xfc] sm:$0xf]
    %v1734 = vperm.slane %v515, 6
    %v1799 = vunpack.c.l.b16 %v1670
    %v1800 = vunpack.c.l.b16 %v1671
    %v1801 = vunpack.c.l.b16 %v1672
    %v1802 = vunpack.c.l.b16 %v1673
    %v1803 = vunpack.c.l.b16 %v1674
    %v1804 = vunpack.c.l.b16 %v1675
    %v1805 = vunpack.c.l.b16 %v1676
    %v1806 = vunpack.c.l.b16 %v1677
    %v1807 = vunpack.c.l.b16 %v1678
    %v1808 = vunpack.c.l.b16 %v1679
    %v1809 = vunpack.c.l.b16 %v1680
    %v1810 = vunpack.c.l.b16 %v1681
    %v1811 = vunpack.c.l.b16 %v1682
    %v1812 = vunpack.c.l.b16 %v1683
    %v1813 = vunpack.c.l.b16 %v1684
    %v1814 = vunpack.c.l.b16 %v1685
    %v1815 = vunpack.c.l.b16 %v1686
    %v1816 = vunpack.c.l.b16 %v1687
    %v1817 = vunpack.c.l.b16 %v1688
    %v1818 = vunpack.c.l.b16 %v1689
    %v1819 = vunpack.c.l.b16 %v1690
    %v1820 = vunpack.c.l.b16 %v1691
    %v1821 = vunpack.c.l.b16 %v1692
    %v1822 = vunpack.c.l.b16 %v1693
    %v1823 = vunpack.c.l.b16 %v1694
    %v1824 = vunpack.c.l.b16 %v1695
    %v1825 = vunpack.c.l.b16 %v1696
    %v1826 = vunpack.c.l.b16 %v1697
    %v1827 = vunpack.c.l.b16 %v1698
    %v1828 = vunpack.c.l.b16 %v1699
    %v1829 = vunpack.c.l.b16 %v1700
    %v1830 = vunpack.c.l.b16 %v1701
    %v1831 = vunpack.c.l.b16 %v1702
    %v1832 = vunpack.c.l.b16 %v1703
    %v1833 = vunpack.c.l.b16 %v1704
    %v1834 = vunpack.c.l.b16 %v1705
    %v1835 = vunpack.c.l.b16 %v1706
    %v1836 = vunpack.c.l.b16 %v1707
    %v1837 = vunpack.c.l.b16 %v1708
    %v1838 = vunpack.c.l.b16 %v1709
    %v1839 = vunpack.c.l.b16 %v1710
    %v1840 = vunpack.c.l.b16 %v1711
    %v1841 = vunpack.c.l.b16 %v1712
    %v1842 = vunpack.c.l.b16 %v1713
    %v1843 = vunpack.c.l.b16 %v1714
    %v1844 = vunpack.c.l.b16 %v1715
    %v1845 = vunpack.c.l.b16 %v1716
    %v1846 = vunpack.c.l.b16 %v1717
    %v1847 = vunpack.c.l.b16 %v1718
    %v1848 = vunpack.c.l.b16 %v1719
    %v1849 = vunpack.c.l.b16 %v1720
    %v1850 = vunpack.c.l.b16 %v1721
    %v1851 = vunpack.c.l.b16 %v1722
    %v1852 = vunpack.c.l.b16 %v1723
    %v1853 = vunpack.c.l.b16 %v1724
    %v1854 = vunpack.c.l.b16 %v1725
    %v1855 = vunpack.c.l.b16 %v1726
    %v1856 = vunpack.c.l.b16 %v1727
    %v1857 = vunpack.c.l.b16 %v1728
    %v1858 = vunpack.c.l.b16 %v1729
    %v1859 = vunpack.c.l.b16 %v1730
    %v1860 = vunpack.c.l.b16 %v1731
    %v1861 = vunpack.c.l.b16 %v1732
    %v1862 = vunpack.c.l.b16 %v1733
    %v1863 = vpack.c.b16 %v1800, %v1799
    %v1864 = vpack.c.b16 %v1802, %v1801
    %v1865 = vpack.c.b16 %v1804, %v1803
    %v1866 = vpack.c.b16 %v1806, %v1805
    %v1867 = vpack.c.b16 %v1808, %v1807
    %v1868 = vpack.c.b16 %v1810, %v1809
    %v1869 = vpack.c.b16 %v1812, %v1811
    %v1870 = vpack.c.b16 %v1814, %v1813
    %v1871 = vpack.c.b16 %v1816, %v1815
    %v1872 = vpack.c.b16 %v1818, %v1817
    %v1873 = vpack.c.b16 %v1820, %v1819
    %v1874 = vpack.c.b16 %v1822, %v1821
    %v1875 = vpack.c.b16 %v1824, %v1823
    %v1876 = vpack.c.b16 %v1826, %v1825
    %v1877 = vpack.c.b16 %v1828, %v1827
    %v1878 = vpack.c.b16 %v1830, %v1829
    %v1879 = vpack.c.b16 %v1832, %v1831
    %v1880 = vpack.c.b16 %v1834, %v1833
    %v1881 = vpack.c.b16 %v1836, %v1835
    %v1882 = vpack.c.b16 %v1838, %v1837
    %v1883 = vpack.c.b16 %v1840, %v1839
    %v1884 = vpack.c.b16 %v1842, %v1841
    %v1885 = vpack.c.b16 %v1844, %v1843
    %v1886 = vpack.c.b16 %v1846, %v1845
    %v1887 = vpack.c.b16 %v1848, %v1847
    %v1888 = vpack.c.b16 %v1850, %v1849
    %v1889 = vpack.c.b16 %v1852, %v1851
    %v1890 = vpack.c.b16 %v1854, %v1853
    %v1891 = vpack.c.b16 %v1856, %v1855
    %v1892 = vpack.c.b16 %v1858, %v1857
    %v1893 = vpack.c.b16 %v1860, %v1859
    %v1894 = vpack.c.b16 %v1862, %v1861
    %1927 = vmatpush.bf16.msra.mxu0 %v1870
    %1928 = vmatpush.bf16.msra.mxu0 %v1869
    %1929 = vmatpush.bf16.msra.mxu0 %v1868
    %1930 = vmatpush.bf16.msra.mxu0 %v1867
    %1931 = vmatpush.bf16.msra.mxu0 %v1866
    %1932 = vmatpush.bf16.msra.mxu0 %v1865
    %1933 = vmatpush.bf16.msra.mxu0 %v1864
    %1934 = vmatpush.bf16.msra.mxu0 %v1863
    %1935 = vmatmul.bf16.gmra.mxu0 %v1666
    %v1936 = vpop.f32.mrf.mxu0
    %v1937 = vadd.f32 %v1734, %v1936
    %v1938 = vpop.f32.mrf.mxu0
    %v1939 = vadd.f32 %v1734, %v1938
    %1940 = vdwg.mxu0
    %1941 = vmatpush.bf16.msra.mxu0 %v1878
    %1942 = vmatpush.bf16.msra.mxu0 %v1877
    %1943 = vmatpush.bf16.msra.mxu0 %v1876
    %1944 = vmatpush.bf16.msra.mxu0 %v1875
    %1945 = vmatpush.bf16.msra.mxu0 %v1874
    %1946 = vmatpush.bf16.msra.mxu0 %v1873
    %1947 = vmatpush.bf16.msra.mxu0 %v1872
    %1948 = vmatpush.bf16.msra.mxu0 %v1871
    %1949 = vmatmul.bf16.gmra.mxu0 %v1667
    %v1950 = vpop.f32.mrf.mxu0
    %v1951 = vadd.f32 %v1937, %v1950
    %v1952 = vpop.f32.mrf.mxu0
    %v1953 = vadd.f32 %v1939, %v1952
    %1954 = vdwg.mxu0
    %1955 = vmatpush.bf16.msra.mxu0 %v1886
    %1956 = vmatpush.bf16.msra.mxu0 %v1885
    %1957 = vmatpush.bf16.msra.mxu0 %v1884
    %1958 = vmatpush.bf16.msra.mxu0 %v1883
    %1959 = vmatpush.bf16.msra.mxu0 %v1882
    %1960 = vmatpush.bf16.msra.mxu0 %v1881
    %1961 = vmatpush.bf16.msra.mxu0 %v1880
    %1962 = vmatpush.bf16.msra.mxu0 %v1879
    %1963 = vmatmul.bf16.gmra.mxu0 %v1668
    %v1964 = vpop.f32.mrf.mxu0
    %v1965 = vadd.f32 %v1951, %v1964
    %v1966 = vpop.f32.mrf.mxu0
    %v1967 = vadd.f32 %v1953, %v1966
    %1968 = vdwg.mxu0
    %1969 = vmatpush.bf16.msra.mxu0 %v1894
    %1970 = vmatpush.bf16.msra.mxu0 %v1893
    %1971 = vmatpush.bf16.msra.mxu0 %v1892
    %1972 = vmatpush.bf16.msra.mxu0 %v1891
    %1973 = vmatpush.bf16.msra.mxu0 %v1890
    %1974 = vmatpush.bf16.msra.mxu0 %v1889
    %1975 = vmatpush.bf16.msra.mxu0 %v1888
    %1976 = vmatpush.bf16.msra.mxu0 %v1887
    %1977 = vmatmul.bf16.gmra.mxu0 %v1669
    %v1978 = vpop.f32.mrf.mxu0
    %v1979 = vadd.f32 %v1965, %v1978
    %v1980 = vpop.f32.mrf.mxu0
    %v1981 = vadd.f32 %v1967, %v1980
    %1982 = vdwg.mxu0
    %v1983 = vperm.slane %v515, 7
    %v1984 = vmul.f32 %v1983, %v1979
    %v1985 = vmul.f32 %v1983, %v1981
    %v1986 = vadd.f32 %v1281, %v1984
    %v1987 = vadd.f32 %v1282, %v1985
    %s1988 = scalar_lea.vmem %s4, 8
    %v1989 = vld [vmem:[%s1988] sm:$0xff]
    %1990 = vadd.xlane.f32.xlu0 %v1986
    %v1991 = vpop.xlane.xlu0 %1990
    %v1992 = vsel %vm518, %v1987, 0.0
    %1993 = vadd.xlane.f32.xlu0 %v1992
    %v1994 = vpop.xlane.xlu0 %1993
    %v1995 = vmul.f32 %v1991, %v528
    %v1996 = vmul.f32 %v1994, %v528
    %v1997 = vmul.f32 %v1986, %v1986
    %v1998 = vmul.f32 %v1987, %v1987
    %1999 = vadd.xlane.f32.xlu0 %v1997
    %v2000 = vpop.xlane.xlu0 %1999
    %v2001 = vsel %vm518, %v1998, 0.0
    %2002 = vadd.xlane.f32.xlu0 %v2001
    %v2003 = vpop.xlane.xlu0 %2002
    %v2004 = vmul.f32 %v2000, %v528
    %v2005 = vmul.f32 %v2003, %v528
    %v2006 = vmul.f32 %v1995, %v1995
    %v2007 = vmul.f32 %v1996, %v1996
    %v2008 = vsub.f32 %v2004, %v2006
    %v2009 = vsub.f32 %v2005, %v2007
    %v2010 = vsub.f32 %v1986, %v1995
    %v2011 = vsub.f32 %v1987, %v1996
    %v2012 = vadd.f32 %v2008, 1e-06
    %v2013 = vadd.f32 %v2009, 1e-06
    %v2014 = vrsqrt.pop %v2012
    %v2015 = vmul.f32 %v2014, %v2012
    %v2016 = vmul.f32 %v2015, %v2014
    %v2017 = vmul.f32 0.5, %v2016
    %v2018 = vsub.f32 1.5, %v2017
    %v2019 = vmul.f32 %v2014, %v2018
    %vm2020 = vweird.f32 %v2012
    %vm2021 = vweird.f32 %v2014
    %vm2022 = vmor %vm2020, %vm2021
    %v2023 = vsel %vm2022, %v2014, %v2019
    %v2024 = vrsqrt.pop %v2013
    %v2025 = vmul.f32 %v2024, %v2013
    %v2026 = vmul.f32 %v2025, %v2024
    %v2027 = vmul.f32 0.5, %v2026
    %v2028 = vsub.f32 1.5, %v2027
    %v2029 = vmul.f32 %v2024, %v2028
    %vm2030 = vweird.f32 %v2013
    %vm2031 = vweird.f32 %v2024
    %vm2032 = vmor %vm2030, %vm2031
    %v2033 = vsel %vm2032, %v2024, %v2029
    %v2034 = vmul.f32 %v2010, %v2023
    %v2035 = vmul.f32 %v2011, %v2033
    %v2036 = vperm.slane %v1989, 0
    %v2037 = vmul.f32 %v2034, %v2036
    %v2038 = vmul.f32 %v2035, %v2036
    %v2039 = vperm.slane %v1989, 1
    %v2040 = vadd.f32 %v2037, %v2039
    %v2041 = vadd.f32 %v2038, %v2039
    %v2042 = vpack.c.bf16 %v2041, %v2040
    %s2043 = scalar_lea.vmem %s5, 384
    %v2044 = vld [vmem:[%s2043] sm:$0xff]
    %v2045 = vld [vmem:[%s2043 + $0x8] sm:$0xff]
    %v2046 = vld [vmem:[%s2043 + $0x10] sm:$0xff]
    %v2047 = vld [vmem:[%s2043 + $0x18] sm:$0xff]
    %v2048 = vld [vmem:[%s2043 + $0x20] sm:$0xff]
    %v2049 = vld [vmem:[%s2043 + $0x28] sm:$0xff]
    %v2050 = vld [vmem:[%s2043 + $0x30] sm:$0xff]
    %v2051 = vld [vmem:[%s2043 + $0x38] sm:$0xff]
    %v2052 = vld [vmem:[%s2043 + $0x40] sm:$0xff]
    %v2053 = vld [vmem:[%s2043 + $0x48] sm:$0xff]
    %v2054 = vld [vmem:[%s2043 + $0x50] sm:$0xff]
    %v2055 = vld [vmem:[%s2043 + $0x58] sm:$0xff]
    %v2056 = vld [vmem:[%s2043 + $0x60] sm:$0xff]
    %v2057 = vld [vmem:[%s2043 + $0x68] sm:$0xff]
    %v2058 = vld [vmem:[%s2043 + $0x70] sm:$0xff]
    %v2059 = vld [vmem:[%s2043 + $0x78] sm:$0xff]
    %v2060 = vld [vmem:[%s2043 + $0x80] sm:$0xff]
    %v2061 = vld [vmem:[%s2043 + $0x88] sm:$0xff]
    %v2062 = vld [vmem:[%s2043 + $0x90] sm:$0xff]
    %v2063 = vld [vmem:[%s2043 + $0x98] sm:$0xff]
    %v2064 = vld [vmem:[%s2043 + $0xa0] sm:$0xff]
    %v2065 = vld [vmem:[%s2043 + $0xa8] sm:$0xff]
    %v2066 = vld [vmem:[%s2043 + $0xb0] sm:$0xff]
    %v2067 = vld [vmem:[%s2043 + $0xb8] sm:$0xff]
    %v2068 = vld [vmem:[%s2043 + $0xc0] sm:$0xff]
    %v2069 = vld [vmem:[%s2043 + $0xc8] sm:$0xff]
    %v2070 = vld [vmem:[%s2043 + $0xd0] sm:$0xff]
    %v2071 = vld [vmem:[%s2043 + $0xd8] sm:$0xff]
    %v2072 = vld [vmem:[%s2043 + $0xe0] sm:$0xff]
    %v2073 = vld [vmem:[%s2043 + $0xe8] sm:$0xff]
    %v2074 = vld [vmem:[%s2043 + $0xf0] sm:$0xff]
    %v2075 = vld [vmem:[%s2043 + $0xf8] sm:$0xff]
    %v2076 = vld [vmem:[%s2043 + $0x100] sm:$0xff]
    %v2077 = vld [vmem:[%s2043 + $0x108] sm:$0xff]
    %v2078 = vld [vmem:[%s2043 + $0x110] sm:$0xff]
    %v2079 = vld [vmem:[%s2043 + $0x118] sm:$0xff]
    %v2080 = vld [vmem:[%s2043 + $0x120] sm:$0xff]
    %v2081 = vld [vmem:[%s2043 + $0x128] sm:$0xff]
    %v2082 = vld [vmem:[%s2043 + $0x130] sm:$0xff]
    %v2083 = vld [vmem:[%s2043 + $0x138] sm:$0xff]
    %v2084 = vld [vmem:[%s2043 + $0x140] sm:$0xff]
    %v2085 = vld [vmem:[%s2043 + $0x148] sm:$0xff]
    %v2086 = vld [vmem:[%s2043 + $0x150] sm:$0xff]
    %v2087 = vld [vmem:[%s2043 + $0x158] sm:$0xff]
    %v2088 = vld [vmem:[%s2043 + $0x160] sm:$0xff]
    %v2089 = vld [vmem:[%s2043 + $0x168] sm:$0xff]
    %v2090 = vld [vmem:[%s2043 + $0x170] sm:$0xff]
    %v2091 = vld [vmem:[%s2043 + $0x178] sm:$0xff]
    %s2092 = scalar_lea.vmem %s6, 6
    %v2093 = vld [vmem:[%s2092] sm:$0x3f]
    %v2095 = vperm.slane %v2093, 0
    %v2096 = vperm.slane %v2093, 1
    %v2097 = vperm.slane %v2093, 2
    %v2098 = vperm.slane %v2093, 3
    %v2099 = vperm.slane %v2093, 4
    %v2100 = vperm.slane %v2093, 5
    %v2155 = vunpack.c.l.b16 %v2044
    %v2156 = vunpack.c.h.b16 %v2044
    %v2157 = vunpack.c.l.b16 %v2045
    %v2158 = vunpack.c.h.b16 %v2045
    %v2159 = vunpack.c.l.b16 %v2046
    %v2160 = vunpack.c.h.b16 %v2046
    %v2161 = vunpack.c.l.b16 %v2047
    %v2162 = vunpack.c.h.b16 %v2047
    %v2163 = vunpack.c.l.b16 %v2048
    %v2164 = vunpack.c.h.b16 %v2048
    %v2165 = vunpack.c.l.b16 %v2049
    %v2166 = vunpack.c.h.b16 %v2049
    %v2167 = vunpack.c.l.b16 %v2050
    %v2168 = vunpack.c.h.b16 %v2050
    %v2169 = vunpack.c.l.b16 %v2051
    %v2170 = vunpack.c.h.b16 %v2051
    %v2171 = vunpack.c.l.b16 %v2052
    %v2172 = vunpack.c.h.b16 %v2052
    %v2173 = vunpack.c.l.b16 %v2053
    %v2174 = vunpack.c.h.b16 %v2053
    %v2175 = vunpack.c.l.b16 %v2054
    %v2176 = vunpack.c.h.b16 %v2054
    %v2177 = vunpack.c.l.b16 %v2055
    %v2178 = vunpack.c.h.b16 %v2055
    %v2179 = vunpack.c.l.b16 %v2056
    %v2180 = vunpack.c.h.b16 %v2056
    %v2181 = vunpack.c.l.b16 %v2057
    %v2182 = vunpack.c.h.b16 %v2057
    %v2183 = vunpack.c.l.b16 %v2058
    %v2184 = vunpack.c.h.b16 %v2058
    %v2185 = vunpack.c.l.b16 %v2059
    %v2186 = vunpack.c.h.b16 %v2059
    %v2187 = vunpack.c.l.b16 %v2060
    %v2188 = vunpack.c.h.b16 %v2060
    %v2189 = vunpack.c.l.b16 %v2061
    %v2190 = vunpack.c.h.b16 %v2061
    %v2191 = vunpack.c.l.b16 %v2062
    %v2192 = vunpack.c.h.b16 %v2062
    %v2193 = vunpack.c.l.b16 %v2063
    %v2194 = vunpack.c.h.b16 %v2063
    %v2195 = vunpack.c.l.b16 %v2064
    %v2196 = vunpack.c.h.b16 %v2064
    %v2197 = vunpack.c.l.b16 %v2065
    %v2198 = vunpack.c.h.b16 %v2065
    %v2199 = vunpack.c.l.b16 %v2066
    %v2200 = vunpack.c.h.b16 %v2066
    %v2201 = vunpack.c.l.b16 %v2067
    %v2202 = vunpack.c.h.b16 %v2067
    %v2203 = vunpack.c.l.b16 %v2068
    %v2204 = vunpack.c.h.b16 %v2068
    %v2205 = vunpack.c.l.b16 %v2069
    %v2206 = vunpack.c.h.b16 %v2069
    %v2207 = vunpack.c.l.b16 %v2070
    %v2208 = vunpack.c.h.b16 %v2070
    %v2209 = vunpack.c.l.b16 %v2071
    %v2210 = vunpack.c.h.b16 %v2071
    %v2211 = vunpack.c.l.b16 %v2072
    %v2212 = vunpack.c.h.b16 %v2072
    %v2213 = vunpack.c.l.b16 %v2073
    %v2214 = vunpack.c.h.b16 %v2073
    %v2215 = vunpack.c.l.b16 %v2074
    %v2216 = vunpack.c.h.b16 %v2074
    %v2217 = vunpack.c.l.b16 %v2075
    %v2218 = vunpack.c.h.b16 %v2075
    %v2219 = vunpack.c.l.b16 %v2076
    %v2220 = vunpack.c.h.b16 %v2076
    %v2221 = vunpack.c.l.b16 %v2077
    %v2222 = vunpack.c.h.b16 %v2077
    %v2223 = vunpack.c.l.b16 %v2078
    %v2224 = vunpack.c.h.b16 %v2078
    %v2225 = vunpack.c.l.b16 %v2079
    %v2226 = vunpack.c.h.b16 %v2079
    %v2227 = vunpack.c.l.b16 %v2080
    %v2228 = vunpack.c.h.b16 %v2080
    %v2229 = vunpack.c.l.b16 %v2081
    %v2230 = vunpack.c.h.b16 %v2081
    %v2231 = vunpack.c.l.b16 %v2082
    %v2232 = vunpack.c.h.b16 %v2082
    %v2233 = vunpack.c.l.b16 %v2083
    %v2234 = vunpack.c.h.b16 %v2083
    %v2235 = vunpack.c.l.b16 %v2084
    %v2236 = vunpack.c.h.b16 %v2084
    %v2237 = vunpack.c.l.b16 %v2085
    %v2238 = vunpack.c.h.b16 %v2085
    %v2239 = vunpack.c.l.b16 %v2086
    %v2240 = vunpack.c.h.b16 %v2086
    %v2241 = vunpack.c.l.b16 %v2087
    %v2242 = vunpack.c.h.b16 %v2087
    %v2243 = vunpack.c.l.b16 %v2088
    %v2244 = vunpack.c.h.b16 %v2088
    %v2245 = vunpack.c.l.b16 %v2089
    %v2246 = vunpack.c.h.b16 %v2089
    %v2247 = vunpack.c.l.b16 %v2090
    %v2248 = vunpack.c.h.b16 %v2090
    %v2249 = vunpack.c.l.b16 %v2091
    %v2250 = vunpack.c.h.b16 %v2091
    %v2251 = vpack.c.b16 %v2161, %v2155
    %v2252 = vpack.c.b16 %v2162, %v2156
    %v2253 = vpack.c.b16 %v2163, %v2157
    %v2254 = vpack.c.b16 %v2164, %v2158
    %v2255 = vpack.c.b16 %v2165, %v2159
    %v2256 = vpack.c.b16 %v2166, %v2160
    %v2257 = vpack.c.b16 %v2173, %v2167
    %v2258 = vpack.c.b16 %v2174, %v2168
    %v2259 = vpack.c.b16 %v2175, %v2169
    %v2260 = vpack.c.b16 %v2176, %v2170
    %v2261 = vpack.c.b16 %v2177, %v2171
    %v2262 = vpack.c.b16 %v2178, %v2172
    %v2263 = vpack.c.b16 %v2185, %v2179
    %v2264 = vpack.c.b16 %v2186, %v2180
    %v2265 = vpack.c.b16 %v2187, %v2181
    %v2266 = vpack.c.b16 %v2188, %v2182
    %v2267 = vpack.c.b16 %v2189, %v2183
    %v2268 = vpack.c.b16 %v2190, %v2184
    %v2269 = vpack.c.b16 %v2197, %v2191
    %v2270 = vpack.c.b16 %v2198, %v2192
    %v2271 = vpack.c.b16 %v2199, %v2193
    %v2272 = vpack.c.b16 %v2200, %v2194
    %v2273 = vpack.c.b16 %v2201, %v2195
    %v2274 = vpack.c.b16 %v2202, %v2196
    %v2275 = vpack.c.b16 %v2209, %v2203
    %v2276 = vpack.c.b16 %v2210, %v2204
    %v2277 = vpack.c.b16 %v2211, %v2205
    %v2278 = vpack.c.b16 %v2212, %v2206
    %v2279 = vpack.c.b16 %v2213, %v2207
    %v2280 = vpack.c.b16 %v2214, %v2208
    %v2281 = vpack.c.b16 %v2221, %v2215
    %v2282 = vpack.c.b16 %v2222, %v2216
    %v2283 = vpack.c.b16 %v2223, %v2217
    %v2284 = vpack.c.b16 %v2224, %v2218
    %v2285 = vpack.c.b16 %v2225, %v2219
    %v2286 = vpack.c.b16 %v2226, %v2220
    %v2287 = vpack.c.b16 %v2233, %v2227
    %v2288 = vpack.c.b16 %v2234, %v2228
    %v2289 = vpack.c.b16 %v2235, %v2229
    %v2290 = vpack.c.b16 %v2236, %v2230
    %v2291 = vpack.c.b16 %v2237, %v2231
    %v2292 = vpack.c.b16 %v2238, %v2232
    %v2293 = vpack.c.b16 %v2245, %v2239
    %v2294 = vpack.c.b16 %v2246, %v2240
    %v2295 = vpack.c.b16 %v2247, %v2241
    %v2296 = vpack.c.b16 %v2248, %v2242
    %v2297 = vpack.c.b16 %v2249, %v2243
    %v2298 = vpack.c.b16 %v2250, %v2244
    %2347 = vmatpush.bf16.msra.mxu0 %v2293
    %2348 = vmatpush.bf16.msra.mxu0 %v2287
    %2349 = vmatpush.bf16.msra.mxu0 %v2281
    %2350 = vmatpush.bf16.msra.mxu0 %v2275
    %2351 = vmatpush.bf16.msra.mxu0 %v2269
    %2352 = vmatpush.bf16.msra.mxu0 %v2263
    %2353 = vmatpush.bf16.msra.mxu0 %v2257
    %2354 = vmatpush.bf16.msra.mxu0 %v2251
    %2355 = vmatmul.bf16.gmra.mxu0 %v2042
    %v2356 = vpop.f32.mrf.mxu0
    %v2357 = vadd.f32 %v2095, %v2356
    %v2358 = vpop.f32.mrf.mxu0
    %v2359 = vadd.f32 %v2095, %v2358
    %2360 = vdwg.mxu0
    %2361 = vmatpush.bf16.msra.mxu0 %v2294
    %2362 = vmatpush.bf16.msra.mxu0 %v2288
    %2363 = vmatpush.bf16.msra.mxu0 %v2282
    %2364 = vmatpush.bf16.msra.mxu0 %v2276
    %2365 = vmatpush.bf16.msra.mxu0 %v2270
    %2366 = vmatpush.bf16.msra.mxu0 %v2264
    %2367 = vmatpush.bf16.msra.mxu0 %v2258
    %2368 = vmatpush.bf16.msra.mxu0 %v2252
    %2369 = vmatmul.bf16.gmra.mxu0 %v2042
    %v2370 = vpop.f32.mrf.mxu0
    %v2371 = vadd.f32 %v2096, %v2370
    %v2372 = vpop.f32.mrf.mxu0
    %v2373 = vadd.f32 %v2096, %v2372
    %2374 = vdwg.mxu0
    %2375 = vmatpush.bf16.msra.mxu0 %v2295
    %2376 = vmatpush.bf16.msra.mxu0 %v2289
    %2377 = vmatpush.bf16.msra.mxu0 %v2283
    %2378 = vmatpush.bf16.msra.mxu0 %v2277
    %2379 = vmatpush.bf16.msra.mxu0 %v2271
    %2380 = vmatpush.bf16.msra.mxu0 %v2265
    %2381 = vmatpush.bf16.msra.mxu0 %v2259
    %2382 = vmatpush.bf16.msra.mxu0 %v2253
    %2383 = vmatmul.bf16.gmra.mxu0 %v2042
    %v2384 = vpop.f32.mrf.mxu0
    %v2385 = vadd.f32 %v2097, %v2384
    %v2386 = vpop.f32.mrf.mxu0
    %v2387 = vadd.f32 %v2097, %v2386
    %2388 = vdwg.mxu0
    %2389 = vmatpush.bf16.msra.mxu0 %v2296
    %2390 = vmatpush.bf16.msra.mxu0 %v2290
    %2391 = vmatpush.bf16.msra.mxu0 %v2284
    %2392 = vmatpush.bf16.msra.mxu0 %v2278
    %2393 = vmatpush.bf16.msra.mxu0 %v2272
    %2394 = vmatpush.bf16.msra.mxu0 %v2266
    %2395 = vmatpush.bf16.msra.mxu0 %v2260
    %2396 = vmatpush.bf16.msra.mxu0 %v2254
    %2397 = vmatmul.bf16.gmra.mxu0 %v2042
    %v2398 = vpop.f32.mrf.mxu0
    %v2399 = vadd.f32 %v2098, %v2398
    %v2400 = vpop.f32.mrf.mxu0
    %v2401 = vadd.f32 %v2098, %v2400
    %2402 = vdwg.mxu0
    %2403 = vmatpush.bf16.msra.mxu0 %v2297
    %2404 = vmatpush.bf16.msra.mxu0 %v2291
    %2405 = vmatpush.bf16.msra.mxu0 %v2285
    %2406 = vmatpush.bf16.msra.mxu0 %v2279
    %2407 = vmatpush.bf16.msra.mxu0 %v2273
    %2408 = vmatpush.bf16.msra.mxu0 %v2267
    %2409 = vmatpush.bf16.msra.mxu0 %v2261
    %2410 = vmatpush.bf16.msra.mxu0 %v2255
    %2411 = vmatmul.bf16.gmra.mxu0 %v2042
    %v2412 = vpop.f32.mrf.mxu0
    %v2413 = vadd.f32 %v2099, %v2412
    %v2414 = vpop.f32.mrf.mxu0
    %v2415 = vadd.f32 %v2099, %v2414
    %2416 = vdwg.mxu0
    %2417 = vmatpush.bf16.msra.mxu0 %v2298
    %2418 = vmatpush.bf16.msra.mxu0 %v2292
    %2419 = vmatpush.bf16.msra.mxu0 %v2286
    %2420 = vmatpush.bf16.msra.mxu0 %v2280
    %2421 = vmatpush.bf16.msra.mxu0 %v2274
    %2422 = vmatpush.bf16.msra.mxu0 %v2268
    %2423 = vmatpush.bf16.msra.mxu0 %v2262
    %2424 = vmatpush.bf16.msra.mxu0 %v2256
    %2425 = vmatmul.bf16.gmra.mxu0 %v2042
    %v2426 = vpop.f32.mrf.mxu0
    %v2427 = vadd.f32 %v2100, %v2426
    %v2428 = vpop.f32.mrf.mxu0
    %v2429 = vadd.f32 %v2100, %v2428
    %2430 = vdwg.mxu0
    %2431 = vmatpush.xpose.msra.mxu0 0.0
    %2432 = vmatpush.xpose.msra.mxu0 0.0
    %2433 = vmatpush.xpose.msra.mxu0 0.0
    %2434 = vmatpush.xpose.msra.mxu0 0.0
    %2435 = vmatpush.xpose.msra.mxu0 0.0
    %2436 = vmatpush.xpose.msra.mxu0 0.0
    %2437 = vmatpush.xpose.msra.mxu0 0.0
    %2438 = vmatpush.xpose.msra.mxu0 0.0
    %2439 = vmatpush.xpose.msra.mxu0 0.0
    %2440 = vmatpush.xpose.msra.mxu0 0.0
    %2441 = vmatpush.xpose.msra.mxu0 0.0
    %2442 = vmatpush.xpose.msra.mxu0 0.0
    %2443 = vmatpush.xpose.msra.mxu0 0.0
    %2444 = vmatpush.xpose.msra.mxu0 0.0
    %2445 = vmatpush.xpose.msra.mxu0 %v2373
    %2446 = vmatpush.xpose.msra.mxu0 %v2371
    %2447 = vmatmul.f32.gmra.mxu0 %v2357
    %v2448 = vpop.f32.mrf.mxu0
    %v2449 = vadd.f32 %v513, %v2448
    %2450 = vmatmul.f32.gmra.mxu0 %v2359
    %v2451 = vpop.f32.mrf.mxu0
    %v2452 = vadd.f32 %v514, %v2451
    %2453 = vdwg.mxu0
    %v2454 = vsel %vm986, %v2449, -inf
    %2455 = vmax.xlane.f32.xlu0 %v2454
    %v2456 = vpop.xlane.xlu0 %2455
    %v2457 = vsel %vm990, %v2452, -inf
    %2458 = vmax.xlane.f32.xlu0 %v2457
    %v2459 = vpop.xlane.xlu0 %2458
    %v2460 = vsub.f32 %v2449, %v2456
    %v2461 = vsub.f32 %v2452, %v2459
    %v2462 = vmul.f32 %v2460, 1.442695
    %v2463 = vpow.pop %v2462
    %v2464 = vmul.f32 %v2461, 1.442695
    %v2465 = vpow.pop %v2464
    %v2466 = vsel %vm986, %v2463, 0.0
    %2467 = vadd.xlane.f32.xlu0 %v2466
    %v2468 = vpop.xlane.xlu0 %2467
    %v2469 = vsel %vm990, %v2465, 0.0
    %2470 = vadd.xlane.f32.xlu0 %v2469
    %v2471 = vpop.xlane.xlu0 %2470
    %v2472 = vrcp.pop %v2468
    %v2473 = vrcp.pop %v2471
    %v2474 = vmul.f32 %v2463, %v2472
    %v2475 = vmul.f32 %v2465, %v2473
    %v2477 = vsel %vm986, %v2474, 0
    %v2480 = vsel %vm986, %v2475, 0
    %v2483 = vsel %vm518, %v2387, 0
    %2485 = vmatpush.msra.mxu0 0.0
    %2486 = vmatpush.msra.mxu0 0.0
    %2487 = vmatpush.msra.mxu0 0.0
    %2488 = vmatpush.msra.mxu0 0.0
    %2489 = vmatpush.msra.mxu0 0.0
    %2490 = vmatpush.msra.mxu0 0.0
    %2491 = vmatpush.msra.mxu0 0.0
    %2492 = vmatpush.msra.mxu0 0.0
    %2493 = vmatpush.msra.mxu0 0.0
    %2494 = vmatpush.msra.mxu0 0.0
    %2495 = vmatpush.msra.mxu0 0.0
    %2496 = vmatpush.msra.mxu0 0.0
    %2497 = vmatpush.msra.mxu0 0.0
    %2498 = vmatpush.msra.mxu0 0.0
    %2499 = vmatpush.msra.mxu0 %v2483
    %2500 = vmatpush.msra.mxu0 %v2385
    %2501 = vmatmul.f32.gmra.mxu0 %v2477
    %v2502 = vpop.f32.mrf.mxu0
    %v2503 = vadd.f32 0.0, %v2502
    %2504 = vmatmul.f32.gmra.mxu0 %v2480
    %v2505 = vpop.f32.mrf.mxu0
    %v2506 = vadd.f32 0.0, %v2505
    %2507 = vdwg.mxu0
    %2508 = vmatpush.xpose.msra.mxu0 0.0
    %2509 = vmatpush.xpose.msra.mxu0 0.0
    %2510 = vmatpush.xpose.msra.mxu0 0.0
    %2511 = vmatpush.xpose.msra.mxu0 0.0
    %2512 = vmatpush.xpose.msra.mxu0 0.0
    %2513 = vmatpush.xpose.msra.mxu0 0.0
    %2514 = vmatpush.xpose.msra.mxu0 0.0
    %2515 = vmatpush.xpose.msra.mxu0 0.0
    %2516 = vmatpush.xpose.msra.mxu0 0.0
    %2517 = vmatpush.xpose.msra.mxu0 0.0
    %2518 = vmatpush.xpose.msra.mxu0 0.0
    %2519 = vmatpush.xpose.msra.mxu0 0.0
    %2520 = vmatpush.xpose.msra.mxu0 0.0
    %2521 = vmatpush.xpose.msra.mxu0 0.0
    %2522 = vmatpush.xpose.msra.mxu0 %v2415
    %2523 = vmatpush.xpose.msra.mxu0 %v2413
    %2524 = vmatmul.f32.gmra.mxu0 %v2399
    %v2525 = vpop.f32.mrf.mxu0
    %v2526 = vadd.f32 %v513, %v2525
    %2527 = vmatmul.f32.gmra.mxu0 %v2401
    %v2528 = vpop.f32.mrf.mxu0
    %v2529 = vadd.f32 %v514, %v2528
    %2530 = vdwg.mxu0
    %v2531 = vsel %vm986, %v2526, -inf
    %2532 = vmax.xlane.f32.xlu0 %v2531
    %v2533 = vpop.xlane.xlu0 %2532
    %v2534 = vsel %vm990, %v2529, -inf
    %2535 = vmax.xlane.f32.xlu0 %v2534
    %v2536 = vpop.xlane.xlu0 %2535
    %v2537 = vsub.f32 %v2526, %v2533
    %v2538 = vsub.f32 %v2529, %v2536
    %v2539 = vmul.f32 %v2537, 1.442695
    %v2540 = vpow.pop %v2539
    %v2541 = vmul.f32 %v2538, 1.442695
    %v2542 = vpow.pop %v2541
    %v2543 = vsel %vm986, %v2540, 0.0
    %2544 = vadd.xlane.f32.xlu0 %v2543
    %v2545 = vpop.xlane.xlu0 %2544
    %v2546 = vsel %vm990, %v2542, 0.0
    %2547 = vadd.xlane.f32.xlu0 %v2546
    %v2548 = vpop.xlane.xlu0 %2547
    %v2549 = vrcp.pop %v2545
    %v2550 = vrcp.pop %v2548
    %v2551 = vmul.f32 %v2540, %v2549
    %v2552 = vmul.f32 %v2542, %v2550
    %v2554 = vsel %vm986, %v2551, 0
    %v2557 = vsel %vm986, %v2552, 0
    %v2560 = vsel %vm518, %v2429, 0
    %2562 = vmatpush.msra.mxu0 0.0
    %2563 = vmatpush.msra.mxu0 0.0
    %2564 = vmatpush.msra.mxu0 0.0
    %2565 = vmatpush.msra.mxu0 0.0
    %2566 = vmatpush.msra.mxu0 0.0
    %2567 = vmatpush.msra.mxu0 0.0
    %2568 = vmatpush.msra.mxu0 0.0
    %2569 = vmatpush.msra.mxu0 0.0
    %2570 = vmatpush.msra.mxu0 0.0
    %2571 = vmatpush.msra.mxu0 0.0
    %2572 = vmatpush.msra.mxu0 0.0
    %2573 = vmatpush.msra.mxu0 0.0
    %2574 = vmatpush.msra.mxu0 0.0
    %2575 = vmatpush.msra.mxu0 0.0
    %2576 = vmatpush.msra.mxu0 %v2560
    %2577 = vmatpush.msra.mxu0 %v2427
    %2578 = vmatmul.f32.gmra.mxu0 %v2554
    %v2579 = vpop.f32.mrf.mxu0
    %v2580 = vadd.f32 0.0, %v2579
    %2581 = vmatmul.f32.gmra.mxu0 %v2557
    %v2582 = vpop.f32.mrf.mxu0
    %v2583 = vadd.f32 0.0, %v2582
    %2584 = vdwg.mxu0
    %v2585 = vpack.c.bf16 %v2506, %v2503
    %v2586 = vpack.c.bf16 %v2583, %v2580
    %s2587 = scalar_lea.vmem [#allocation2], 128
    %v2588 = vld [vmem:[%s2587] sm:$0xf]
    %v2589 = vld [vmem:[%s2587 + $0x4] sm:$0xf]
    %v2590 = vld [vmem:[%s2587 + $0x8] sm:$0xf]
    %v2591 = vld [vmem:[%s2587 + $0xc] sm:$0xf]
    %v2592 = vld [vmem:[%s2587 + $0x10] sm:$0xf]
    %v2593 = vld [vmem:[%s2587 + $0x14] sm:$0xf]
    %v2594 = vld [vmem:[%s2587 + $0x18] sm:$0xf]
    %v2595 = vld [vmem:[%s2587 + $0x1c] sm:$0xf]
    %v2596 = vld [vmem:[%s2587 + $0x20] sm:$0xf]
    %v2597 = vld [vmem:[%s2587 + $0x24] sm:$0xf]
    %v2598 = vld [vmem:[%s2587 + $0x28] sm:$0xf]
    %v2599 = vld [vmem:[%s2587 + $0x2c] sm:$0xf]
    %v2600 = vld [vmem:[%s2587 + $0x30] sm:$0xf]
    %v2601 = vld [vmem:[%s2587 + $0x34] sm:$0xf]
    %v2602 = vld [vmem:[%s2587 + $0x38] sm:$0xf]
    %v2603 = vld [vmem:[%s2587 + $0x3c] sm:$0xf]
    %v2604 = vld [vmem:[%s2587 + $0x40] sm:$0xf]
    %v2605 = vld [vmem:[%s2587 + $0x44] sm:$0xf]
    %v2606 = vld [vmem:[%s2587 + $0x48] sm:$0xf]
    %v2607 = vld [vmem:[%s2587 + $0x4c] sm:$0xf]
    %v2608 = vld [vmem:[%s2587 + $0x50] sm:$0xf]
    %v2609 = vld [vmem:[%s2587 + $0x54] sm:$0xf]
    %v2610 = vld [vmem:[%s2587 + $0x58] sm:$0xf]
    %v2611 = vld [vmem:[%s2587 + $0x5c] sm:$0xf]
    %v2612 = vld [vmem:[%s2587 + $0x60] sm:$0xf]
    %v2613 = vld [vmem:[%s2587 + $0x64] sm:$0xf]
    %v2614 = vld [vmem:[%s2587 + $0x68] sm:$0xf]
    %v2615 = vld [vmem:[%s2587 + $0x6c] sm:$0xf]
    %v2616 = vld [vmem:[%s2587 + $0x70] sm:$0xf]
    %v2617 = vld [vmem:[%s2587 + $0x74] sm:$0xf]
    %v2618 = vld [vmem:[%s2587 + $0x78] sm:$0xf]
    %v2619 = vld [vmem:[%s2587 + $0x7c] sm:$0xf]
    %v2620 = vperm.slane %v1989, 2
    %v2653 = vunpack.c.l.b16 %v2588
    %v2654 = vunpack.c.l.b16 %v2589
    %v2655 = vunpack.c.l.b16 %v2590
    %v2656 = vunpack.c.l.b16 %v2591
    %v2657 = vunpack.c.l.b16 %v2592
    %v2658 = vunpack.c.l.b16 %v2593
    %v2659 = vunpack.c.l.b16 %v2594
    %v2660 = vunpack.c.l.b16 %v2595
    %v2661 = vunpack.c.l.b16 %v2596
    %v2662 = vunpack.c.l.b16 %v2597
    %v2663 = vunpack.c.l.b16 %v2598
    %v2664 = vunpack.c.l.b16 %v2599
    %v2665 = vunpack.c.l.b16 %v2600
    %v2666 = vunpack.c.l.b16 %v2601
    %v2667 = vunpack.c.l.b16 %v2602
    %v2668 = vunpack.c.l.b16 %v2603
    %v2669 = vunpack.c.l.b16 %v2604
    %v2670 = vunpack.c.l.b16 %v2605
    %v2671 = vunpack.c.l.b16 %v2606
    %v2672 = vunpack.c.l.b16 %v2607
    %v2673 = vunpack.c.l.b16 %v2608
    %v2674 = vunpack.c.l.b16 %v2609
    %v2675 = vunpack.c.l.b16 %v2610
    %v2676 = vunpack.c.l.b16 %v2611
    %v2677 = vunpack.c.l.b16 %v2612
    %v2678 = vunpack.c.l.b16 %v2613
    %v2679 = vunpack.c.l.b16 %v2614
    %v2680 = vunpack.c.l.b16 %v2615
    %v2681 = vunpack.c.l.b16 %v2616
    %v2682 = vunpack.c.l.b16 %v2617
    %v2683 = vunpack.c.l.b16 %v2618
    %v2684 = vunpack.c.l.b16 %v2619
    %v2685 = vpack.c.b16 %v2654, %v2653
    %v2686 = vpack.c.b16 %v2656, %v2655
    %v2687 = vpack.c.b16 %v2658, %v2657
    %v2688 = vpack.c.b16 %v2660, %v2659
    %v2689 = vpack.c.b16 %v2662, %v2661
    %v2690 = vpack.c.b16 %v2664, %v2663
    %v2691 = vpack.c.b16 %v2666, %v2665
    %v2692 = vpack.c.b16 %v2668, %v2667
    %v2693 = vpack.c.b16 %v2670, %v2669
    %v2694 = vpack.c.b16 %v2672, %v2671
    %v2695 = vpack.c.b16 %v2674, %v2673
    %v2696 = vpack.c.b16 %v2676, %v2675
    %v2697 = vpack.c.b16 %v2678, %v2677
    %v2698 = vpack.c.b16 %v2680, %v2679
    %v2699 = vpack.c.b16 %v2682, %v2681
    %v2700 = vpack.c.b16 %v2684, %v2683
    %2717 = vmatpush.bf16.msra.mxu0 %v2692
    %2718 = vmatpush.bf16.msra.mxu0 %v2691
    %2719 = vmatpush.bf16.msra.mxu0 %v2690
    %2720 = vmatpush.bf16.msra.mxu0 %v2689
    %2721 = vmatpush.bf16.msra.mxu0 %v2688
    %2722 = vmatpush.bf16.msra.mxu0 %v2687
    %2723 = vmatpush.bf16.msra.mxu0 %v2686
    %2724 = vmatpush.bf16.msra.mxu0 %v2685
    %2725 = vmatmul.bf16.gmra.mxu0 %v2585
    %v2726 = vpop.f32.mrf.mxu0
    %v2727 = vadd.f32 %v2620, %v2726
    %v2728 = vpop.f32.mrf.mxu0
    %v2729 = vadd.f32 %v2620, %v2728
    %2730 = vdwg.mxu0
    %2731 = vmatpush.bf16.msra.mxu0 %v2700
    %2732 = vmatpush.bf16.msra.mxu0 %v2699
    %2733 = vmatpush.bf16.msra.mxu0 %v2698
    %2734 = vmatpush.bf16.msra.mxu0 %v2697
    %2735 = vmatpush.bf16.msra.mxu0 %v2696
    %2736 = vmatpush.bf16.msra.mxu0 %v2695
    %2737 = vmatpush.bf16.msra.mxu0 %v2694
    %2738 = vmatpush.bf16.msra.mxu0 %v2693
    %2739 = vmatmul.bf16.gmra.mxu0 %v2586
    %v2740 = vpop.f32.mrf.mxu0
    %v2741 = vadd.f32 %v2727, %v2740
    %v2742 = vpop.f32.mrf.mxu0
    %v2743 = vadd.f32 %v2729, %v2742
    %2744 = vdwg.mxu0
    %v2745 = vperm.slane %v1989, 3
    %v2746 = vmul.f32 %v2745, %v2741
    %v2747 = vmul.f32 %v2745, %v2743
    %v2748 = vadd.f32 %v1986, %v2746
    %v2749 = vadd.f32 %v1987, %v2747
    %2750 = vadd.xlane.f32.xlu0 %v2748
    %v2751 = vpop.xlane.xlu0 %2750
    %v2752 = vsel %vm518, %v2749, 0.0
    %2753 = vadd.xlane.f32.xlu0 %v2752
    %v2754 = vpop.xlane.xlu0 %2753
    %v2755 = vmul.f32 %v2751, %v528
    %v2756 = vmul.f32 %v2754, %v528
    %v2757 = vmul.f32 %v2748, %v2748
    %v2758 = vmul.f32 %v2749, %v2749
    %2759 = vadd.xlane.f32.xlu0 %v2757
    %v2760 = vpop.xlane.xlu0 %2759
    %v2761 = vsel %vm518, %v2758, 0.0
    %2762 = vadd.xlane.f32.xlu0 %v2761
    %v2763 = vpop.xlane.xlu0 %2762
    %v2764 = vmul.f32 %v2760, %v528
    %v2765 = vmul.f32 %v2763, %v528
    %v2766 = vmul.f32 %v2755, %v2755
    %v2767 = vmul.f32 %v2756, %v2756
    %v2768 = vsub.f32 %v2764, %v2766
    %v2769 = vsub.f32 %v2765, %v2767
    %v2770 = vsub.f32 %v2748, %v2755
    %v2771 = vsub.f32 %v2749, %v2756
    %v2772 = vadd.f32 %v2768, 1e-06
    %v2773 = vadd.f32 %v2769, 1e-06
    %v2774 = vrsqrt.pop %v2772
    %v2775 = vmul.f32 %v2774, %v2772
    %v2776 = vmul.f32 %v2775, %v2774
    %v2777 = vmul.f32 0.5, %v2776
    %v2778 = vsub.f32 1.5, %v2777
    %v2779 = vmul.f32 %v2774, %v2778
    %vm2780 = vweird.f32 %v2772
    %vm2781 = vweird.f32 %v2774
    %vm2782 = vmor %vm2780, %vm2781
    %v2783 = vsel %vm2782, %v2774, %v2779
    %v2784 = vrsqrt.pop %v2773
    %v2785 = vmul.f32 %v2784, %v2773
    %v2786 = vmul.f32 %v2785, %v2784
    %v2787 = vmul.f32 0.5, %v2786
    %v2788 = vsub.f32 1.5, %v2787
    %v2789 = vmul.f32 %v2784, %v2788
    %vm2790 = vweird.f32 %v2773
    %vm2791 = vweird.f32 %v2784
    %vm2792 = vmor %vm2790, %vm2791
    %v2793 = vsel %vm2792, %v2784, %v2789
    %v2794 = vmul.f32 %v2770, %v2783
    %v2795 = vmul.f32 %v2771, %v2793
    %v2796 = vperm.slane %v1989, 4
    %v2797 = vmul.f32 %v2794, %v2796
    %v2798 = vmul.f32 %v2795, %v2796
    %v2799 = vperm.slane %v1989, 5
    %v2800 = vadd.f32 %v2797, %v2799
    %v2801 = vadd.f32 %v2798, %v2799
    %v2802 = vpack.c.bf16 %v2801, %v2800
    %s2803 = scalar_lea.vmem [#allocation5], 256
    %v2804 = vld [vmem:[%s2803] sm:$0xff]
    %v2805 = vld [vmem:[%s2803 + $0x8] sm:$0xff]
    %v2806 = vld [vmem:[%s2803 + $0x10] sm:$0xff]
    %v2807 = vld [vmem:[%s2803 + $0x18] sm:$0xff]
    %v2808 = vld [vmem:[%s2803 + $0x20] sm:$0xff]
    %v2809 = vld [vmem:[%s2803 + $0x28] sm:$0xff]
    %v2810 = vld [vmem:[%s2803 + $0x30] sm:$0xff]
    %v2811 = vld [vmem:[%s2803 + $0x38] sm:$0xff]
    %v2812 = vld [vmem:[%s2803 + $0x40] sm:$0xff]
    %v2813 = vld [vmem:[%s2803 + $0x48] sm:$0xff]
    %v2814 = vld [vmem:[%s2803 + $0x50] sm:$0xff]
    %v2815 = vld [vmem:[%s2803 + $0x58] sm:$0xff]
    %v2816 = vld [vmem:[%s2803 + $0x60] sm:$0xff]
    %v2817 = vld [vmem:[%s2803 + $0x68] sm:$0xff]
    %v2818 = vld [vmem:[%s2803 + $0x70] sm:$0xff]
    %v2819 = vld [vmem:[%s2803 + $0x78] sm:$0xff]
    %v2820 = vld [vmem:[%s2803 + $0x80] sm:$0xff]
    %v2821 = vld [vmem:[%s2803 + $0x88] sm:$0xff]
    %v2822 = vld [vmem:[%s2803 + $0x90] sm:$0xff]
    %v2823 = vld [vmem:[%s2803 + $0x98] sm:$0xff]
    %v2824 = vld [vmem:[%s2803 + $0xa0] sm:$0xff]
    %v2825 = vld [vmem:[%s2803 + $0xa8] sm:$0xff]
    %v2826 = vld [vmem:[%s2803 + $0xb0] sm:$0xff]
    %v2827 = vld [vmem:[%s2803 + $0xb8] sm:$0xff]
    %v2828 = vld [vmem:[%s2803 + $0xc0] sm:$0xff]
    %v2829 = vld [vmem:[%s2803 + $0xc8] sm:$0xff]
    %v2830 = vld [vmem:[%s2803 + $0xd0] sm:$0xff]
    %v2831 = vld [vmem:[%s2803 + $0xd8] sm:$0xff]
    %v2832 = vld [vmem:[%s2803 + $0xe0] sm:$0xff]
    %v2833 = vld [vmem:[%s2803 + $0xe8] sm:$0xff]
    %v2834 = vld [vmem:[%s2803 + $0xf0] sm:$0xff]
    %v2835 = vld [vmem:[%s2803 + $0xf8] sm:$0xff]
    %s2836 = scalar_lea.vmem %s9, 4
    %v2837 = vld [vmem:[%s2836] sm:$0xf]
    %v2839 = vperm.slane %v2837, 0
    %v2840 = vperm.slane %v2837, 1
    %v2841 = vperm.slane %v2837, 2
    %v2842 = vperm.slane %v2837, 3
    %v2879 = vunpack.c.l.b16 %v2804
    %v2880 = vunpack.c.h.b16 %v2804
    %v2881 = vunpack.c.l.b16 %v2805
    %v2882 = vunpack.c.h.b16 %v2805
    %v2883 = vunpack.c.l.b16 %v2806
    %v2884 = vunpack.c.h.b16 %v2806
    %v2885 = vunpack.c.l.b16 %v2807
    %v2886 = vunpack.c.h.b16 %v2807
    %v2887 = vunpack.c.l.b16 %v2808
    %v2888 = vunpack.c.h.b16 %v2808
    %v2889 = vunpack.c.l.b16 %v2809
    %v2890 = vunpack.c.h.b16 %v2809
    %v2891 = vunpack.c.l.b16 %v2810
    %v2892 = vunpack.c.h.b16 %v2810
    %v2893 = vunpack.c.l.b16 %v2811
    %v2894 = vunpack.c.h.b16 %v2811
    %v2895 = vunpack.c.l.b16 %v2812
    %v2896 = vunpack.c.h.b16 %v2812
    %v2897 = vunpack.c.l.b16 %v2813
    %v2898 = vunpack.c.h.b16 %v2813
    %v2899 = vunpack.c.l.b16 %v2814
    %v2900 = vunpack.c.h.b16 %v2814
    %v2901 = vunpack.c.l.b16 %v2815
    %v2902 = vunpack.c.h.b16 %v2815
    %v2903 = vunpack.c.l.b16 %v2816
    %v2904 = vunpack.c.h.b16 %v2816
    %v2905 = vunpack.c.l.b16 %v2817
    %v2906 = vunpack.c.h.b16 %v2817
    %v2907 = vunpack.c.l.b16 %v2818
    %v2908 = vunpack.c.h.b16 %v2818
    %v2909 = vunpack.c.l.b16 %v2819
    %v2910 = vunpack.c.h.b16 %v2819
    %v2911 = vunpack.c.l.b16 %v2820
    %v2912 = vunpack.c.h.b16 %v2820
    %v2913 = vunpack.c.l.b16 %v2821
    %v2914 = vunpack.c.h.b16 %v2821
    %v2915 = vunpack.c.l.b16 %v2822
    %v2916 = vunpack.c.h.b16 %v2822
    %v2917 = vunpack.c.l.b16 %v2823
    %v2918 = vunpack.c.h.b16 %v2823
    %v2919 = vunpack.c.l.b16 %v2824
    %v2920 = vunpack.c.h.b16 %v2824
    %v2921 = vunpack.c.l.b16 %v2825
    %v2922 = vunpack.c.h.b16 %v2825
    %v2923 = vunpack.c.l.b16 %v2826
    %v2924 = vunpack.c.h.b16 %v2826
    %v2925 = vunpack.c.l.b16 %v2827
    %v2926 = vunpack.c.h.b16 %v2827
    %v2927 = vunpack.c.l.b16 %v2828
    %v2928 = vunpack.c.h.b16 %v2828
    %v2929 = vunpack.c.l.b16 %v2829
    %v2930 = vunpack.c.h.b16 %v2829
    %v2931 = vunpack.c.l.b16 %v2830
    %v2932 = vunpack.c.h.b16 %v2830
    %v2933 = vunpack.c.l.b16 %v2831
    %v2934 = vunpack.c.h.b16 %v2831
    %v2935 = vunpack.c.l.b16 %v2832
    %v2936 = vunpack.c.h.b16 %v2832
    %v2937 = vunpack.c.l.b16 %v2833
    %v2938 = vunpack.c.h.b16 %v2833
    %v2939 = vunpack.c.l.b16 %v2834
    %v2940 = vunpack.c.h.b16 %v2834
    %v2941 = vunpack.c.l.b16 %v2835
    %v2942 = vunpack.c.h.b16 %v2835
    %v2943 = vpack.c.b16 %v2883, %v2879
    %v2944 = vpack.c.b16 %v2884, %v2880
    %v2945 = vpack.c.b16 %v2885, %v2881
    %v2946 = vpack.c.b16 %v2886, %v2882
    %v2947 = vpack.c.b16 %v2891, %v2887
    %v2948 = vpack.c.b16 %v2892, %v2888
    %v2949 = vpack.c.b16 %v2893, %v2889
    %v2950 = vpack.c.b16 %v2894, %v2890
    %v2951 = vpack.c.b16 %v2899, %v2895
    %v2952 = vpack.c.b16 %v2900, %v2896
    %v2953 = vpack.c.b16 %v2901, %v2897
    %v2954 = vpack.c.b16 %v2902, %v2898
    %v2955 = vpack.c.b16 %v2907, %v2903
    %v2956 = vpack.c.b16 %v2908, %v2904
    %v2957 = vpack.c.b16 %v2909, %v2905
    %v2958 = vpack.c.b16 %v2910, %v2906
    %v2959 = vpack.c.b16 %v2915, %v2911
    %v2960 = vpack.c.b16 %v2916, %v2912
    %v2961 = vpack.c.b16 %v2917, %v2913
    %v2962 = vpack.c.b16 %v2918, %v2914
    %v2963 = vpack.c.b16 %v2923, %v2919
    %v2964 = vpack.c.b16 %v2924, %v2920
    %v2965 = vpack.c.b16 %v2925, %v2921
    %v2966 = vpack.c.b16 %v2926, %v2922
    %v2967 = vpack.c.b16 %v2931, %v2927
    %v2968 = vpack.c.b16 %v2932, %v2928
    %v2969 = vpack.c.b16 %v2933, %v2929
    %v2970 = vpack.c.b16 %v2934, %v2930
    %v2971 = vpack.c.b16 %v2939, %v2935
    %v2972 = vpack.c.b16 %v2940, %v2936
    %v2973 = vpack.c.b16 %v2941, %v2937
    %v2974 = vpack.c.b16 %v2942, %v2938
    %3007 = vmatpush.bf16.msra.mxu0 %v2971
    %3008 = vmatpush.bf16.msra.mxu0 %v2967
    %3009 = vmatpush.bf16.msra.mxu0 %v2963
    %3010 = vmatpush.bf16.msra.mxu0 %v2959
    %3011 = vmatpush.bf16.msra.mxu0 %v2955
    %3012 = vmatpush.bf16.msra.mxu0 %v2951
    %3013 = vmatpush.bf16.msra.mxu0 %v2947
    %3014 = vmatpush.bf16.msra.mxu0 %v2943
    %3015 = vmatmul.bf16.gmra.mxu0 %v2802
    %v3016 = vpop.f32.mrf.mxu0
    %v3017 = vadd.f32 %v2839, %v3016
    %v3018 = vpop.f32.mrf.mxu0
    %v3019 = vadd.f32 %v2839, %v3018
    %3020 = vdwg.mxu0
    %3021 = vmatpush.bf16.msra.mxu0 %v2972
    %3022 = vmatpush.bf16.msra.mxu0 %v2968
    %3023 = vmatpush.bf16.msra.mxu0 %v2964
    %3024 = vmatpush.bf16.msra.mxu0 %v2960
    %3025 = vmatpush.bf16.msra.mxu0 %v2956
    %3026 = vmatpush.bf16.msra.mxu0 %v2952
    %3027 = vmatpush.bf16.msra.mxu0 %v2948
    %3028 = vmatpush.bf16.msra.mxu0 %v2944
    %3029 = vmatmul.bf16.gmra.mxu0 %v2802
    %v3030 = vpop.f32.mrf.mxu0
    %v3031 = vadd.f32 %v2840, %v3030
    %v3032 = vpop.f32.mrf.mxu0
    %v3033 = vadd.f32 %v2840, %v3032
    %3034 = vdwg.mxu0
    %3035 = vmatpush.bf16.msra.mxu0 %v2973
    %3036 = vmatpush.bf16.msra.mxu0 %v2969
    %3037 = vmatpush.bf16.msra.mxu0 %v2965
    %3038 = vmatpush.bf16.msra.mxu0 %v2961
    %3039 = vmatpush.bf16.msra.mxu0 %v2957
    %3040 = vmatpush.bf16.msra.mxu0 %v2953
    %3041 = vmatpush.bf16.msra.mxu0 %v2949
    %3042 = vmatpush.bf16.msra.mxu0 %v2945
    %3043 = vmatmul.bf16.gmra.mxu0 %v2802
    %v3044 = vpop.f32.mrf.mxu0
    %v3045 = vadd.f32 %v2841, %v3044
    %v3046 = vpop.f32.mrf.mxu0
    %v3047 = vadd.f32 %v2841, %v3046
    %3048 = vdwg.mxu0
    %3049 = vmatpush.bf16.msra.mxu0 %v2974
    %3050 = vmatpush.bf16.msra.mxu0 %v2970
    %3051 = vmatpush.bf16.msra.mxu0 %v2966
    %3052 = vmatpush.bf16.msra.mxu0 %v2962
    %3053 = vmatpush.bf16.msra.mxu0 %v2958
    %3054 = vmatpush.bf16.msra.mxu0 %v2954
    %3055 = vmatpush.bf16.msra.mxu0 %v2950
    %3056 = vmatpush.bf16.msra.mxu0 %v2946
    %3057 = vmatmul.bf16.gmra.mxu0 %v2802
    %v3058 = vpop.f32.mrf.mxu0
    %v3059 = vadd.f32 %v2842, %v3058
    %v3060 = vpop.f32.mrf.mxu0
    %v3061 = vadd.f32 %v2842, %v3060
    %3062 = vdwg.mxu0
    %v3063 = vmul.f32 %v3017, %v3017
    %v3064 = vmul.f32 %v3031, %v3031
    %v3065 = vmul.f32 %v3045, %v3045
    %v3066 = vmul.f32 %v3059, %v3059
    %v3067 = vmul.f32 %v3019, %v3019
    %v3068 = vmul.f32 %v3033, %v3033
    %v3069 = vmul.f32 %v3047, %v3047
    %v3070 = vmul.f32 %v3061, %v3061
    %v3071 = vmul.f32 %v3017, %v3063
    %v3072 = vmul.f32 %v3031, %v3064
    %v3073 = vmul.f32 %v3045, %v3065
    %v3074 = vmul.f32 %v3059, %v3066
    %v3075 = vmul.f32 %v3019, %v3067
    %v3076 = vmul.f32 %v3033, %v3068
    %v3077 = vmul.f32 %v3047, %v3069
    %v3078 = vmul.f32 %v3061, %v3070
    %v3079 = vmul.f32 %v3071, 0.044715
    %v3080 = vmul.f32 %v3072, 0.044715
    %v3081 = vmul.f32 %v3073, 0.044715
    %v3082 = vmul.f32 %v3074, 0.044715
    %v3083 = vmul.f32 %v3075, 0.044715
    %v3084 = vmul.f32 %v3076, 0.044715
    %v3085 = vmul.f32 %v3077, 0.044715
    %v3086 = vmul.f32 %v3078, 0.044715
    %v3087 = vadd.f32 %v3017, %v3079
    %v3088 = vadd.f32 %v3031, %v3080
    %v3089 = vadd.f32 %v3045, %v3081
    %v3090 = vadd.f32 %v3059, %v3082
    %v3091 = vadd.f32 %v3019, %v3083
    %v3092 = vadd.f32 %v3033, %v3084
    %v3093 = vadd.f32 %v3047, %v3085
    %v3094 = vadd.f32 %v3061, %v3086
    %v3095 = vmul.f32 %v3087, 0.7978846
    %v3096 = vmul.f32 %v3088, 0.7978846
    %v3097 = vmul.f32 %v3089, 0.7978846
    %v3098 = vmul.f32 %v3090, 0.7978846
    %v3099 = vmul.f32 %v3091, 0.7978846
    %v3100 = vmul.f32 %v3092, 0.7978846
    %v3101 = vmul.f32 %v3093, 0.7978846
    %v3102 = vmul.f32 %v3094, 0.7978846
    %v3103 = vtanh.pop %v3095
    %v3104 = vtanh.pop %v3096
    %v3105 = vtanh.pop %v3097
    %v3106 = vtanh.pop %v3098
    %v3107 = vtanh.pop %v3099
    %v3108 = vtanh.pop %v3100
    %v3109 = vtanh.pop %v3101
    %v3110 = vtanh.pop %v3102
    %v3111 = vadd.f32 %v3103, 1.0
    %v3112 = vadd.f32 %v3104, 1.0
    %v3113 = vadd.f32 %v3105, 1.0
    %v3114 = vadd.f32 %v3106, 1.0
    %v3115 = vadd.f32 %v3107, 1.0
    %v3116 = vadd.f32 %v3108, 1.0
    %v3117 = vadd.f32 %v3109, 1.0
    %v3118 = vadd.f32 %v3110, 1.0
    %v3119 = vmul.f32 %v3111, 0.5
    %v3120 = vmul.f32 %v3112, 0.5
    %v3121 = vmul.f32 %v3113, 0.5
    %v3122 = vmul.f32 %v3114, 0.5
    %v3123 = vmul.f32 %v3115, 0.5
    %v3124 = vmul.f32 %v3116, 0.5
    %v3125 = vmul.f32 %v3117, 0.5
    %v3126 = vmul.f32 %v3118, 0.5
    %v3127 = vmul.f32 %v3017, %v3119
    %v3128 = vmul.f32 %v3031, %v3120
    %v3129 = vmul.f32 %v3045, %v3121
    %v3130 = vmul.f32 %v3059, %v3122
    %v3131 = vmul.f32 %v3019, %v3123
    %v3132 = vmul.f32 %v3033, %v3124
    %v3133 = vmul.f32 %v3047, %v3125
    %v3134 = vmul.f32 %v3061, %v3126
    %v3135 = vpack.c.bf16 %v3131, %v3127
    %v3136 = vpack.c.bf16 %v3132, %v3128
    %v3137 = vpack.c.bf16 %v3133, %v3129
    %v3138 = vpack.c.bf16 %v3134, %v3130
    %s3139 = scalar_lea.vmem [#allocation7], 256
    %v3140 = vld [vmem:[%s3139] sm:$0xf]
    %v3141 = vld [vmem:[%s3139 + $0x4] sm:$0xf]
    %v3142 = vld [vmem:[%s3139 + $0x8] sm:$0xf]
    %v3143 = vld [vmem:[%s3139 + $0xc] sm:$0xf]
    %v3144 = vld [vmem:[%s3139 + $0x10] sm:$0xf]
    %v3145 = vld [vmem:[%s3139 + $0x14] sm:$0xf]
    %v3146 = vld [vmem:[%s3139 + $0x18] sm:$0xf]
    %v3147 = vld [vmem:[%s3139 + $0x1c] sm:$0xf]
    %v3148 = vld [vmem:[%s3139 + $0x20] sm:$0xf]
    %v3149 = vld [vmem:[%s3139 + $0x24] sm:$0xf]
    %v3150 = vld [vmem:[%s3139 + $0x28] sm:$0xf]
    %v3151 = vld [vmem:[%s3139 + $0x2c] sm:$0xf]
    %v3152 = vld [vmem:[%s3139 + $0x30] sm:$0xf]
    %v3153 = vld [vmem:[%s3139 + $0x34] sm:$0xf]
    %v3154 = vld [vmem:[%s3139 + $0x38] sm:$0xf]
    %v3155 = vld [vmem:[%s3139 + $0x3c] sm:$0xf]
    %v3156 = vld [vmem:[%s3139 + $0x40] sm:$0xf]
    %v3157 = vld [vmem:[%s3139 + $0x44] sm:$0xf]
    %v3158 = vld [vmem:[%s3139 + $0x48] sm:$0xf]
    %v3159 = vld [vmem:[%s3139 + $0x4c] sm:$0xf]
    %v3160 = vld [vmem:[%s3139 + $0x50] sm:$0xf]
    %v3161 = vld [vmem:[%s3139 + $0x54] sm:$0xf]
    %v3162 = vld [vmem:[%s3139 + $0x58] sm:$0xf]
    %v3163 = vld [vmem:[%s3139 + $0x5c] sm:$0xf]
    %v3164 = vld [vmem:[%s3139 + $0x60] sm:$0xf]
    %v3165 = vld [vmem:[%s3139 + $0x64] sm:$0xf]
    %v3166 = vld [vmem:[%s3139 + $0x68] sm:$0xf]
    %v3167 = vld [vmem:[%s3139 + $0x6c] sm:$0xf]
    %v3168 = vld [vmem:[%s3139 + $0x70] sm:$0xf]
    %v3169 = vld [vmem:[%s3139 + $0x74] sm:$0xf]
    %v3170 = vld [vmem:[%s3139 + $0x78] sm:$0xf]
    %v3171 = vld [vmem:[%s3139 + $0x7c] sm:$0xf]
    %v3172 = vld [vmem:[%s3139 + $0x80] sm:$0xf]
    %v3173 = vld [vmem:[%s3139 + $0x84] sm:$0xf]
    %v3174 = vld [vmem:[%s3139 + $0x88] sm:$0xf]
    %v3175 = vld [vmem:[%s3139 + $0x8c] sm:$0xf]
    %v3176 = vld [vmem:[%s3139 + $0x90] sm:$0xf]
    %v3177 = vld [vmem:[%s3139 + $0x94] sm:$0xf]
    %v3178 = vld [vmem:[%s3139 + $0x98] sm:$0xf]
    %v3179 = vld [vmem:[%s3139 + $0x9c] sm:$0xf]
    %v3180 = vld [vmem:[%s3139 + $0xa0] sm:$0xf]
    %v3181 = vld [vmem:[%s3139 + $0xa4] sm:$0xf]
    %v3182 = vld [vmem:[%s3139 + $0xa8] sm:$0xf]
    %v3183 = vld [vmem:[%s3139 + $0xac] sm:$0xf]
    %v3184 = vld [vmem:[%s3139 + $0xb0] sm:$0xf]
    %v3185 = vld [vmem:[%s3139 + $0xb4] sm:$0xf]
    %v3186 = vld [vmem:[%s3139 + $0xb8] sm:$0xf]
    %v3187 = vld [vmem:[%s3139 + $0xbc] sm:$0xf]
    %v3188 = vld [vmem:[%s3139 + $0xc0] sm:$0xf]
    %v3189 = vld [vmem:[%s3139 + $0xc4] sm:$0xf]
    %v3190 = vld [vmem:[%s3139 + $0xc8] sm:$0xf]
    %v3191 = vld [vmem:[%s3139 + $0xcc] sm:$0xf]
    %v3192 = vld [vmem:[%s3139 + $0xd0] sm:$0xf]
    %v3193 = vld [vmem:[%s3139 + $0xd4] sm:$0xf]
    %v3194 = vld [vmem:[%s3139 + $0xd8] sm:$0xf]
    %v3195 = vld [vmem:[%s3139 + $0xdc] sm:$0xf]
    %v3196 = vld [vmem:[%s3139 + $0xe0] sm:$0xf]
    %v3197 = vld [vmem:[%s3139 + $0xe4] sm:$0xf]
    %v3198 = vld [vmem:[%s3139 + $0xe8] sm:$0xf]
    %v3199 = vld [vmem:[%s3139 + $0xec] sm:$0xf]
    %v3200 = vld [vmem:[%s3139 + $0xf0] sm:$0xf]
    %v3201 = vld [vmem:[%s3139 + $0xf4] sm:$0xf]
    %v3202 = vld [vmem:[%s3139 + $0xf8] sm:$0xf]
    %v3203 = vld [vmem:[%s3139 + $0xfc] sm:$0xf]
    %v3204 = vperm.slane %v1989, 6
    %v3269 = vunpack.c.l.b16 %v3140
    %v3270 = vunpack.c.l.b16 %v3141
    %v3271 = vunpack.c.l.b16 %v3142
    %v3272 = vunpack.c.l.b16 %v3143
    %v3273 = vunpack.c.l.b16 %v3144
    %v3274 = vunpack.c.l.b16 %v3145
    %v3275 = vunpack.c.l.b16 %v3146
    %v3276 = vunpack.c.l.b16 %v3147
    %v3277 = vunpack.c.l.b16 %v3148
    %v3278 = vunpack.c.l.b16 %v3149
    %v3279 = vunpack.c.l.b16 %v3150
    %v3280 = vunpack.c.l.b16 %v3151
    %v3281 = vunpack.c.l.b16 %v3152
    %v3282 = vunpack.c.l.b16 %v3153
    %v3283 = vunpack.c.l.b16 %v3154
    %v3284 = vunpack.c.l.b16 %v3155
    %v3285 = vunpack.c.l.b16 %v3156
    %v3286 = vunpack.c.l.b16 %v3157
    %v3287 = vunpack.c.l.b16 %v3158
    %v3288 = vunpack.c.l.b16 %v3159
    %v3289 = vunpack.c.l.b16 %v3160
    %v3290 = vunpack.c.l.b16 %v3161
    %v3291 = vunpack.c.l.b16 %v3162
    %v3292 = vunpack.c.l.b16 %v3163
    %v3293 = vunpack.c.l.b16 %v3164
    %v3294 = vunpack.c.l.b16 %v3165
    %v3295 = vunpack.c.l.b16 %v3166
    %v3296 = vunpack.c.l.b16 %v3167
    %v3297 = vunpack.c.l.b16 %v3168
    %v3298 = vunpack.c.l.b16 %v3169
    %v3299 = vunpack.c.l.b16 %v3170
    %v3300 = vunpack.c.l.b16 %v3171
    %v3301 = vunpack.c.l.b16 %v3172
    %v3302 = vunpack.c.l.b16 %v3173
    %v3303 = vunpack.c.l.b16 %v3174
    %v3304 = vunpack.c.l.b16 %v3175
    %v3305 = vunpack.c.l.b16 %v3176
    %v3306 = vunpack.c.l.b16 %v3177
    %v3307 = vunpack.c.l.b16 %v3178
    %v3308 = vunpack.c.l.b16 %v3179
    %v3309 = vunpack.c.l.b16 %v3180
    %v3310 = vunpack.c.l.b16 %v3181
    %v3311 = vunpack.c.l.b16 %v3182
    %v3312 = vunpack.c.l.b16 %v3183
    %v3313 = vunpack.c.l.b16 %v3184
    %v3314 = vunpack.c.l.b16 %v3185
    %v3315 = vunpack.c.l.b16 %v3186
    %v3316 = vunpack.c.l.b16 %v3187
    %v3317 = vunpack.c.l.b16 %v3188
    %v3318 = vunpack.c.l.b16 %v3189
    %v3319 = vunpack.c.l.b16 %v3190
    %v3320 = vunpack.c.l.b16 %v3191
    %v3321 = vunpack.c.l.b16 %v3192
    %v3322 = vunpack.c.l.b16 %v3193
    %v3323 = vunpack.c.l.b16 %v3194
    %v3324 = vunpack.c.l.b16 %v3195
    %v3325 = vunpack.c.l.b16 %v3196
    %v3326 = vunpack.c.l.b16 %v3197
    %v3327 = vunpack.c.l.b16 %v3198
    %v3328 = vunpack.c.l.b16 %v3199
    %v3329 = vunpack.c.l.b16 %v3200
    %v3330 = vunpack.c.l.b16 %v3201
    %v3331 = vunpack.c.l.b16 %v3202
    %v3332 = vunpack.c.l.b16 %v3203
    %v3333 = vpack.c.b16 %v3270, %v3269
    %v3334 = vpack.c.b16 %v3272, %v3271
    %v3335 = vpack.c.b16 %v3274, %v3273
    %v3336 = vpack.c.b16 %v3276, %v3275
    %v3337 = vpack.c.b16 %v3278, %v3277
    %v3338 = vpack.c.b16 %v3280, %v3279
    %v3339 = vpack.c.b16 %v3282, %v3281
    %v3340 = vpack.c.b16 %v3284, %v3283
    %v3341 = vpack.c.b16 %v3286, %v3285
    %v3342 = vpack.c.b16 %v3288, %v3287
    %v3343 = vpack.c.b16 %v3290, %v3289
    %v3344 = vpack.c.b16 %v3292, %v3291
    %v3345 = vpack.c.b16 %v3294, %v3293
    %v3346 = vpack.c.b16 %v3296, %v3295
    %v3347 = vpack.c.b16 %v3298, %v3297
    %v3348 = vpack.c.b16 %v3300, %v3299
    %v3349 = vpack.c.b16 %v3302, %v3301
    %v3350 = vpack.c.b16 %v3304, %v3303
    %v3351 = vpack.c.b16 %v3306, %v3305
    %v3352 = vpack.c.b16 %v3308, %v3307
    %v3353 = vpack.c.b16 %v3310, %v3309
    %v3354 = vpack.c.b16 %v3312, %v3311
    %v3355 = vpack.c.b16 %v3314, %v3313
    %v3356 = vpack.c.b16 %v3316, %v3315
    %v3357 = vpack.c.b16 %v3318, %v3317
    %v3358 = vpack.c.b16 %v3320, %v3319
    %v3359 = vpack.c.b16 %v3322, %v3321
    %v3360 = vpack.c.b16 %v3324, %v3323
    %v3361 = vpack.c.b16 %v3326, %v3325
    %v3362 = vpack.c.b16 %v3328, %v3327
    %v3363 = vpack.c.b16 %v3330, %v3329
    %v3364 = vpack.c.b16 %v3332, %v3331
    %3397 = vmatpush.bf16.msra.mxu0 %v3340
    %3398 = vmatpush.bf16.msra.mxu0 %v3339
    %3399 = vmatpush.bf16.msra.mxu0 %v3338
    %3400 = vmatpush.bf16.msra.mxu0 %v3337
    %3401 = vmatpush.bf16.msra.mxu0 %v3336
    %3402 = vmatpush.bf16.msra.mxu0 %v3335
    %3403 = vmatpush.bf16.msra.mxu0 %v3334
    %3404 = vmatpush.bf16.msra.mxu0 %v3333
    %3405 = vmatmul.bf16.gmra.mxu0 %v3135
    %v3406 = vpop.f32.mrf.mxu0
    %v3407 = vpop.f32.mrf.mxu0
    %v3408 = vadd.f32 %v3204, %v3407
    %3409 = vdwg.mxu0
    %3410 = vmatpush.bf16.msra.mxu0 %v3348
    %3411 = vmatpush.bf16.msra.mxu0 %v3347
    %3412 = vmatpush.bf16.msra.mxu0 %v3346
    %3413 = vmatpush.bf16.msra.mxu0 %v3345
    %3414 = vmatpush.bf16.msra.mxu0 %v3344
    %3415 = vmatpush.bf16.msra.mxu0 %v3343
    %3416 = vmatpush.bf16.msra.mxu0 %v3342
    %3417 = vmatpush.bf16.msra.mxu0 %v3341
    %3418 = vmatmul.bf16.gmra.mxu0 %v3136
    %v3419 = vpop.f32.mrf.mxu0
    %v3420 = vpop.f32.mrf.mxu0
    %v3421 = vadd.f32 %v3408, %v3420
    %3422 = vdwg.mxu0
    %3423 = vmatpush.bf16.msra.mxu0 %v3356
    %3424 = vmatpush.bf16.msra.mxu0 %v3355
    %3425 = vmatpush.bf16.msra.mxu0 %v3354
    %3426 = vmatpush.bf16.msra.mxu0 %v3353
    %3427 = vmatpush.bf16.msra.mxu0 %v3352
    %3428 = vmatpush.bf16.msra.mxu0 %v3351
    %3429 = vmatpush.bf16.msra.mxu0 %v3350
    %3430 = vmatpush.bf16.msra.mxu0 %v3349
    %3431 = vmatmul.bf16.gmra.mxu0 %v3137
    %v3432 = vpop.f32.mrf.mxu0
    %v3433 = vpop.f32.mrf.mxu0
    %v3434 = vadd.f32 %v3421, %v3433
    %3435 = vdwg.mxu0
    %3436 = vmatpush.bf16.msra.mxu0 %v3364
    %3437 = vmatpush.bf16.msra.mxu0 %v3363
    %3438 = vmatpush.bf16.msra.mxu0 %v3362
    %3439 = vmatpush.bf16.msra.mxu0 %v3361
    %3440 = vmatpush.bf16.msra.mxu0 %v3360
    %3441 = vmatpush.bf16.msra.mxu0 %v3359
    %3442 = vmatpush.bf16.msra.mxu0 %v3358
    %3443 = vmatpush.bf16.msra.mxu0 %v3357
    %3444 = vmatmul.bf16.gmra.mxu0 %v3138
    %v3445 = vpop.f32.mrf.mxu0
    %v3446 = vpop.f32.mrf.mxu0
    %v3447 = vadd.f32 %v3434, %v3446
    %3448 = vdwg.mxu0
    %v3449 = vperm.slane %v1989, 7
    %v3450 = vmul.f32 %v3449, %v3447
    %v3451 = vadd.f32 %v2749, %v3450
    %v3452 = vld [vmem:[%s11] sm:$0x3]
    %v3453 = vsel %vm518, %v3451, 0.0
    %3454 = vadd.xlane.f32.xlu0 %v3453
    %v3455 = vpop.xlane.xlu0 %3454
    %v3456 = vmul.f32 %v3455, %v528
    %v3457 = vmul.f32 %v3451, %v3451
    %v3458 = vsel %vm518, %v3457, 0.0
    %3459 = vadd.xlane.f32.xlu0 %v3458
    %v3460 = vpop.xlane.xlu0 %3459
    %v3461 = vmul.f32 %v3460, %v528
    %v3462 = vmul.f32 %v3456, %v3456
    %v3463 = vsub.f32 %v3461, %v3462
    %v3464 = vsub.f32 %v3451, %v3456
    %v3465 = vadd.f32 %v3463, 1e-06
    %v3466 = vrsqrt.pop %v3465
    %v3467 = vmul.f32 %v3466, %v3465
    %v3468 = vmul.f32 %v3467, %v3466
    %v3469 = vmul.f32 0.5, %v3468
    %v3470 = vsub.f32 1.5, %v3469
    %v3471 = vmul.f32 %v3466, %v3470
    %vm3472 = vweird.f32 %v3465
    %vm3473 = vweird.f32 %v3466
    %vm3474 = vmor %vm3472, %vm3473
    %v3475 = vsel %vm3474, %v3466, %v3471
    %v3476 = vmul.f32 %v3464, %v3475
    %v3477 = vperm.slane %v3452, 0
    %v3478 = vmul.f32 %v3476, %v3477
    %v3479 = vperm.slane %v3452, 1
    %v3480 = vadd.f32 %v3478, %v3479
    %3481 = vst [vmem:[#allocation8] sm:$0x3] %v3480
    // Predicated region
    $region62: #{dinov2_forward.1} parent=1 // pred_check
      _
    $region63: #{dinov2_forward.1} parent=1 // pred_check_branch
      %3483 = sbr.rel (0) target = $region65
    $region64: #{dinov2_forward.1} parent=1 // pred_region
      %3485 = vsyncadd [#allocation4], 0
      %s3487 = sshll.u32 [#allocation8], 4
      %s3488 = int_to_ptr.vmem [resolvable:$true] %s3487
      %s3489 = sshll.u32 %s12, 4
      %s3490 = int_to_ptr.hbm [resolvable:$true] %s3489
      %3492 = dma.vmem_to_hbm [thread:$0]  %s3488, 32, %s3490, [#allocation4]
    $region65: #{dinov2_forward.1} parent=1 // pred_fallthru
      _
    // Predicated region
    $region66: #{dinov2_forward.1} parent=1 // pred_check
      _
    $region67: #{dinov2_forward.1} parent=1 // pred_check_branch
      %3494 = sbr.rel (0) target = $region69
    $region68: #{dinov2_forward.1} parent=1 // pred_region
      %3496 = dma.done [#allocation4], 32
    $region69: #{dinov2_forward.1} parent=1 // pred_fallthru
      _
    %3497 = vsyncpa [#allocation3], 1
    %3498 = vsyncpa [#allocation6], 1
    %3499 = vsyncpa [#allocation4], 1

</llo_original>
